<compile_context>
chip_gen: v7x
topology: tpu7x:2x2x1
jax: 0.10.0
libtpu: 0.0.40
codegen_flags: <defaults>
</compile_context>

<pallas_src>
import numpy as np

import jax
import jax.numpy as jnp
from jax.experimental import pallas as pl
from jax.experimental.pallas import tpu as pltpu


# ----------------------------------------------------------------------------
# The fused whole-network kernel (one grid step == one image)
# ----------------------------------------------------------------------------
def _net_fwd_kernel(x_ref, s1_ref, w1_ref, b1_ref, s2_ref, w2_ref, b2_ref,
                    s3_ref, m1_ref, bf1_ref, wf2_ref, bf2_ref, wf3_ref,
                    bf3_ref, o_ref, y1_ref, y2_ref):
    f32 = jnp.float32

    def pool4(a, b, c, d):
        return jnp.maximum(jnp.maximum(a, b), jnp.maximum(c, d))

    # ---- pool1: 2x2/2 max-pool of the NCHW input, one channel plane at a
    # time.  Rows are compacted with the exact 0/1 selector S1 (32, 63);
    # columns stay "dilated" (valid data at even columns) - the dilation is
    # absorbed by the banded conv1 weight matrices (zeros at garbage columns).
    s1 = s1_ref[...]
    pooled = []
    for c in range(3):
        v = pool4(x_ref[0, c, 0:63, 0:63], x_ref[0, c, 0:63, 1:64],
                  x_ref[0, c, 1:64, 0:63], x_ref[0, c, 1:64, 1:64])    # (63, 63)
        pooled.append(jnp.dot(s1, v, preferred_element_type=f32))      # (32, 63)

    # ---- conv1 (5x5, 3->6) + bias + ReLU: 15 banded tap matmuls ----
    acc1 = jnp.zeros((28, 168), f32)
    for a in range(5):
        for c in range(3):
            acc1 = acc1 + jnp.dot(pooled[c][a:a + 28, :], w1_ref[a * 3 + c],
                                  preferred_element_type=f32)
    y1_ref[...] = jnp.maximum(acc1 + b1_ref[...], 0.0)                 # (28, 168)

    # ---- pool2 on (28, 28, 6) stored as (28, 168), col = w*6 + c ----
    v2 = pool4(y1_ref[0:27, 0:162], y1_ref[0:27, 6:168],
               y1_ref[1:28, 0:162], y1_ref[1:28, 6:168])               # (27, 162)
    p2 = jnp.dot(s2_ref[...], v2, preferred_element_type=f32)          # (14, 162)

    # ---- conv2 (5x5, 6->16) + bias + ReLU: 5 banded tap matmuls ----
    acc2 = jnp.zeros((10, 160), f32)
    for a in range(5):
        acc2 = acc2 + jnp.dot(p2[a:a + 10, :], w2_ref[a],
                              preferred_element_type=f32)
    y2_ref[...] = jnp.maximum(acc2 + b2_ref[...], 0.0)                 # (10, 160)

    # ---- pool3 on (10, 10, 16) stored as (10, 160), col = w*16 + c ----
    v3 = pool4(y2_ref[0:9, 0:144], y2_ref[0:9, 16:160],
               y2_ref[1:10, 0:144], y2_ref[1:10, 16:160])              # (9, 144)
    p3 = jnp.dot(s3_ref[...], v3, preferred_element_type=f32)          # (5, 144)

    # ---- fc1 (+ReLU): PyTorch's NCHW flatten (c*25 + h*5 + w) is folded into
    # the per-row matrices M1[h], so the (c, h, w) contraction is 5 matmuls.
    z = jnp.zeros((1, 120), f32)
    for h in range(5):
        z = z + jnp.dot(p3[h:h + 1, :], m1_ref[h], preferred_element_type=f32)
    z = jnp.maximum(z + bf1_ref[...], 0.0)                             # (1, 120)

    # ---- fc2 (+ReLU), fc3, masked softmax over the 2 real classes ----
    z = jnp.maximum(jnp.dot(z, wf2_ref[...], preferred_element_type=f32)
                    + bf2_ref[...], 0.0)                               # (1, 84)
    logits = (jnp.dot(z, wf3_ref[...], preferred_element_type=f32)
              + bf3_ref[...])                                          # (1, 128)
    col = jax.lax.broadcasted_iota(jnp.int32, logits.shape, 1)
    valid = col < 2
    lm = jnp.where(valid, logits, -jnp.inf)
    mx = jnp.max(lm, axis=-1, keepdims=True)
    e = jnp.where(valid, jnp.exp(lm - mx), 0.0)
    o_ref[0] = e / jnp.sum(e, axis=-1, keepdims=True)                  # (1, 128)


# ----------------------------------------------------------------------------
# Wrapper
# ----------------------------------------------------------------------------
def _net_forward_fn(x, p):
    n = x.shape[0]

    def full(shape):
        return pl.BlockSpec(shape, lambda i, _s=len(shape): (0,) * _s)

    out = pl.pallas_call(
        _net_fwd_kernel,
        out_shape=jax.ShapeDtypeStruct((n, 1, 128), jnp.float32),
        grid_spec=pltpu.PrefetchScalarGridSpec(
            num_scalar_prefetch=0,
            grid=(n,),
            in_specs=[
                pl.BlockSpec((1, 3, 64, 64), lambda i: (i, 0, 0, 0)),  # image
                full((32, 63)),          # S1: pool1 row selector
                full((15, 63, 168)),     # conv1 banded weights (a*3 + c)
                full((1, 168)),          # conv1 bias row
                full((14, 27)),          # S2: pool2 row selector
                full((5, 162, 160)),     # conv2 banded weights (per tap row)
                full((1, 160)),          # conv2 bias row
                full((5, 9)),            # S3: pool3 row selector
                full((5, 144, 120)),     # fc1 per-row matrices (flatten folded)
                full((1, 120)),          # fc1 bias
                full((120, 84)),         # fc2 weight (in, out)
                full((1, 84)),           # fc2 bias
                full((84, 128)),         # fc3 weight, lane-padded (cols 0..1)
                full((1, 128)),          # fc3 bias, lane-padded
            ],
            out_specs=pl.BlockSpec((1, 1, 128), lambda i: (i, 0, 0)),
            scratch_shapes=[pltpu.VMEM((28, 168), jnp.float32),
                            pltpu.VMEM((10, 160), jnp.float32)]),
        compiler_params=pltpu.CompilerParams(
            dimension_semantics=("parallel",)),
    )(x.astype(jnp.float32), p["s1"], p["w1band"], p["b1row"], p["s2"],
      p["w2band"], p["b2row"], p["s3"], p["m1"], p["bfc1"], p["wfc2"],
      p["bfc2"], p["wfc3"], p["bfc3"])
    return out[:, 0, :2]


net_forward = jax.jit(_net_forward_fn)


# ----------------------------------------------------------------------------
# Parameters
# ----------------------------------------------------------------------------
def init_raw_params(key):
    """PyTorch-layout parameters (Conv2d: OIHW, Linear: (out, in))."""
    ks = jax.random.split(key, 10)

    def u(k, shape, fan_in):
        bound = 1.0 / jnp.sqrt(float(fan_in))
        return jax.random.uniform(k, shape, jnp.float32, -bound, bound)

    return {
        "conv1_w": u(ks[0], (6, 3, 5, 5), 3 * 25),
        "conv1_b": u(ks[1], (6,), 3 * 25),
        "conv2_w": u(ks[2], (16, 6, 5, 5), 6 * 25),
        "conv2_b": u(ks[3], (16,), 6 * 25),
        "fc1_w": u(ks[4], (120, 400), 400),
        "fc1_b": u(ks[5], (120,), 400),
        "fc2_w": u(ks[6], (84, 120), 120),
        "fc2_b": u(ks[7], (84,), 120),
        "fc3_w": u(ks[8], (2, 84), 84),
        "fc3_b": u(ks[9], (2,), 84),
    }


def prepare_params(raw):
    """One-time host-side conversion into the banded / selection matrices the
    fused kernel consumes (done once per parameter set, never in the forward)."""
    conv1_w = np.asarray(raw["conv1_w"], np.float32)   # (6, 3, 5, 5)  OIHW
    conv1_b = np.asarray(raw["conv1_b"], np.float32)
    conv2_w = np.asarray(raw["conv2_w"], np.float32)   # (16, 6, 5, 5)
    conv2_b = np.asarray(raw["conv2_b"], np.float32)
    fc1_w = np.asarray(raw["fc1_w"], np.float32)       # (120, 400)
    fc1_b = np.asarray(raw["fc1_b"], np.float32)
    fc2_w = np.asarray(raw["fc2_w"], np.float32)       # (84, 120)
    fc2_b = np.asarray(raw["fc2_b"], np.float32)
    fc3_w = np.asarray(raw["fc3_w"], np.float32)       # (2, 84)
    fc3_b = np.asarray(raw["fc3_b"], np.float32)

    def selector(rows, cols):
        s = np.zeros((rows, cols), np.float32)
        s[np.arange(rows), 2 * np.arange(rows)] = 1.0
        return s

    # conv1: pooled 32x32x3 input stored per channel as (32, 63), valid data at
    # even columns (col = 2*w).  Band matrix per (tap row a, in-channel c):
    # (63, 168), output col = ow*6 + co.
    w1 = np.zeros((5, 3, 63, 168), np.float32)
    for a in range(5):
        for b in range(5):
            for ow in range(28):
                w1[a, :, 2 * (ow + b), ow * 6:(ow + 1) * 6] = conv1_w[:, :, a, b].T

    # conv2: pooled input stored as (14, 162), col = 2*w*6 + c.  Band per tap
    # row a: (162, 160), output col = ow*16 + co.
    w2 = np.zeros((5, 162, 160), np.float32)
    for a in range(5):
        for b in range(5):
            for ow in range(10):
                r = 2 * (ow + b) * 6
                w2[a, r:r + 6, ow * 16:(ow + 1) * 16] = conv2_w[:, :, a, b].T

    # fc1: pooled input stored as (5, 144), col = 2*w*16 + c; PyTorch flatten
    # index is c*25 + h*5 + w, folded into per-row matrices M1[h]: (144, 120).
    f1 = fc1_w.reshape(120, 16, 5, 5)                  # (j, c, h, w)
    m1 = np.zeros((5, 144, 120), np.float32)
    for h in range(5):
        for w in range(5):
            m1[h, 2 * w * 16:2 * w * 16 + 16, :] = f1[:, :, h, w].T

    # fc3 lane-padded to a 128-wide (lane-dense) output block.
    wf3 = np.zeros((84, 128), np.float32)
    wf3[:, :2] = fc3_w.T
    bf3 = np.zeros((1, 128), np.float32)
    bf3[0, :2] = fc3_b

    return {
        "s1": jnp.asarray(selector(32, 63)),
        "w1band": jnp.asarray(w1.reshape(15, 63, 168)),
        "b1row": jnp.asarray(np.tile(conv1_b, 28).reshape(1, 168)),
        "s2": jnp.asarray(selector(14, 27)),
        "w2band": jnp.asarray(w2),
        "b2row": jnp.asarray(np.tile(conv2_b, 10).reshape(1, 160)),
        "s3": jnp.asarray(selector(5, 9)),
        "m1": jnp.asarray(m1),
        "bfc1": jnp.asarray(fc1_b.reshape(1, 120)),
        "wfc2": jnp.asarray(fc2_w.T.copy()),
        "bfc2": jnp.asarray(fc2_b.reshape(1, 84)),
        "wfc3": jnp.asarray(wf3),
        "bfc3": jnp.asarray(bf3),
    }


# ----------------------------------------------------------------------------
# Pure-JAX reference of the PyTorch module (for correctness check)
# ----------------------------------------------------------------------------
def reference_forward(x, raw):
    def pool(v):
        return jax.lax.reduce_window(v, -jnp.inf, jax.lax.max,
                                     (1, 1, 2, 2), (1, 1, 2, 2), "VALID")

    def conv(v, w, b):
        y = jax.lax.conv_general_dilated(
            v, w, (1, 1), "VALID", dimension_numbers=("NCHW", "OIHW", "NCHW"))
        return y + b.reshape(1, -1, 1, 1)

    x = pool(x)
    x = pool(jax.nn.relu(conv(x, raw["conv1_w"], raw["conv1_b"])))
    x = pool(jax.nn.relu(conv(x, raw["conv2_w"], raw["conv2_b"])))
    x = x.reshape(x.shape[0], -1)
    x = jax.nn.relu(x @ raw["fc1_w"].T + raw["fc1_b"])
    x = jax.nn.relu(x @ raw["fc2_w"].T + raw["fc2_b"])
    x = x @ raw["fc3_w"].T + raw["fc3_b"]
    return jax.nn.softmax(x, axis=1)


if __name__ == "__main__":
    key = jax.random.PRNGKey(0)
    kx, kp = jax.random.split(key)

    batch = 2
    x = jax.random.normal(kx, (batch, 3, 64, 64), dtype=jnp.float32)
    raw = init_raw_params(kp)
    params = prepare_params(raw)

    out = jax.block_until_ready(net_forward(x, params))

    assert out.shape == (batch, 2), out.shape
    assert bool(jnp.all(jnp.isfinite(out)))
    # softmax rows sum to 1
    assert bool(jnp.all(jnp.abs(jnp.sum(out, axis=1) - 1.0) < 1e-5))
    # match the pure-JAX reference of the PyTorch module (f32 MXU precision)
    ref = jax.block_until_ready(reference_forward(x, raw))
    assert bool(jnp.max(jnp.abs(out - ref)) < 3e-3), float(jnp.max(jnp.abs(out - ref)))

    print("KERNEL_OK")
</pallas_src>

<mosaic_0001>
module attributes {stable_mosaic.version = 11 : i64} {
  func.func @_net_fwd_kernel(%arg0: i32, %arg1: memref<1x3x64x64xf32, #tpu.memory_space<vmem>>, %arg2: memref<32x63xf32, #tpu.memory_space<vmem>>, %arg3: memref<15x63x168xf32, #tpu.memory_space<vmem>>, %arg4: memref<1x168xf32, #tpu.memory_space<vmem>>, %arg5: memref<14x27xf32, #tpu.memory_space<vmem>>, %arg6: memref<5x162x160xf32, #tpu.memory_space<vmem>>, %arg7: memref<1x160xf32, #tpu.memory_space<vmem>>, %arg8: memref<5x9xf32, #tpu.memory_space<vmem>>, %arg9: memref<5x144x120xf32, #tpu.memory_space<vmem>>, %arg10: memref<1x120xf32, #tpu.memory_space<vmem>>, %arg11: memref<120x84xf32, #tpu.memory_space<vmem>>, %arg12: memref<1x84xf32, #tpu.memory_space<vmem>>, %arg13: memref<84x128xf32, #tpu.memory_space<vmem>>, %arg14: memref<1x128xf32, #tpu.memory_space<vmem>>, %arg15: memref<1x1x128xf32, #tpu.memory_space<vmem>>, %arg16: memref<28x168xf32, #tpu.memory_space<vmem>>, %arg17: memref<10x160xf32, #tpu.memory_space<vmem>>) attributes {dimension_semantics = [#tpu.dimension_semantics<parallel>], iteration_bounds = array<i64: 2>, scalar_prefetch = 0 : i64, scratch_operands = 2 : i64, tpu.core_type = #tpu.core_type<tc>, window_params = [{transform_indices = @transform_0, window_bounds = array<i64: 1, 3, 64, 64>}, {pipeline_mode = #tpu.pipeline_mode<synchronous>, transform_indices = @transform_1, window_bounds = array<i64: 32, 63>}, {pipeline_mode = #tpu.pipeline_mode<synchronous>, transform_indices = @transform_2, window_bounds = array<i64: 15, 63, 168>}, {pipeline_mode = #tpu.pipeline_mode<synchronous>, transform_indices = @transform_3, window_bounds = array<i64: 1, 168>}, {pipeline_mode = #tpu.pipeline_mode<synchronous>, transform_indices = @transform_4, window_bounds = array<i64: 14, 27>}, {pipeline_mode = #tpu.pipeline_mode<synchronous>, transform_indices = @transform_5, window_bounds = array<i64: 5, 162, 160>}, {pipeline_mode = #tpu.pipeline_mode<synchronous>, transform_indices = @transform_6, window_bounds = array<i64: 1, 160>}, {pipeline_mode = #tpu.pipeline_mode<synchronous>, transform_indices = @transform_7, window_bounds = array<i64: 5, 9>}, {pipeline_mode = #tpu.pipeline_mode<synchronous>, transform_indices = @transform_8, window_bounds = array<i64: 5, 144, 120>}, {pipeline_mode = #tpu.pipeline_mode<synchronous>, transform_indices = @transform_9, window_bounds = array<i64: 1, 120>}, {pipeline_mode = #tpu.pipeline_mode<synchronous>, transform_indices = @transform_10, window_bounds = array<i64: 120, 84>}, {pipeline_mode = #tpu.pipeline_mode<synchronous>, transform_indices = @transform_11, window_bounds = array<i64: 1, 84>}, {pipeline_mode = #tpu.pipeline_mode<synchronous>, transform_indices = @transform_12, window_bounds = array<i64: 84, 128>}, {pipeline_mode = #tpu.pipeline_mode<synchronous>, transform_indices = @transform_13, window_bounds = array<i64: 1, 128>}, {transform_indices = @transform_14, window_bounds = array<i64: 1, 1, 128>}]} {
    %c0 = arith.constant 0 : index
    %c0_0 = arith.constant 0 : index
    %0 = vector.load %arg2[%c0, %c0_0] : memref<32x63xf32, #tpu.memory_space<vmem>>, vector<32x63xf32>
    %c0_1 = arith.constant 0 : index
    %c0_2 = arith.constant 0 : index
    %c0_3 = arith.constant 0 : index
    %c0_4 = arith.constant 0 : index
    %1 = vector.load %arg1[%c0_1, %c0_2, %c0_3, %c0_4] : memref<1x3x64x64xf32, #tpu.memory_space<vmem>>, vector<1x1x63x63xf32>
    %2 = vector.shape_cast %1 : vector<1x1x63x63xf32> to vector<63x63xf32>
    %c0_5 = arith.constant 0 : index
    %c0_6 = arith.constant 0 : index
    %c0_7 = arith.constant 0 : index
    %c1 = arith.constant 1 : index
    %3 = vector.load %arg1[%c0_5, %c0_6, %c0_7, %c1] : memref<1x3x64x64xf32, #tpu.memory_space<vmem>>, vector<1x1x63x63xf32>
    %4 = vector.shape_cast %3 : vector<1x1x63x63xf32> to vector<63x63xf32>
    %c0_8 = arith.constant 0 : index
    %c0_9 = arith.constant 0 : index
    %c1_10 = arith.constant 1 : index
    %c0_11 = arith.constant 0 : index
    %5 = vector.load %arg1[%c0_8, %c0_9, %c1_10, %c0_11] : memref<1x3x64x64xf32, #tpu.memory_space<vmem>>, vector<1x1x63x63xf32>
    %6 = vector.shape_cast %5 : vector<1x1x63x63xf32> to vector<63x63xf32>
    %c0_12 = arith.constant 0 : index
    %c0_13 = arith.constant 0 : index
    %c1_14 = arith.constant 1 : index
    %c1_15 = arith.constant 1 : index
    %7 = vector.load %arg1[%c0_12, %c0_13, %c1_14, %c1_15] : memref<1x3x64x64xf32, #tpu.memory_space<vmem>>, vector<1x1x63x63xf32>
    %8 = vector.shape_cast %7 : vector<1x1x63x63xf32> to vector<63x63xf32>
    %9 = arith.maximumf %2, %4 : vector<63x63xf32>
    %10 = arith.maximumf %6, %8 : vector<63x63xf32>
    %11 = arith.maximumf %9, %10 : vector<63x63xf32>
    %cst = arith.constant dense<0.000000e+00> : vector<32x63xf32>
    %12 = tpu.matmul %0, %11, %cst {dimension_numbers = #tpu.dot_dimension_numbers<[1], [0], [0], [1], [0, 0, 1, 1], [], []>} : vector<32x63xf32>, vector<63x63xf32>, vector<32x63xf32> -> vector<32x63xf32>
    %c0_16 = arith.constant 0 : index
    %c1_17 = arith.constant 1 : index
    %c0_18 = arith.constant 0 : index
    %c0_19 = arith.constant 0 : index
    %13 = vector.load %arg1[%c0_16, %c1_17, %c0_18, %c0_19] : memref<1x3x64x64xf32, #tpu.memory_space<vmem>>, vector<1x1x63x63xf32>
    %14 = vector.shape_cast %13 : vector<1x1x63x63xf32> to vector<63x63xf32>
    %c0_20 = arith.constant 0 : index
    %c1_21 = arith.constant 1 : index
    %c0_22 = arith.constant 0 : index
    %c1_23 = arith.constant 1 : index
    %15 = vector.load %arg1[%c0_20, %c1_21, %c0_22, %c1_23] : memref<1x3x64x64xf32, #tpu.memory_space<vmem>>, vector<1x1x63x63xf32>
    %16 = vector.shape_cast %15 : vector<1x1x63x63xf32> to vector<63x63xf32>
    %c0_24 = arith.constant 0 : index
    %c1_25 = arith.constant 1 : index
    %c1_26 = arith.constant 1 : index
    %c0_27 = arith.constant 0 : index
    %17 = vector.load %arg1[%c0_24, %c1_25, %c1_26, %c0_27] : memref<1x3x64x64xf32, #tpu.memory_space<vmem>>, vector<1x1x63x63xf32>
    %18 = vector.shape_cast %17 : vector<1x1x63x63xf32> to vector<63x63xf32>
    %c0_28 = arith.constant 0 : index
    %c1_29 = arith.constant 1 : index
    %c1_30 = arith.constant 1 : index
    %c1_31 = arith.constant 1 : index
    %19 = vector.load %arg1[%c0_28, %c1_29, %c1_30, %c1_31] : memref<1x3x64x64xf32, #tpu.memory_space<vmem>>, vector<1x1x63x63xf32>
    %20 = vector.shape_cast %19 : vector<1x1x63x63xf32> to vector<63x63xf32>
    %21 = arith.maximumf %14, %16 : vector<63x63xf32>
    %22 = arith.maximumf %18, %20 : vector<63x63xf32>
    %23 = arith.maximumf %21, %22 : vector<63x63xf32>
    %cst_32 = arith.constant dense<0.000000e+00> : vector<32x63xf32>
    %24 = tpu.matmul %0, %23, %cst_32 {dimension_numbers = #tpu.dot_dimension_numbers<[1], [0], [0], [1], [0, 0, 1, 1], [], []>} : vector<32x63xf32>, vector<63x63xf32>, vector<32x63xf32> -> vector<32x63xf32>
    %c0_33 = arith.constant 0 : index
    %c2 = arith.constant 2 : index
    %c0_34 = arith.constant 0 : index
    %c0_35 = arith.constant 0 : index
    %25 = vector.load %arg1[%c0_33, %c2, %c0_34, %c0_35] : memref<1x3x64x64xf32, #tpu.memory_space<vmem>>, vector<1x1x63x63xf32>
    %26 = vector.shape_cast %25 : vector<1x1x63x63xf32> to vector<63x63xf32>
    %c0_36 = arith.constant 0 : index
    %c2_37 = arith.constant 2 : index
    %c0_38 = arith.constant 0 : index
    %c1_39 = arith.constant 1 : index
    %27 = vector.load %arg1[%c0_36, %c2_37, %c0_38, %c1_39] : memref<1x3x64x64xf32, #tpu.memory_space<vmem>>, vector<1x1x63x63xf32>
    %28 = vector.shape_cast %27 : vector<1x1x63x63xf32> to vector<63x63xf32>
    %c0_40 = arith.constant 0 : index
    %c2_41 = arith.constant 2 : index
    %c1_42 = arith.constant 1 : index
    %c0_43 = arith.constant 0 : index
    %29 = vector.load %arg1[%c0_40, %c2_41, %c1_42, %c0_43] : memref<1x3x64x64xf32, #tpu.memory_space<vmem>>, vector<1x1x63x63xf32>
    %30 = vector.shape_cast %29 : vector<1x1x63x63xf32> to vector<63x63xf32>
    %c0_44 = arith.constant 0 : index
    %c2_45 = arith.constant 2 : index
    %c1_46 = arith.constant 1 : index
    %c1_47 = arith.constant 1 : index
    %31 = vector.load %arg1[%c0_44, %c2_45, %c1_46, %c1_47] : memref<1x3x64x64xf32, #tpu.memory_space<vmem>>, vector<1x1x63x63xf32>
    %32 = vector.shape_cast %31 : vector<1x1x63x63xf32> to vector<63x63xf32>
    %33 = arith.maximumf %26, %28 : vector<63x63xf32>
    %34 = arith.maximumf %30, %32 : vector<63x63xf32>
    %35 = arith.maximumf %33, %34 : vector<63x63xf32>
    %cst_48 = arith.constant dense<0.000000e+00> : vector<32x63xf32>
    %36 = tpu.matmul %0, %35, %cst_48 {dimension_numbers = #tpu.dot_dimension_numbers<[1], [0], [0], [1], [0, 0, 1, 1], [], []>} : vector<32x63xf32>, vector<63x63xf32>, vector<32x63xf32> -> vector<32x63xf32>
    %cst_49 = arith.constant 0.000000e+00 : f32
    %37 = vector.broadcast %cst_49 : f32 to vector<28x168xf32>
    %38 = vector.extract_strided_slice %12 {offsets = [0, 0], sizes = [28, 63], strides = [1, 1]} : vector<32x63xf32> to vector<28x63xf32>
    %c0_50 = arith.constant 0 : index
    %c0_51 = arith.constant 0 : index
    %c0_52 = arith.constant 0 : index
    %39 = vector.load %arg3[%c0_50, %c0_51, %c0_52] : memref<15x63x168xf32, #tpu.memory_space<vmem>>, vector<1x63x168xf32>
    %40 = vector.shape_cast %39 : vector<1x63x168xf32> to vector<63x168xf32>
    %cst_53 = arith.constant dense<0.000000e+00> : vector<28x168xf32>
    %41 = tpu.matmul %38, %40, %cst_53 {dimension_numbers = #tpu.dot_dimension_numbers<[1], [0], [0], [1], [0, 0, 1, 1], [], []>} : vector<28x63xf32>, vector<63x168xf32>, vector<28x168xf32> -> vector<28x168xf32>
    %42 = arith.addf %37, %41 : vector<28x168xf32>
    %43 = vector.extract_strided_slice %24 {offsets = [0, 0], sizes = [28, 63], strides = [1, 1]} : vector<32x63xf32> to vector<28x63xf32>
    %c1_54 = arith.constant 1 : index
    %c0_55 = arith.constant 0 : index
    %c0_56 = arith.constant 0 : index
    %44 = vector.load %arg3[%c1_54, %c0_55, %c0_56] : memref<15x63x168xf32, #tpu.memory_space<vmem>>, vector<1x63x168xf32>
    %45 = vector.shape_cast %44 : vector<1x63x168xf32> to vector<63x168xf32>
    %cst_57 = arith.constant dense<0.000000e+00> : vector<28x168xf32>
    %46 = tpu.matmul %43, %45, %cst_57 {dimension_numbers = #tpu.dot_dimension_numbers<[1], [0], [0], [1], [0, 0, 1, 1], [], []>} : vector<28x63xf32>, vector<63x168xf32>, vector<28x168xf32> -> vector<28x168xf32>
    %47 = arith.addf %42, %46 : vector<28x168xf32>
    %48 = vector.extract_strided_slice %36 {offsets = [0, 0], sizes = [28, 63], strides = [1, 1]} : vector<32x63xf32> to vector<28x63xf32>
    %c2_58 = arith.constant 2 : index
    %c0_59 = arith.constant 0 : index
    %c0_60 = arith.constant 0 : index
    %49 = vector.load %arg3[%c2_58, %c0_59, %c0_60] : memref<15x63x168xf32, #tpu.memory_space<vmem>>, vector<1x63x168xf32>
    %50 = vector.shape_cast %49 : vector<1x63x168xf32> to vector<63x168xf32>
    %cst_61 = arith.constant dense<0.000000e+00> : vector<28x168xf32>
    %51 = tpu.matmul %48, %50, %cst_61 {dimension_numbers = #tpu.dot_dimension_numbers<[1], [0], [0], [1], [0, 0, 1, 1], [], []>} : vector<28x63xf32>, vector<63x168xf32>, vector<28x168xf32> -> vector<28x168xf32>
    %52 = arith.addf %47, %51 : vector<28x168xf32>
    %53 = vector.extract_strided_slice %12 {offsets = [1, 0], sizes = [28, 63], strides = [1, 1]} : vector<32x63xf32> to vector<28x63xf32>
    %c3 = arith.constant 3 : index
    %c0_62 = arith.constant 0 : index
    %c0_63 = arith.constant 0 : index
    %54 = vector.load %arg3[%c3, %c0_62, %c0_63] : memref<15x63x168xf32, #tpu.memory_space<vmem>>, vector<1x63x168xf32>
    %55 = vector.shape_cast %54 : vector<1x63x168xf32> to vector<63x168xf32>
    %cst_64 = arith.constant dense<0.000000e+00> : vector<28x168xf32>
    %56 = tpu.matmul %53, %55, %cst_64 {dimension_numbers = #tpu.dot_dimension_numbers<[1], [0], [0], [1], [0, 0, 1, 1], [], []>} : vector<28x63xf32>, vector<63x168xf32>, vector<28x168xf32> -> vector<28x168xf32>
    %57 = arith.addf %52, %56 : vector<28x168xf32>
    %58 = vector.extract_strided_slice %24 {offsets = [1, 0], sizes = [28, 63], strides = [1, 1]} : vector<32x63xf32> to vector<28x63xf32>
    %c4 = arith.constant 4 : index
    %c0_65 = arith.constant 0 : index
    %c0_66 = arith.constant 0 : index
    %59 = vector.load %arg3[%c4, %c0_65, %c0_66] : memref<15x63x168xf32, #tpu.memory_space<vmem>>, vector<1x63x168xf32>
    %60 = vector.shape_cast %59 : vector<1x63x168xf32> to vector<63x168xf32>
    %cst_67 = arith.constant dense<0.000000e+00> : vector<28x168xf32>
    %61 = tpu.matmul %58, %60, %cst_67 {dimension_numbers = #tpu.dot_dimension_numbers<[1], [0], [0], [1], [0, 0, 1, 1], [], []>} : vector<28x63xf32>, vector<63x168xf32>, vector<28x168xf32> -> vector<28x168xf32>
    %62 = arith.addf %57, %61 : vector<28x168xf32>
    %63 = vector.extract_strided_slice %36 {offsets = [1, 0], sizes = [28, 63], strides = [1, 1]} : vector<32x63xf32> to vector<28x63xf32>
    %c5 = arith.constant 5 : index
    %c0_68 = arith.constant 0 : index
    %c0_69 = arith.constant 0 : index
    %64 = vector.load %arg3[%c5, %c0_68, %c0_69] : memref<15x63x168xf32, #tpu.memory_space<vmem>>, vector<1x63x168xf32>
    %65 = vector.shape_cast %64 : vector<1x63x168xf32> to vector<63x168xf32>
    %cst_70 = arith.constant dense<0.000000e+00> : vector<28x168xf32>
    %66 = tpu.matmul %63, %65, %cst_70 {dimension_numbers = #tpu.dot_dimension_numbers<[1], [0], [0], [1], [0, 0, 1, 1], [], []>} : vector<28x63xf32>, vector<63x168xf32>, vector<28x168xf32> -> vector<28x168xf32>
    %67 = arith.addf %62, %66 : vector<28x168xf32>
    %68 = vector.extract_strided_slice %12 {offsets = [2, 0], sizes = [28, 63], strides = [1, 1]} : vector<32x63xf32> to vector<28x63xf32>
    %c6 = arith.constant 6 : index
    %c0_71 = arith.constant 0 : index
    %c0_72 = arith.constant 0 : index
    %69 = vector.load %arg3[%c6, %c0_71, %c0_72] : memref<15x63x168xf32, #tpu.memory_space<vmem>>, vector<1x63x168xf32>
    %70 = vector.shape_cast %69 : vector<1x63x168xf32> to vector<63x168xf32>
    %cst_73 = arith.constant dense<0.000000e+00> : vector<28x168xf32>
    %71 = tpu.matmul %68, %70, %cst_73 {dimension_numbers = #tpu.dot_dimension_numbers<[1], [0], [0], [1], [0, 0, 1, 1], [], []>} : vector<28x63xf32>, vector<63x168xf32>, vector<28x168xf32> -> vector<28x168xf32>
    %72 = arith.addf %67, %71 : vector<28x168xf32>
    %73 = vector.extract_strided_slice %24 {offsets = [2, 0], sizes = [28, 63], strides = [1, 1]} : vector<32x63xf32> to vector<28x63xf32>
    %c7 = arith.constant 7 : index
    %c0_74 = arith.constant 0 : index
    %c0_75 = arith.constant 0 : index
    %74 = vector.load %arg3[%c7, %c0_74, %c0_75] : memref<15x63x168xf32, #tpu.memory_space<vmem>>, vector<1x63x168xf32>
    %75 = vector.shape_cast %74 : vector<1x63x168xf32> to vector<63x168xf32>
    %cst_76 = arith.constant dense<0.000000e+00> : vector<28x168xf32>
    %76 = tpu.matmul %73, %75, %cst_76 {dimension_numbers = #tpu.dot_dimension_numbers<[1], [0], [0], [1], [0, 0, 1, 1], [], []>} : vector<28x63xf32>, vector<63x168xf32>, vector<28x168xf32> -> vector<28x168xf32>
    %77 = arith.addf %72, %76 : vector<28x168xf32>
    %78 = vector.extract_strided_slice %36 {offsets = [2, 0], sizes = [28, 63], strides = [1, 1]} : vector<32x63xf32> to vector<28x63xf32>
    %c8 = arith.constant 8 : index
    %c0_77 = arith.constant 0 : index
    %c0_78 = arith.constant 0 : index
    %79 = vector.load %arg3[%c8, %c0_77, %c0_78] : memref<15x63x168xf32, #tpu.memory_space<vmem>>, vector<1x63x168xf32>
    %80 = vector.shape_cast %79 : vector<1x63x168xf32> to vector<63x168xf32>
    %cst_79 = arith.constant dense<0.000000e+00> : vector<28x168xf32>
    %81 = tpu.matmul %78, %80, %cst_79 {dimension_numbers = #tpu.dot_dimension_numbers<[1], [0], [0], [1], [0, 0, 1, 1], [], []>} : vector<28x63xf32>, vector<63x168xf32>, vector<28x168xf32> -> vector<28x168xf32>
    %82 = arith.addf %77, %81 : vector<28x168xf32>
    %83 = vector.extract_strided_slice %12 {offsets = [3, 0], sizes = [28, 63], strides = [1, 1]} : vector<32x63xf32> to vector<28x63xf32>
    %c9 = arith.constant 9 : index
    %c0_80 = arith.constant 0 : index
    %c0_81 = arith.constant 0 : index
    %84 = vector.load %arg3[%c9, %c0_80, %c0_81] : memref<15x63x168xf32, #tpu.memory_space<vmem>>, vector<1x63x168xf32>
    %85 = vector.shape_cast %84 : vector<1x63x168xf32> to vector<63x168xf32>
    %cst_82 = arith.constant dense<0.000000e+00> : vector<28x168xf32>
    %86 = tpu.matmul %83, %85, %cst_82 {dimension_numbers = #tpu.dot_dimension_numbers<[1], [0], [0], [1], [0, 0, 1, 1], [], []>} : vector<28x63xf32>, vector<63x168xf32>, vector<28x168xf32> -> vector<28x168xf32>
    %87 = arith.addf %82, %86 : vector<28x168xf32>
    %88 = vector.extract_strided_slice %24 {offsets = [3, 0], sizes = [28, 63], strides = [1, 1]} : vector<32x63xf32> to vector<28x63xf32>
    %c10 = arith.constant 10 : index
    %c0_83 = arith.constant 0 : index
    %c0_84 = arith.constant 0 : index
    %89 = vector.load %arg3[%c10, %c0_83, %c0_84] : memref<15x63x168xf32, #tpu.memory_space<vmem>>, vector<1x63x168xf32>
    %90 = vector.shape_cast %89 : vector<1x63x168xf32> to vector<63x168xf32>
    %cst_85 = arith.constant dense<0.000000e+00> : vector<28x168xf32>
    %91 = tpu.matmul %88, %90, %cst_85 {dimension_numbers = #tpu.dot_dimension_numbers<[1], [0], [0], [1], [0, 0, 1, 1], [], []>} : vector<28x63xf32>, vector<63x168xf32>, vector<28x168xf32> -> vector<28x168xf32>
    %92 = arith.addf %87, %91 : vector<28x168xf32>
    %93 = vector.extract_strided_slice %36 {offsets = [3, 0], sizes = [28, 63], strides = [1, 1]} : vector<32x63xf32> to vector<28x63xf32>
    %c11 = arith.constant 11 : index
    %c0_86 = arith.constant 0 : index
    %c0_87 = arith.constant 0 : index
    %94 = vector.load %arg3[%c11, %c0_86, %c0_87] : memref<15x63x168xf32, #tpu.memory_space<vmem>>, vector<1x63x168xf32>
    %95 = vector.shape_cast %94 : vector<1x63x168xf32> to vector<63x168xf32>
    %cst_88 = arith.constant dense<0.000000e+00> : vector<28x168xf32>
    %96 = tpu.matmul %93, %95, %cst_88 {dimension_numbers = #tpu.dot_dimension_numbers<[1], [0], [0], [1], [0, 0, 1, 1], [], []>} : vector<28x63xf32>, vector<63x168xf32>, vector<28x168xf32> -> vector<28x168xf32>
    %97 = arith.addf %92, %96 : vector<28x168xf32>
    %98 = vector.extract_strided_slice %12 {offsets = [4, 0], sizes = [28, 63], strides = [1, 1]} : vector<32x63xf32> to vector<28x63xf32>
    %c12 = arith.constant 12 : index
    %c0_89 = arith.constant 0 : index
    %c0_90 = arith.constant 0 : index
    %99 = vector.load %arg3[%c12, %c0_89, %c0_90] : memref<15x63x168xf32, #tpu.memory_space<vmem>>, vector<1x63x168xf32>
    %100 = vector.shape_cast %99 : vector<1x63x168xf32> to vector<63x168xf32>
    %cst_91 = arith.constant dense<0.000000e+00> : vector<28x168xf32>
    %101 = tpu.matmul %98, %100, %cst_91 {dimension_numbers = #tpu.dot_dimension_numbers<[1], [0], [0], [1], [0, 0, 1, 1], [], []>} : vector<28x63xf32>, vector<63x168xf32>, vector<28x168xf32> -> vector<28x168xf32>
    %102 = arith.addf %97, %101 : vector<28x168xf32>
    %103 = vector.extract_strided_slice %24 {offsets = [4, 0], sizes = [28, 63], strides = [1, 1]} : vector<32x63xf32> to vector<28x63xf32>
    %c13 = arith.constant 13 : index
    %c0_92 = arith.constant 0 : index
    %c0_93 = arith.constant 0 : index
    %104 = vector.load %arg3[%c13, %c0_92, %c0_93] : memref<15x63x168xf32, #tpu.memory_space<vmem>>, vector<1x63x168xf32>
    %105 = vector.shape_cast %104 : vector<1x63x168xf32> to vector<63x168xf32>
    %cst_94 = arith.constant dense<0.000000e+00> : vector<28x168xf32>
    %106 = tpu.matmul %103, %105, %cst_94 {dimension_numbers = #tpu.dot_dimension_numbers<[1], [0], [0], [1], [0, 0, 1, 1], [], []>} : vector<28x63xf32>, vector<63x168xf32>, vector<28x168xf32> -> vector<28x168xf32>
    %107 = arith.addf %102, %106 : vector<28x168xf32>
    %108 = vector.extract_strided_slice %36 {offsets = [4, 0], sizes = [28, 63], strides = [1, 1]} : vector<32x63xf32> to vector<28x63xf32>
    %c14 = arith.constant 14 : index
    %c0_95 = arith.constant 0 : index
    %c0_96 = arith.constant 0 : index
    %109 = vector.load %arg3[%c14, %c0_95, %c0_96] : memref<15x63x168xf32, #tpu.memory_space<vmem>>, vector<1x63x168xf32>
    %110 = vector.shape_cast %109 : vector<1x63x168xf32> to vector<63x168xf32>
    %cst_97 = arith.constant dense<0.000000e+00> : vector<28x168xf32>
    %111 = tpu.matmul %108, %110, %cst_97 {dimension_numbers = #tpu.dot_dimension_numbers<[1], [0], [0], [1], [0, 0, 1, 1], [], []>} : vector<28x63xf32>, vector<63x168xf32>, vector<28x168xf32> -> vector<28x168xf32>
    %112 = arith.addf %107, %111 : vector<28x168xf32>
    %c0_98 = arith.constant 0 : index
    %c0_99 = arith.constant 0 : index
    %113 = vector.load %arg4[%c0_98, %c0_99] : memref<1x168xf32, #tpu.memory_space<vmem>>, vector<1x168xf32>
    %114 = vector.broadcast %113 : vector<1x168xf32> to vector<28x168xf32>
    %115 = arith.addf %112, %114 : vector<28x168xf32>
    %cst_100 = arith.constant 0.000000e+00 : f32
    %116 = vector.broadcast %cst_100 : f32 to vector<28x168xf32>
    %117 = arith.maximumf %115, %116 : vector<28x168xf32>
    %c0_101 = arith.constant 0 : index
    %c0_102 = arith.constant 0 : index
    %118 = vector.load %arg16[%c0_101, %c0_102] : memref<28x168xf32, #tpu.memory_space<vmem>>, vector<28x168xf32>
    tpu.vector_store %arg16[%c0_101, %c0_102], %117 {strides = array<i32>} : memref<28x168xf32, #tpu.memory_space<vmem>>, vector<28x168xf32>,
    %c0_103 = arith.constant 0 : index
    %c0_104 = arith.constant 0 : index
    %119 = vector.load %arg16[%c0_103, %c0_104] : memref<28x168xf32, #tpu.memory_space<vmem>>, vector<27x162xf32>
    %c0_105 = arith.constant 0 : index
    %c6_106 = arith.constant 6 : index
    %120 = vector.load %arg16[%c0_105, %c6_106] : memref<28x168xf32, #tpu.memory_space<vmem>>, vector<27x162xf32>
    %c1_107 = arith.constant 1 : index
    %c0_108 = arith.constant 0 : index
    %121 = vector.load %arg16[%c1_107, %c0_108] : memref<28x168xf32, #tpu.memory_space<vmem>>, vector<27x162xf32>
    %c1_109 = arith.constant 1 : index
    %c6_110 = arith.constant 6 : index
    %122 = vector.load %arg16[%c1_109, %c6_110] : memref<28x168xf32, #tpu.memory_space<vmem>>, vector<27x162xf32>
    %123 = arith.maximumf %119, %120 : vector<27x162xf32>
    %124 = arith.maximumf %121, %122 : vector<27x162xf32>
    %125 = arith.maximumf %123, %124 : vector<27x162xf32>
    %c0_111 = arith.constant 0 : index
    %c0_112 = arith.constant 0 : index
    %126 = vector.load %arg5[%c0_111, %c0_112] : memref<14x27xf32, #tpu.memory_space<vmem>>, vector<14x27xf32>
    %cst_113 = arith.constant dense<0.000000e+00> : vector<14x162xf32>
    %127 = tpu.matmul %126, %125, %cst_113 {dimension_numbers = #tpu.dot_dimension_numbers<[1], [0], [0], [1], [0, 0, 1, 1], [], []>} : vector<14x27xf32>, vector<27x162xf32>, vector<14x162xf32> -> vector<14x162xf32>
    %cst_114 = arith.constant 0.000000e+00 : f32
    %128 = vector.broadcast %cst_114 : f32 to vector<10x160xf32>
    %129 = vector.extract_strided_slice %127 {offsets = [0, 0], sizes = [10, 162], strides = [1, 1]} : vector<14x162xf32> to vector<10x162xf32>
    %c0_115 = arith.constant 0 : index
    %c0_116 = arith.constant 0 : index
    %c0_117 = arith.constant 0 : index
    %130 = vector.load %arg6[%c0_115, %c0_116, %c0_117] : memref<5x162x160xf32, #tpu.memory_space<vmem>>, vector<1x162x160xf32>
    %131 = vector.shape_cast %130 : vector<1x162x160xf32> to vector<162x160xf32>
    %cst_118 = arith.constant dense<0.000000e+00> : vector<10x160xf32>
    %132 = tpu.matmul %129, %131, %cst_118 {dimension_numbers = #tpu.dot_dimension_numbers<[1], [0], [0], [1], [0, 0, 1, 1], [], []>} : vector<10x162xf32>, vector<162x160xf32>, vector<10x160xf32> -> vector<10x160xf32>
    %133 = arith.addf %128, %132 : vector<10x160xf32>
    %134 = vector.extract_strided_slice %127 {offsets = [1, 0], sizes = [10, 162], strides = [1, 1]} : vector<14x162xf32> to vector<10x162xf32>
    %c1_119 = arith.constant 1 : index
    %c0_120 = arith.constant 0 : index
    %c0_121 = arith.constant 0 : index
    %135 = vector.load %arg6[%c1_119, %c0_120, %c0_121] : memref<5x162x160xf32, #tpu.memory_space<vmem>>, vector<1x162x160xf32>
    %136 = vector.shape_cast %135 : vector<1x162x160xf32> to vector<162x160xf32>
    %cst_122 = arith.constant dense<0.000000e+00> : vector<10x160xf32>
    %137 = tpu.matmul %134, %136, %cst_122 {dimension_numbers = #tpu.dot_dimension_numbers<[1], [0], [0], [1], [0, 0, 1, 1], [], []>} : vector<10x162xf32>, vector<162x160xf32>, vector<10x160xf32> -> vector<10x160xf32>
    %138 = arith.addf %133, %137 : vector<10x160xf32>
    %139 = vector.extract_strided_slice %127 {offsets = [2, 0], sizes = [10, 162], strides = [1, 1]} : vector<14x162xf32> to vector<10x162xf32>
    %c2_123 = arith.constant 2 : index
    %c0_124 = arith.constant 0 : index
    %c0_125 = arith.constant 0 : index
    %140 = vector.load %arg6[%c2_123, %c0_124, %c0_125] : memref<5x162x160xf32, #tpu.memory_space<vmem>>, vector<1x162x160xf32>
    %141 = vector.shape_cast %140 : vector<1x162x160xf32> to vector<162x160xf32>
    %cst_126 = arith.constant dense<0.000000e+00> : vector<10x160xf32>
    %142 = tpu.matmul %139, %141, %cst_126 {dimension_numbers = #tpu.dot_dimension_numbers<[1], [0], [0], [1], [0, 0, 1, 1], [], []>} : vector<10x162xf32>, vector<162x160xf32>, vector<10x160xf32> -> vector<10x160xf32>
    %143 = arith.addf %138, %142 : vector<10x160xf32>
    %144 = vector.extract_strided_slice %127 {offsets = [3, 0], sizes = [10, 162], strides = [1, 1]} : vector<14x162xf32> to vector<10x162xf32>
    %c3_127 = arith.constant 3 : index
    %c0_128 = arith.constant 0 : index
    %c0_129 = arith.constant 0 : index
    %145 = vector.load %arg6[%c3_127, %c0_128, %c0_129] : memref<5x162x160xf32, #tpu.memory_space<vmem>>, vector<1x162x160xf32>
    %146 = vector.shape_cast %145 : vector<1x162x160xf32> to vector<162x160xf32>
    %cst_130 = arith.constant dense<0.000000e+00> : vector<10x160xf32>
    %147 = tpu.matmul %144, %146, %cst_130 {dimension_numbers = #tpu.dot_dimension_numbers<[1], [0], [0], [1], [0, 0, 1, 1], [], []>} : vector<10x162xf32>, vector<162x160xf32>, vector<10x160xf32> -> vector<10x160xf32>
    %148 = arith.addf %143, %147 : vector<10x160xf32>
    %149 = vector.extract_strided_slice %127 {offsets = [4, 0], sizes = [10, 162], strides = [1, 1]} : vector<14x162xf32> to vector<10x162xf32>
    %c4_131 = arith.constant 4 : index
    %c0_132 = arith.constant 0 : index
    %c0_133 = arith.constant 0 : index
    %150 = vector.load %arg6[%c4_131, %c0_132, %c0_133] : memref<5x162x160xf32, #tpu.memory_space<vmem>>, vector<1x162x160xf32>
    %151 = vector.shape_cast %150 : vector<1x162x160xf32> to vector<162x160xf32>
    %cst_134 = arith.constant dense<0.000000e+00> : vector<10x160xf32>
    %152 = tpu.matmul %149, %151, %cst_134 {dimension_numbers = #tpu.dot_dimension_numbers<[1], [0], [0], [1], [0, 0, 1, 1], [], []>} : vector<10x162xf32>, vector<162x160xf32>, vector<10x160xf32> -> vector<10x160xf32>
    %153 = arith.addf %148, %152 : vector<10x160xf32>
    %c0_135 = arith.constant 0 : index
    %c0_136 = arith.constant 0 : index
    %154 = vector.load %arg7[%c0_135, %c0_136] : memref<1x160xf32, #tpu.memory_space<vmem>>, vector<1x160xf32>
    %155 = vector.broadcast %154 : vector<1x160xf32> to vector<10x160xf32>
    %156 = arith.addf %153, %155 : vector<10x160xf32>
    %cst_137 = arith.constant 0.000000e+00 : f32
    %157 = vector.broadcast %cst_137 : f32 to vector<10x160xf32>
    %158 = arith.maximumf %156, %157 : vector<10x160xf32>
    %c0_138 = arith.constant 0 : index
    %c0_139 = arith.constant 0 : index
    %159 = vector.load %arg17[%c0_138, %c0_139] : memref<10x160xf32, #tpu.memory_space<vmem>>, vector<10x160xf32>
    tpu.vector_store %arg17[%c0_138, %c0_139], %158 {strides = array<i32>} : memref<10x160xf32, #tpu.memory_space<vmem>>, vector<10x160xf32>,
    %c0_140 = arith.constant 0 : index
    %c0_141 = arith.constant 0 : index
    %160 = vector.load %arg17[%c0_140, %c0_141] : memref<10x160xf32, #tpu.memory_space<vmem>>, vector<9x144xf32>
    %c0_142 = arith.constant 0 : index
    %c16 = arith.constant 16 : index
    %161 = vector.load %arg17[%c0_142, %c16] : memref<10x160xf32, #tpu.memory_space<vmem>>, vector<9x144xf32>
    %c1_143 = arith.constant 1 : index
    %c0_144 = arith.constant 0 : index
    %162 = vector.load %arg17[%c1_143, %c0_144] : memref<10x160xf32, #tpu.memory_space<vmem>>, vector<9x144xf32>
    %c1_145 = arith.constant 1 : index
    %c16_146 = arith.constant 16 : index
    %163 = vector.load %arg17[%c1_145, %c16_146] : memref<10x160xf32, #tpu.memory_space<vmem>>, vector<9x144xf32>
    %164 = arith.maximumf %160, %161 : vector<9x144xf32>
    %165 = arith.maximumf %162, %163 : vector<9x144xf32>
    %166 = arith.maximumf %164, %165 : vector<9x144xf32>
    %c0_147 = arith.constant 0 : index
    %c0_148 = arith.constant 0 : index
    %167 = vector.load %arg8[%c0_147, %c0_148] : memref<5x9xf32, #tpu.memory_space<vmem>>, vector<5x9xf32>
    %cst_149 = arith.constant dense<0.000000e+00> : vector<5x144xf32>
    %168 = tpu.matmul %167, %166, %cst_149 {dimension_numbers = #tpu.dot_dimension_numbers<[1], [0], [0], [1], [0, 0, 1, 1], [], []>} : vector<5x9xf32>, vector<9x144xf32>, vector<5x144xf32> -> vector<5x144xf32>
    %cst_150 = arith.constant 0.000000e+00 : f32
    %169 = vector.broadcast %cst_150 : f32 to vector<1x120xf32>
    %170 = vector.extract_strided_slice %168 {offsets = [0, 0], sizes = [1, 144], strides = [1, 1]} : vector<5x144xf32> to vector<1x144xf32>
    %c0_151 = arith.constant 0 : index
    %c0_152 = arith.constant 0 : index
    %c0_153 = arith.constant 0 : index
    %171 = vector.load %arg9[%c0_151, %c0_152, %c0_153] : memref<5x144x120xf32, #tpu.memory_space<vmem>>, vector<1x144x120xf32>
    %172 = vector.shape_cast %171 : vector<1x144x120xf32> to vector<144x120xf32>
    %cst_154 = arith.constant dense<0.000000e+00> : vector<1x120xf32>
    %173 = tpu.matmul %170, %172, %cst_154 {dimension_numbers = #tpu.dot_dimension_numbers<[1], [0], [0], [1], [0, 0, 1, 1], [], []>} : vector<1x144xf32>, vector<144x120xf32>, vector<1x120xf32> -> vector<1x120xf32>
    %174 = arith.addf %169, %173 : vector<1x120xf32>
    %175 = vector.extract_strided_slice %168 {offsets = [1, 0], sizes = [1, 144], strides = [1, 1]} : vector<5x144xf32> to vector<1x144xf32>
    %c1_155 = arith.constant 1 : index
    %c0_156 = arith.constant 0 : index
    %c0_157 = arith.constant 0 : index
    %176 = vector.load %arg9[%c1_155, %c0_156, %c0_157] : memref<5x144x120xf32, #tpu.memory_space<vmem>>, vector<1x144x120xf32>
    %177 = vector.shape_cast %176 : vector<1x144x120xf32> to vector<144x120xf32>
    %cst_158 = arith.constant dense<0.000000e+00> : vector<1x120xf32>
    %178 = tpu.matmul %175, %177, %cst_158 {dimension_numbers = #tpu.dot_dimension_numbers<[1], [0], [0], [1], [0, 0, 1, 1], [], []>} : vector<1x144xf32>, vector<144x120xf32>, vector<1x120xf32> -> vector<1x120xf32>
    %179 = arith.addf %174, %178 : vector<1x120xf32>
    %180 = vector.extract_strided_slice %168 {offsets = [2, 0], sizes = [1, 144], strides = [1, 1]} : vector<5x144xf32> to vector<1x144xf32>
    %c2_159 = arith.constant 2 : index
    %c0_160 = arith.constant 0 : index
    %c0_161 = arith.constant 0 : index
    %181 = vector.load %arg9[%c2_159, %c0_160, %c0_161] : memref<5x144x120xf32, #tpu.memory_space<vmem>>, vector<1x144x120xf32>
    %182 = vector.shape_cast %181 : vector<1x144x120xf32> to vector<144x120xf32>
    %cst_162 = arith.constant dense<0.000000e+00> : vector<1x120xf32>
    %183 = tpu.matmul %180, %182, %cst_162 {dimension_numbers = #tpu.dot_dimension_numbers<[1], [0], [0], [1], [0, 0, 1, 1], [], []>} : vector<1x144xf32>, vector<144x120xf32>, vector<1x120xf32> -> vector<1x120xf32>
    %184 = arith.addf %179, %183 : vector<1x120xf32>
    %185 = vector.extract_strided_slice %168 {offsets = [3, 0], sizes = [1, 144], strides = [1, 1]} : vector<5x144xf32> to vector<1x144xf32>
    %c3_163 = arith.constant 3 : index
    %c0_164 = arith.constant 0 : index
    %c0_165 = arith.constant 0 : index
    %186 = vector.load %arg9[%c3_163, %c0_164, %c0_165] : memref<5x144x120xf32, #tpu.memory_space<vmem>>, vector<1x144x120xf32>
    %187 = vector.shape_cast %186 : vector<1x144x120xf32> to vector<144x120xf32>
    %cst_166 = arith.constant dense<0.000000e+00> : vector<1x120xf32>
    %188 = tpu.matmul %185, %187, %cst_166 {dimension_numbers = #tpu.dot_dimension_numbers<[1], [0], [0], [1], [0, 0, 1, 1], [], []>} : vector<1x144xf32>, vector<144x120xf32>, vector<1x120xf32> -> vector<1x120xf32>
    %189 = arith.addf %184, %188 : vector<1x120xf32>
    %190 = vector.extract_strided_slice %168 {offsets = [4, 0], sizes = [1, 144], strides = [1, 1]} : vector<5x144xf32> to vector<1x144xf32>
    %c4_167 = arith.constant 4 : index
    %c0_168 = arith.constant 0 : index
    %c0_169 = arith.constant 0 : index
    %191 = vector.load %arg9[%c4_167, %c0_168, %c0_169] : memref<5x144x120xf32, #tpu.memory_space<vmem>>, vector<1x144x120xf32>
    %192 = vector.shape_cast %191 : vector<1x144x120xf32> to vector<144x120xf32>
    %cst_170 = arith.constant dense<0.000000e+00> : vector<1x120xf32>
    %193 = tpu.matmul %190, %192, %cst_170 {dimension_numbers = #tpu.dot_dimension_numbers<[1], [0], [0], [1], [0, 0, 1, 1], [], []>} : vector<1x144xf32>, vector<144x120xf32>, vector<1x120xf32> -> vector<1x120xf32>
    %194 = arith.addf %189, %193 : vector<1x120xf32>
    %c0_171 = arith.constant 0 : index
    %c0_172 = arith.constant 0 : index
    %195 = vector.load %arg10[%c0_171, %c0_172] : memref<1x120xf32, #tpu.memory_space<vmem>>, vector<1x120xf32>
    %196 = arith.addf %194, %195 : vector<1x120xf32>
    %cst_173 = arith.constant 0.000000e+00 : f32
    %197 = vector.broadcast %cst_173 : f32 to vector<1x120xf32>
    %198 = arith.maximumf %196, %197 : vector<1x120xf32>
    %c0_174 = arith.constant 0 : index
    %c0_175 = arith.constant 0 : index
    %199 = vector.load %arg11[%c0_174, %c0_175] : memref<120x84xf32, #tpu.memory_space<vmem>>, vector<120x84xf32>
    %cst_176 = arith.constant dense<0.000000e+00> : vector<1x84xf32>
    %200 = tpu.matmul %198, %199, %cst_176 {dimension_numbers = #tpu.dot_dimension_numbers<[1], [0], [0], [1], [0, 0, 1, 1], [], []>} : vector<1x120xf32>, vector<120x84xf32>, vector<1x84xf32> -> vector<1x84xf32>
    %c0_177 = arith.constant 0 : index
    %c0_178 = arith.constant 0 : index
    %201 = vector.load %arg12[%c0_177, %c0_178] : memref<1x84xf32, #tpu.memory_space<vmem>>, vector<1x84xf32>
    %202 = arith.addf %200, %201 : vector<1x84xf32>
    %cst_179 = arith.constant 0.000000e+00 : f32
    %203 = vector.broadcast %cst_179 : f32 to vector<1x84xf32>
    %204 = arith.maximumf %202, %203 : vector<1x84xf32>
    %c0_180 = arith.constant 0 : index
    %c0_181 = arith.constant 0 : index
    %205 = vector.load %arg13[%c0_180, %c0_181] : memref<84x128xf32, #tpu.memory_space<vmem>>, vector<84x128xf32>
    %cst_182 = arith.constant dense<0.000000e+00> : vector<1x128xf32>
    %206 = tpu.matmul %204, %205, %cst_182 {dimension_numbers = #tpu.dot_dimension_numbers<[1], [0], [0], [1], [0, 0, 1, 1], [], []>} : vector<1x84xf32>, vector<84x128xf32>, vector<1x128xf32> -> vector<1x128xf32>
    %c0_183 = arith.constant 0 : index
    %c0_184 = arith.constant 0 : index
    %207 = vector.load %arg14[%c0_183, %c0_184] : memref<1x128xf32, #tpu.memory_space<vmem>>, vector<1x128xf32>
    %208 = arith.addf %206, %207 : vector<1x128xf32>
    %209 = tpu.iota {dimensions = array<i32: 1>} : vector<1x128xi32>
    %c2_i32 = arith.constant 2 : i32
    %210 = vector.broadcast %c2_i32 : i32 to vector<1x128xi32>
    %211 = arith.cmpi slt, %209, %210 : vector<1x128xi32>
    %cst_185 = arith.constant 0xFF800000 : f32
    %212 = vector.broadcast %cst_185 : f32 to vector<1x128xf32>
    %213 = arith.select %211, %208, %212 : vector<1x128xi1>, vector<1x128xf32>
    %cst_186 = arith.constant dense<0xFF800000> : vector<1xf32>
    %214 = vector.multi_reduction <maximumf>, %213, %cst_186 [1] : vector<1x128xf32> to vector<1xf32>
    %215 = vector.shape_cast %214 : vector<1xf32> to vector<1x1xf32>
    %216 = vector.broadcast %215 : vector<1x1xf32> to vector<1x128xf32>
    %217 = arith.subf %213, %216 : vector<1x128xf32>
    %218 = math.exp %217 : vector<1x128xf32>
    %cst_187 = arith.constant 0.000000e+00 : f32
    %219 = vector.broadcast %cst_187 : f32 to vector<1x128xf32>
    %220 = arith.select %211, %218, %219 : vector<1x128xi1>, vector<1x128xf32>
    %cst_188 = arith.constant dense<0.000000e+00> : vector<1xf32>
    %221 = vector.multi_reduction <add>, %220, %cst_188 [1] : vector<1x128xf32> to vector<1xf32>
    %222 = vector.shape_cast %221 : vector<1xf32> to vector<1x1xf32>
    %223 = vector.broadcast %222 : vector<1x1xf32> to vector<1x128xf32>
    %224 = arith.divf %220, %223 : vector<1x128xf32>
    %c0_189 = arith.constant 0 : index
    %c0_190 = arith.constant 0 : index
    %c0_191 = arith.constant 0 : index
    %225 = vector.load %arg15[%c0_189, %c0_190, %c0_191] : memref<1x1x128xf32, #tpu.memory_space<vmem>>, vector<1x1x128xf32>
    %226 = vector.shape_cast %225 : vector<1x1x128xf32> to vector<1x128xf32>
    %227 = vector.shape_cast %224 : vector<1x128xf32> to vector<1x1x128xf32>
    tpu.vector_store %arg15[%c0_189, %c0_190, %c0_191], %227 {strides = array<i32>} : memref<1x1x128xf32, #tpu.memory_space<vmem>>, vector<1x1x128xf32>,
    return
  }
  func.func @transform_0(%arg0: i32) -> (i32, i32, i32, i32) {
    %c0_i32 = arith.constant 0 : i32
    %c0_i32_0 = arith.constant 0 : i32
    %c0_i32_1 = arith.constant 0 : i32
    %c0_i32_2 = arith.constant 0 : i32
    return %arg0, %c0_i32, %c0_i32_0, %c0_i32_1 : i32, i32, i32, i32
  }
  func.func @transform_1(%arg0: i32) -> (i32, i32) {
    %c0_i32 = arith.constant 0 : i32
    %c0_i32_0 = arith.constant 0 : i32
    %c0_i32_1 = arith.constant 0 : i32
    return %c0_i32, %c0_i32_0 : i32, i32
  }
  func.func @transform_2(%arg0: i32) -> (i32, i32, i32) {
    %c0_i32 = arith.constant 0 : i32
    %c0_i32_0 = arith.constant 0 : i32
    %c0_i32_1 = arith.constant 0 : i32
    %c0_i32_2 = arith.constant 0 : i32
    return %c0_i32, %c0_i32_0, %c0_i32_1 : i32, i32, i32
  }
  func.func @transform_3(%arg0: i32) -> (i32, i32) {
    %c0_i32 = arith.constant 0 : i32
    %c0_i32_0 = arith.constant 0 : i32
    %c0_i32_1 = arith.constant 0 : i32
    return %c0_i32, %c0_i32_0 : i32, i32
  }
  func.func @transform_4(%arg0: i32) -> (i32, i32) {
    %c0_i32 = arith.constant 0 : i32
    %c0_i32_0 = arith.constant 0 : i32
    %c0_i32_1 = arith.constant 0 : i32
    return %c0_i32, %c0_i32_0 : i32, i32
  }
  func.func @transform_5(%arg0: i32) -> (i32, i32, i32) {
    %c0_i32 = arith.constant 0 : i32
    %c0_i32_0 = arith.constant 0 : i32
    %c0_i32_1 = arith.constant 0 : i32
    %c0_i32_2 = arith.constant 0 : i32
    return %c0_i32, %c0_i32_0, %c0_i32_1 : i32, i32, i32
  }
  func.func @transform_6(%arg0: i32) -> (i32, i32) {
    %c0_i32 = arith.constant 0 : i32
    %c0_i32_0 = arith.constant 0 : i32
    %c0_i32_1 = arith.constant 0 : i32
    return %c0_i32, %c0_i32_0 : i32, i32
  }
  func.func @transform_7(%arg0: i32) -> (i32, i32) {
    %c0_i32 = arith.constant 0 : i32
    %c0_i32_0 = arith.constant 0 : i32
    %c0_i32_1 = arith.constant 0 : i32
    return %c0_i32, %c0_i32_0 : i32, i32
  }
  func.func @transform_8(%arg0: i32) -> (i32, i32, i32) {
    %c0_i32 = arith.constant 0 : i32
    %c0_i32_0 = arith.constant 0 : i32
    %c0_i32_1 = arith.constant 0 : i32
    %c0_i32_2 = arith.constant 0 : i32
    return %c0_i32, %c0_i32_0, %c0_i32_1 : i32, i32, i32
  }
  func.func @transform_9(%arg0: i32) -> (i32, i32) {
    %c0_i32 = arith.constant 0 : i32
    %c0_i32_0 = arith.constant 0 : i32
    %c0_i32_1 = arith.constant 0 : i32
    return %c0_i32, %c0_i32_0 : i32, i32
  }
  func.func @transform_10(%arg0: i32) -> (i32, i32) {
    %c0_i32 = arith.constant 0 : i32
    %c0_i32_0 = arith.constant 0 : i32
    %c0_i32_1 = arith.constant 0 : i32
    return %c0_i32, %c0_i32_0 : i32, i32
  }
  func.func @transform_11(%arg0: i32) -> (i32, i32) {
    %c0_i32 = arith.constant 0 : i32
    %c0_i32_0 = arith.constant 0 : i32
    %c0_i32_1 = arith.constant 0 : i32
    return %c0_i32, %c0_i32_0 : i32, i32
  }
  func.func @transform_12(%arg0: i32) -> (i32, i32) {
    %c0_i32 = arith.constant 0 : i32
    %c0_i32_0 = arith.constant 0 : i32
    %c0_i32_1 = arith.constant 0 : i32
    return %c0_i32, %c0_i32_0 : i32, i32
  }
  func.func @transform_13(%arg0: i32) -> (i32, i32) {
    %c0_i32 = arith.constant 0 : i32
    %c0_i32_0 = arith.constant 0 : i32
    %c0_i32_1 = arith.constant 0 : i32
    return %c0_i32, %c0_i32_0 : i32, i32
  }
  func.func @transform_14(%arg0: i32) -> (i32, i32, i32) {
    %c0_i32 = arith.constant 0 : i32
    %c0_i32_0 = arith.constant 0 : i32
    %c0_i32_1 = arith.constant 0 : i32
    return %arg0, %c0_i32, %c0_i32_0 : i32, i32, i32
  }
}

</mosaic_0001>

<llo_original>
// kernel: _net_forward_fn.1
$region0: #{_net_forward_fn.1}
  #allocation0 [shape = 'u32[]', space=smem, size = 0x4, offset = 0x4, fixed_abs, tag = 'smem constant byte address 0x4 - core index']
  #allocation1 [shape = 'u32[144,128]{1,0:T(1,128)}', space=vmem, size = 0x12000, scoped, tag = 'internal scratch']
  #allocation2 [shape = 'f32[28,168]{1,0:T(8,128)}', space=vmem, size = 0x8000, scoped, tag = 'scratch operand']
  #allocation3 [shape = 'f32[10,160]{1,0:T(8,128)}', space=vmem, size = 0x4000, scoped, tag = 'scratch operand']
  %s0 = inlined_call_operand.vmem [shape: f32[2,3,64,64], index: 0, kind: input, shape index: {}]
  %s1 = inlined_call_operand.vmem [shape: f32[32,63], index: 1, kind: input, shape index: {}]
  %s2 = inlined_call_operand.vmem [shape: f32[15,63,168], index: 2, kind: input, shape index: {}]
  %s3 = inlined_call_operand.vmem [shape: f32[1,168], index: 3, kind: input, shape index: {}]
  %s4 = inlined_call_operand.vmem [shape: f32[14,27], index: 4, kind: input, shape index: {}]
  %s5 = inlined_call_operand.vmem [shape: f32[5,162,160], index: 5, kind: input, shape index: {}]
  %s6 = inlined_call_operand.vmem [shape: f32[1,160], index: 6, kind: input, shape index: {}]
  %s7 = inlined_call_operand.vmem [shape: f32[5,9], index: 7, kind: input, shape index: {}]
  %s8 = inlined_call_operand.vmem [shape: f32[5,144,120], index: 8, kind: input, shape index: {}]
  %s9 = inlined_call_operand.vmem [shape: f32[1,120], index: 9, kind: input, shape index: {}]
  %s10 = inlined_call_operand.vmem [shape: f32[120,84], index: 10, kind: input, shape index: {}]
  %s11 = inlined_call_operand.vmem [shape: f32[1,84], index: 11, kind: input, shape index: {}]
  %s12 = inlined_call_operand.vmem [shape: f32[84,128], index: 12, kind: input, shape index: {}]
  %s13 = inlined_call_operand.vmem [shape: f32[1,128], index: 13, kind: input, shape index: {}]
  %s14 = inlined_call_operand.hbm [shape: f32[2,1,128], index: 14, kind: output, shape index: {}]
  %s15 = sld [smem:[#allocation0]]
  $region89: #{_net_forward_fn.1} parent=0
    _
  %s17 = ssub.s32 1, %s15
  %s18 = scalar_select 0, %s17, %s15
  $region1: #{_net_forward_fn.1} parent=0
    #allocation4 [shape = 'u8[1024]{0}', space=vmem, size = 0x400, scoped, tag = 'output window, operand 0']
    #allocation5 [shape = 's32[2]{0}', space=sflag, size = 0x8, scoped, tag = 'scoped memory for _net_forward_fn.1']
    %19 = vsyncpa [#allocation5], 0
    %s20 = scalar_lea.sflag [#allocation5], 1
    %21 = vsyncpa %s20, 0
    loop: start=0, step=1, limit=4
    $region2: #{_net_forward_fn.1} parent=1 // loop_pre_header
      _
    $region3: #{_net_forward_fn.1} parent=1 // loop_header
      %s23 = sphi 0, %s27
      %p24 = scmp.ge.s32.totalorder %s23, 4
      %s33 = sphi 0, %s35
      %s36 = sphi 0, %s33
      %s37 = sphi 0, %s36
      %s53 = sphi 0, %s37
      %s57 = sphi 0, %s57
      %s59 = sphi 0, %s57
      %s60 = sphi 0, %s59
      %s74 = sphi 0, %s60
      %s78 = sphi 0, %s78
      %s80 = sphi 0, %s78
      %s81 = sphi 0, %s80
      %s95 = sphi 0, %s81
      %s99 = sphi 0, %s99
      %s101 = sphi 0, %s99
      %s102 = sphi 0, %s101
      %s116 = sphi 0, %s102
      %s120 = sphi 0, %s120
      %s122 = sphi 0, %s120
      %s123 = sphi 0, %s122
      %s137 = sphi 0, %s123
      %s141 = sphi 0, %s141
      %s143 = sphi 0, %s141
      %s144 = sphi 0, %s143
      %s158 = sphi 0, %s144
      %s162 = sphi 0, %s162
      %s164 = sphi 0, %s162
      %s165 = sphi 0, %s164
      %s179 = sphi 0, %s165
      %s183 = sphi 0, %s183
      %s185 = sphi 0, %s183
      %s186 = sphi 0, %s185
      %s200 = sphi 0, %s186
      %s204 = sphi 0, %s204
      %s206 = sphi 0, %s204
      %s207 = sphi 0, %s206
      %s221 = sphi 0, %s207
      %s225 = sphi 0, %s225
      %s227 = sphi 0, %s225
      %s228 = sphi 0, %s227
      %s242 = sphi 0, %s228
      %s246 = sphi 0, %s246
      %s248 = sphi 0, %s246
      %s249 = sphi 0, %s248
      %s263 = sphi 0, %s249
      %s267 = sphi 0, %s267
      %s269 = sphi 0, %s267
      %s270 = sphi 0, %s269
      %s284 = sphi 0, %s270
      %s288 = sphi 0, %s288
      %s290 = sphi 0, %s288
      %s291 = sphi 0, %s290
      %s305 = sphi 0, %s291
      %s309 = sphi 0, %s309
      %s311 = sphi 0, %s309
      %s312 = sphi 0, %s311
      %s326 = sphi 0, %s312
      %s332 = sphi 0, %s334
      %s335 = sphi 0, %s332
      %s336 = sphi 0, %s335
      %s352 = sphi 0, %s336
    $region4: #{_net_forward_fn.1} parent=1 // loop_header_branch
      %26 = sbr.rel (%p24) target = $region8
    $region5: #{_net_forward_fn.1} parent=1 // loop_body
      %s28 = ssub.s32 %s23, 1
      %s29 = ssub.s32 %s23, 2
      %s30 = sadd.s32 %s23, 1
      %s31 = ssub.s32 %s23, %s30
      %p32 = scmp.eq.s32.totalorder %s31, 0
      %s34 = sadd.s32 %s33, 1
      %s35 = scalar_select %p32, %s33, %s34
      %p38 = pneg %p32
      %p39 = scmp.eq.s32.totalorder %s23, 1
      %p40 = por %p38, %p39
      %p41 = scmp.ne.s32.totalorder %s33, %s36
      %p42 = scmp.eq.s32.totalorder %s23, 0
      %p43 = por %p41, %p42
      %p44 = scmp.ne.s32.totalorder %s33, %s36
      %p45 = scmp.eq.s32.totalorder %s28, 1
      %p46 = por %p44, %p45
      %p47 = scmp.ne.s32.totalorder %s36, %s37
      %p48 = scmp.eq.s32.totalorder %s28, 0
      %p49 = por %p47, %p48
      %p50 = scmp.ne.s32.totalorder %s36, %s37
      %p51 = scmp.eq.s32.totalorder %s29, 1
      %p52 = por %p50, %p51
      %p54 = scmp.ne.s32.totalorder %s37, %s53
      %p55 = scmp.eq.s32.totalorder %s29, 0
      %p56 = por %p54, %p55
      %s58 = sadd.s32 %s57, 1
      %p61 = scmp.eq.s32.totalorder %s23, 1
      %p62 = scmp.ne.s32.totalorder %s57, %s59
      %p63 = scmp.eq.s32.totalorder %s23, 0
      %p64 = por %p62, %p63
      %p65 = scmp.ne.s32.totalorder %s57, %s59
      %p66 = scmp.eq.s32.totalorder %s28, 1
      %p67 = por %p65, %p66
      %p68 = scmp.ne.s32.totalorder %s59, %s60
      %p69 = scmp.eq.s32.totalorder %s28, 0
      %p70 = por %p68, %p69
      %p71 = scmp.ne.s32.totalorder %s59, %s60
      %p72 = scmp.eq.s32.totalorder %s29, 1
      %p73 = por %p71, %p72
      %p75 = scmp.ne.s32.totalorder %s60, %s74
      %p76 = scmp.eq.s32.totalorder %s29, 0
      %p77 = por %p75, %p76
      %s79 = sadd.s32 %s78, 1
      %p82 = scmp.eq.s32.totalorder %s23, 1
      %p83 = scmp.ne.s32.totalorder %s78, %s80
      %p84 = scmp.eq.s32.totalorder %s23, 0
      %p85 = por %p83, %p84
      %p86 = scmp.ne.s32.totalorder %s78, %s80
      %p87 = scmp.eq.s32.totalorder %s28, 1
      %p88 = por %p86, %p87
      %p89 = scmp.ne.s32.totalorder %s80, %s81
      %p90 = scmp.eq.s32.totalorder %s28, 0
      %p91 = por %p89, %p90
      %p92 = scmp.ne.s32.totalorder %s80, %s81
      %p93 = scmp.eq.s32.totalorder %s29, 1
      %p94 = por %p92, %p93
      %p96 = scmp.ne.s32.totalorder %s81, %s95
      %p97 = scmp.eq.s32.totalorder %s29, 0
      %p98 = por %p96, %p97
      %s100 = sadd.s32 %s99, 1
      %p103 = scmp.eq.s32.totalorder %s23, 1
      %p104 = scmp.ne.s32.totalorder %s99, %s101
      %p105 = scmp.eq.s32.totalorder %s23, 0
      %p106 = por %p104, %p105
      %p107 = scmp.ne.s32.totalorder %s99, %s101
      %p108 = scmp.eq.s32.totalorder %s28, 1
      %p109 = por %p107, %p108
      %p110 = scmp.ne.s32.totalorder %s101, %s102
      %p111 = scmp.eq.s32.totalorder %s28, 0
      %p112 = por %p110, %p111
      %p113 = scmp.ne.s32.totalorder %s101, %s102
      %p114 = scmp.eq.s32.totalorder %s29, 1
      %p115 = por %p113, %p114
      %p117 = scmp.ne.s32.totalorder %s102, %s116
      %p118 = scmp.eq.s32.totalorder %s29, 0
      %p119 = por %p117, %p118
      %s121 = sadd.s32 %s120, 1
      %p124 = scmp.eq.s32.totalorder %s23, 1
      %p125 = scmp.ne.s32.totalorder %s120, %s122
      %p126 = scmp.eq.s32.totalorder %s23, 0
      %p127 = por %p125, %p126
      %p128 = scmp.ne.s32.totalorder %s120, %s122
      %p129 = scmp.eq.s32.totalorder %s28, 1
      %p130 = por %p128, %p129
      %p131 = scmp.ne.s32.totalorder %s122, %s123
      %p132 = scmp.eq.s32.totalorder %s28, 0
      %p133 = por %p131, %p132
      %p134 = scmp.ne.s32.totalorder %s122, %s123
      %p135 = scmp.eq.s32.totalorder %s29, 1
      %p136 = por %p134, %p135
      %p138 = scmp.ne.s32.totalorder %s123, %s137
      %p139 = scmp.eq.s32.totalorder %s29, 0
      %p140 = por %p138, %p139
      %s142 = sadd.s32 %s141, 1
      %p145 = scmp.eq.s32.totalorder %s23, 1
      %p146 = scmp.ne.s32.totalorder %s141, %s143
      %p147 = scmp.eq.s32.totalorder %s23, 0
      %p148 = por %p146, %p147
      %p149 = scmp.ne.s32.totalorder %s141, %s143
      %p150 = scmp.eq.s32.totalorder %s28, 1
      %p151 = por %p149, %p150
      %p152 = scmp.ne.s32.totalorder %s143, %s144
      %p153 = scmp.eq.s32.totalorder %s28, 0
      %p154 = por %p152, %p153
      %p155 = scmp.ne.s32.totalorder %s143, %s144
      %p156 = scmp.eq.s32.totalorder %s29, 1
      %p157 = por %p155, %p156
      %p159 = scmp.ne.s32.totalorder %s144, %s158
      %p160 = scmp.eq.s32.totalorder %s29, 0
      %p161 = por %p159, %p160
      %s163 = sadd.s32 %s162, 1
      %p166 = scmp.eq.s32.totalorder %s23, 1
      %p167 = scmp.ne.s32.totalorder %s162, %s164
      %p168 = scmp.eq.s32.totalorder %s23, 0
      %p169 = por %p167, %p168
      %p170 = scmp.ne.s32.totalorder %s162, %s164
      %p171 = scmp.eq.s32.totalorder %s28, 1
      %p172 = por %p170, %p171
      %p173 = scmp.ne.s32.totalorder %s164, %s165
      %p174 = scmp.eq.s32.totalorder %s28, 0
      %p175 = por %p173, %p174
      %p176 = scmp.ne.s32.totalorder %s164, %s165
      %p177 = scmp.eq.s32.totalorder %s29, 1
      %p178 = por %p176, %p177
      %p180 = scmp.ne.s32.totalorder %s165, %s179
      %p181 = scmp.eq.s32.totalorder %s29, 0
      %p182 = por %p180, %p181
      %s184 = sadd.s32 %s183, 1
      %p187 = scmp.eq.s32.totalorder %s23, 1
      %p188 = scmp.ne.s32.totalorder %s183, %s185
      %p189 = scmp.eq.s32.totalorder %s23, 0
      %p190 = por %p188, %p189
      %p191 = scmp.ne.s32.totalorder %s183, %s185
      %p192 = scmp.eq.s32.totalorder %s28, 1
      %p193 = por %p191, %p192
      %p194 = scmp.ne.s32.totalorder %s185, %s186
      %p195 = scmp.eq.s32.totalorder %s28, 0
      %p196 = por %p194, %p195
      %p197 = scmp.ne.s32.totalorder %s185, %s186
      %p198 = scmp.eq.s32.totalorder %s29, 1
      %p199 = por %p197, %p198
      %p201 = scmp.ne.s32.totalorder %s186, %s200
      %p202 = scmp.eq.s32.totalorder %s29, 0
      %p203 = por %p201, %p202
      %s205 = sadd.s32 %s204, 1
      %p208 = scmp.eq.s32.totalorder %s23, 1
      %p209 = scmp.ne.s32.totalorder %s204, %s206
      %p210 = scmp.eq.s32.totalorder %s23, 0
      %p211 = por %p209, %p210
      %p212 = scmp.ne.s32.totalorder %s204, %s206
      %p213 = scmp.eq.s32.totalorder %s28, 1
      %p214 = por %p212, %p213
      %p215 = scmp.ne.s32.totalorder %s206, %s207
      %p216 = scmp.eq.s32.totalorder %s28, 0
      %p217 = por %p215, %p216
      %p218 = scmp.ne.s32.totalorder %s206, %s207
      %p219 = scmp.eq.s32.totalorder %s29, 1
      %p220 = por %p218, %p219
      %p222 = scmp.ne.s32.totalorder %s207, %s221
      %p223 = scmp.eq.s32.totalorder %s29, 0
      %p224 = por %p222, %p223
      %s226 = sadd.s32 %s225, 1
      %p229 = scmp.eq.s32.totalorder %s23, 1
      %p230 = scmp.ne.s32.totalorder %s225, %s227
      %p231 = scmp.eq.s32.totalorder %s23, 0
      %p232 = por %p230, %p231
      %p233 = scmp.ne.s32.totalorder %s225, %s227
      %p234 = scmp.eq.s32.totalorder %s28, 1
      %p235 = por %p233, %p234
      %p236 = scmp.ne.s32.totalorder %s227, %s228
      %p237 = scmp.eq.s32.totalorder %s28, 0
      %p238 = por %p236, %p237
      %p239 = scmp.ne.s32.totalorder %s227, %s228
      %p240 = scmp.eq.s32.totalorder %s29, 1
      %p241 = por %p239, %p240
      %p243 = scmp.ne.s32.totalorder %s228, %s242
      %p244 = scmp.eq.s32.totalorder %s29, 0
      %p245 = por %p243, %p244
      %s247 = sadd.s32 %s246, 1
      %p250 = scmp.eq.s32.totalorder %s23, 1
      %p251 = scmp.ne.s32.totalorder %s246, %s248
      %p252 = scmp.eq.s32.totalorder %s23, 0
      %p253 = por %p251, %p252
      %p254 = scmp.ne.s32.totalorder %s246, %s248
      %p255 = scmp.eq.s32.totalorder %s28, 1
      %p256 = por %p254, %p255
      %p257 = scmp.ne.s32.totalorder %s248, %s249
      %p258 = scmp.eq.s32.totalorder %s28, 0
      %p259 = por %p257, %p258
      %p260 = scmp.ne.s32.totalorder %s248, %s249
      %p261 = scmp.eq.s32.totalorder %s29, 1
      %p262 = por %p260, %p261
      %p264 = scmp.ne.s32.totalorder %s249, %s263
      %p265 = scmp.eq.s32.totalorder %s29, 0
      %p266 = por %p264, %p265
      %s268 = sadd.s32 %s267, 1
      %p271 = scmp.eq.s32.totalorder %s23, 1
      %p272 = scmp.ne.s32.totalorder %s267, %s269
      %p273 = scmp.eq.s32.totalorder %s23, 0
      %p274 = por %p272, %p273
      %p275 = scmp.ne.s32.totalorder %s267, %s269
      %p276 = scmp.eq.s32.totalorder %s28, 1
      %p277 = por %p275, %p276
      %p278 = scmp.ne.s32.totalorder %s269, %s270
      %p279 = scmp.eq.s32.totalorder %s28, 0
      %p280 = por %p278, %p279
      %p281 = scmp.ne.s32.totalorder %s269, %s270
      %p282 = scmp.eq.s32.totalorder %s29, 1
      %p283 = por %p281, %p282
      %p285 = scmp.ne.s32.totalorder %s270, %s284
      %p286 = scmp.eq.s32.totalorder %s29, 0
      %p287 = por %p285, %p286
      %s289 = sadd.s32 %s288, 1
      %p292 = scmp.eq.s32.totalorder %s23, 1
      %p293 = scmp.ne.s32.totalorder %s288, %s290
      %p294 = scmp.eq.s32.totalorder %s23, 0
      %p295 = por %p293, %p294
      %p296 = scmp.ne.s32.totalorder %s288, %s290
      %p297 = scmp.eq.s32.totalorder %s28, 1
      %p298 = por %p296, %p297
      %p299 = scmp.ne.s32.totalorder %s290, %s291
      %p300 = scmp.eq.s32.totalorder %s28, 0
      %p301 = por %p299, %p300
      %p302 = scmp.ne.s32.totalorder %s290, %s291
      %p303 = scmp.eq.s32.totalorder %s29, 1
      %p304 = por %p302, %p303
      %p306 = scmp.ne.s32.totalorder %s291, %s305
      %p307 = scmp.eq.s32.totalorder %s29, 0
      %p308 = por %p306, %p307
      %s310 = sadd.s32 %s309, 1
      %p313 = scmp.eq.s32.totalorder %s23, 1
      %p314 = scmp.ne.s32.totalorder %s309, %s311
      %p315 = scmp.eq.s32.totalorder %s23, 0
      %p316 = por %p314, %p315
      %p317 = scmp.ne.s32.totalorder %s309, %s311
      %p318 = scmp.eq.s32.totalorder %s28, 1
      %p319 = por %p317, %p318
      %p320 = scmp.ne.s32.totalorder %s311, %s312
      %p321 = scmp.eq.s32.totalorder %s28, 0
      %p322 = por %p320, %p321
      %p323 = scmp.ne.s32.totalorder %s311, %s312
      %p324 = scmp.eq.s32.totalorder %s29, 1
      %p325 = por %p323, %p324
      %p327 = scmp.ne.s32.totalorder %s312, %s326
      %p328 = scmp.eq.s32.totalorder %s29, 0
      %p329 = por %p327, %p328
      %s330 = ssub.s32 %s23, %s30
      %p331 = scmp.eq.s32.totalorder %s330, 0
      %s333 = sadd.s32 %s332, 1
      %s334 = scalar_select %p331, %s332, %s333
      %p337 = pneg %p331
      %p338 = scmp.eq.s32.totalorder %s23, 1
      %p339 = por %p337, %p338
      %p340 = scmp.ne.s32.totalorder %s332, %s335
      %p341 = scmp.eq.s32.totalorder %s23, 0
      %p342 = por %p340, %p341
      %p343 = scmp.ne.s32.totalorder %s332, %s335
      %p344 = scmp.eq.s32.totalorder %s28, 1
      %p345 = por %p343, %p344
      %p346 = scmp.ne.s32.totalorder %s335, %s336
      %p347 = scmp.eq.s32.totalorder %s28, 0
      %p348 = por %p346, %p347
      %p349 = scmp.ne.s32.totalorder %s335, %s336
      %p350 = scmp.eq.s32.totalorder %s29, 1
      %p351 = por %p349, %p350
      %p353 = scmp.ne.s32.totalorder %s336, %s352
      %p354 = scmp.eq.s32.totalorder %s29, 0
      %p355 = por %p353, %p354
      %p356 = scmp.le.s32.totalorder 1, %s23
      %p357 = scmp.lt.s32.totalorder %s23, 3
      %p358 = pnand %p356, %p357
      %p359 = pneg %p358
      // Predicated region
      $region9: #{_net_forward_fn.1} parent=5 // pred_check
        _
      $region10: #{_net_forward_fn.1} parent=5 // pred_check_branch
        %361 = sbr.rel (%p358) target = $region12
      $region11: #{_net_forward_fn.1} parent=5 // pred_region
        %s362 = ssub.s32 %s23, 1
        // Predicated region
        $region13: #{_net_forward_fn.1} parent=11 // pred_check
          %p363 = pneg %p70
        $region14: #{_net_forward_fn.1} parent=11 // pred_check_branch
          %365 = sbr.rel (%p363) target = $region16
        $region15: #{_net_forward_fn.1} parent=11 // pred_region
          _
        $region16: #{_net_forward_fn.1} parent=11 // pred_fallthru
          _
        // Predicated region
        $region17: #{_net_forward_fn.1} parent=11 // pred_check
          %p366 = pneg %p91
        $region18: #{_net_forward_fn.1} parent=11 // pred_check_branch
          %368 = sbr.rel (%p366) target = $region20
        $region19: #{_net_forward_fn.1} parent=11 // pred_region
          _
        $region20: #{_net_forward_fn.1} parent=11 // pred_fallthru
          _
        // Predicated region
        $region21: #{_net_forward_fn.1} parent=11 // pred_check
          %p369 = pneg %p112
        $region22: #{_net_forward_fn.1} parent=11 // pred_check_branch
          %371 = sbr.rel (%p369) target = $region24
        $region23: #{_net_forward_fn.1} parent=11 // pred_region
          _
        $region24: #{_net_forward_fn.1} parent=11 // pred_fallthru
          _
        // Predicated region
        $region25: #{_net_forward_fn.1} parent=11 // pred_check
          %p372 = pneg %p133
        $region26: #{_net_forward_fn.1} parent=11 // pred_check_branch
          %374 = sbr.rel (%p372) target = $region28
        $region27: #{_net_forward_fn.1} parent=11 // pred_region
          _
        $region28: #{_net_forward_fn.1} parent=11 // pred_fallthru
          _
        // Predicated region
        $region29: #{_net_forward_fn.1} parent=11 // pred_check
          %p375 = pneg %p154
        $region30: #{_net_forward_fn.1} parent=11 // pred_check_branch
          %377 = sbr.rel (%p375) target = $region32
        $region31: #{_net_forward_fn.1} parent=11 // pred_region
          _
        $region32: #{_net_forward_fn.1} parent=11 // pred_fallthru
          _
        // Predicated region
        $region33: #{_net_forward_fn.1} parent=11 // pred_check
          %p378 = pneg %p175
        $region34: #{_net_forward_fn.1} parent=11 // pred_check_branch
          %380 = sbr.rel (%p378) target = $region36
        $region35: #{_net_forward_fn.1} parent=11 // pred_region
          _
        $region36: #{_net_forward_fn.1} parent=11 // pred_fallthru
          _
        // Predicated region
        $region37: #{_net_forward_fn.1} parent=11 // pred_check
          %p381 = pneg %p196
        $region38: #{_net_forward_fn.1} parent=11 // pred_check_branch
          %383 = sbr.rel (%p381) target = $region40
        $region39: #{_net_forward_fn.1} parent=11 // pred_region
          _
        $region40: #{_net_forward_fn.1} parent=11 // pred_fallthru
          _
        // Predicated region
        $region41: #{_net_forward_fn.1} parent=11 // pred_check
          %p384 = pneg %p217
        $region42: #{_net_forward_fn.1} parent=11 // pred_check_branch
          %386 = sbr.rel (%p384) target = $region44
        $region43: #{_net_forward_fn.1} parent=11 // pred_region
          _
        $region44: #{_net_forward_fn.1} parent=11 // pred_fallthru
          _
        // Predicated region
        $region45: #{_net_forward_fn.1} parent=11 // pred_check
          %p387 = pneg %p238
        $region46: #{_net_forward_fn.1} parent=11 // pred_check_branch
          %389 = sbr.rel (%p387) target = $region48
        $region47: #{_net_forward_fn.1} parent=11 // pred_region
          _
        $region48: #{_net_forward_fn.1} parent=11 // pred_fallthru
          _
        // Predicated region
        $region49: #{_net_forward_fn.1} parent=11 // pred_check
          %p390 = pneg %p259
        $region50: #{_net_forward_fn.1} parent=11 // pred_check_branch
          %392 = sbr.rel (%p390) target = $region52
        $region51: #{_net_forward_fn.1} parent=11 // pred_region
          _
        $region52: #{_net_forward_fn.1} parent=11 // pred_fallthru
          _
        // Predicated region
        $region53: #{_net_forward_fn.1} parent=11 // pred_check
          %p393 = pneg %p280
        $region54: #{_net_forward_fn.1} parent=11 // pred_check_branch
          %395 = sbr.rel (%p393) target = $region56
        $region55: #{_net_forward_fn.1} parent=11 // pred_region
          _
        $region56: #{_net_forward_fn.1} parent=11 // pred_fallthru
          _
        // Predicated region
        $region57: #{_net_forward_fn.1} parent=11 // pred_check
          %p396 = pneg %p301
        $region58: #{_net_forward_fn.1} parent=11 // pred_check_branch
          %398 = sbr.rel (%p396) target = $region60
        $region59: #{_net_forward_fn.1} parent=11 // pred_region
          _
        $region60: #{_net_forward_fn.1} parent=11 // pred_fallthru
          _
        // Predicated region
        $region61: #{_net_forward_fn.1} parent=11 // pred_check
          %p399 = pneg %p322
        $region62: #{_net_forward_fn.1} parent=11 // pred_check_branch
          %401 = sbr.rel (%p399) target = $region64
        $region63: #{_net_forward_fn.1} parent=11 // pred_region
          _
        $region64: #{_net_forward_fn.1} parent=11 // pred_fallthru
          _
      $region12: #{_net_forward_fn.1} parent=5 // pred_fallthru
        _
      %p402 = scmp.lt.s32.totalorder %s23, 2
      // Predicated region
      $region65: #{_net_forward_fn.1} parent=5 // pred_check
        %p403 = pneg %p402
      $region66: #{_net_forward_fn.1} parent=5 // pred_check_branch
        %405 = sbr.rel (%p403) target = $region68
      $region67: #{_net_forward_fn.1} parent=5 // pred_region
        // Predicated region
        $region69: #{_net_forward_fn.1} parent=67 // pred_check
          %p406 = pneg %p43
        $region70: #{_net_forward_fn.1} parent=67 // pred_check_branch
          %408 = sbr.rel (%p406) target = $region72
        $region71: #{_net_forward_fn.1} parent=67 // pred_region
          %p409 = scmp.lt.s32.totalorder %s23, 1
          %s410 = scalar_select %p409, %s23, 1
          %s411 = smul.addr %s410, 24
          %s412 = smul.addr %s411, 8
          %s413 = scalar_lea.vmem %s0, %s412
        $region72: #{_net_forward_fn.1} parent=67 // pred_fallthru
          _
      $region68: #{_net_forward_fn.1} parent=5 // pred_fallthru
        _
      %p414 = scmp.le.s32.totalorder 1, %s23
      %p415 = scmp.lt.s32.totalorder %s23, 3
      %p416 = pnand %p414, %p415
      %p417 = pneg %p416
      // Predicated region
      $region73: #{_net_forward_fn.1} parent=5 // pred_check
        _
      $region74: #{_net_forward_fn.1} parent=5 // pred_check_branch
        %419 = sbr.rel (%p416) target = $region76
      $region75: #{_net_forward_fn.1} parent=5 // pred_region
        %s420 = ssub.s32 %s23, 1
        %p421 = scmp.lt.s32.totalorder %s28, 1
        %s422 = scalar_select %p421, %s28, 1
        %s423 = smul.addr %s422, 24
        %s424 = smul.addr %s423, 8
        %s425 = scalar_lea.vmem %s0, %s424
        %p426 = pneg %p49
        %p427 = pneg %p46
        %p428 = pneg %p70
        %p429 = pneg %p67
        %p430 = pneg %p91
        %p431 = pneg %p88
        %p432 = pneg %p112
        %p433 = pneg %p109
        %p434 = pneg %p133
        %p435 = pneg %p130
        %p436 = pneg %p154
        %p437 = pneg %p151
        %p438 = pneg %p175
        %p439 = pneg %p172
        %p440 = pneg %p196
        %p441 = pneg %p193
        %p442 = pneg %p217
        %p443 = pneg %p214
        %p444 = pneg %p238
        %p445 = pneg %p235
        %p446 = pneg %p259
        %p447 = pneg %p256
        %p448 = pneg %p280
        %p449 = pneg %p277
        %p450 = pneg %p301
        %p451 = pneg %p298
        %p452 = pneg %p322
        %p453 = pneg %p319
        %p454 = pneg %p348
        %p455 = pneg %p345
        %s456 = sand.u32 %s335, 1
        %s457 = scalar_lea.sflag [#allocation5], %s456
        %s458 = sand.u32 %s335, 1
        %s459 = scalar_lea.vmem [#allocation4], %s458
        %p460 = scmp.lt.s32.totalorder %s28, 1
        %s461 = scalar_select %p460, %s28, 1
        %s462 = smul.addr %s461, 24
        %s463 = smul.addr %s462, 8
        %s464 = scalar_lea.vmem %s0, %s463
        %v465 = vld [vmem:[%s1] sm:$0xff]
        %v466 = vld [vmem:[%s1 + $0x8] sm:$0xff]
        %v467 = vld [vmem:[%s1 + $0x10] sm:$0xff]
        %v468 = vld [vmem:[%s1 + $0x18] sm:$0xff]
        %v469 = vld [vmem:[%s464] sm:$0xff]
        %v470 = vld [vmem:[%s464 + $0x8] sm:$0xff]
        %v471 = vld [vmem:[%s464 + $0x10] sm:$0xff]
        %v472 = vld [vmem:[%s464 + $0x18] sm:$0xff]
        %v473 = vld [vmem:[%s464 + $0x20] sm:$0xff]
        %v474 = vld [vmem:[%s464 + $0x28] sm:$0xff]
        %v475 = vld [vmem:[%s464 + $0x30] sm:$0xff]
        %v476 = vld [vmem:[%s464 + $0x38] sm:$0x7f]
        %v477 = vld [vmem:[%s464 + $0x1] sm:$0xff]
        %v478 = vld [vmem:[%s464 + $0x9] sm:$0xff]
        %v479 = vld [vmem:[%s464 + $0x11] sm:$0xff]
        %v480 = vld [vmem:[%s464 + $0x19] sm:$0xff]
        %v481 = vld [vmem:[%s464 + $0x21] sm:$0xff]
        %v482 = vld [vmem:[%s464 + $0x29] sm:$0xff]
        %v483 = vld [vmem:[%s464 + $0x31] sm:$0xff]
        %v484 = vld [vmem:[%s464 + $0x39] sm:$0x7f]
        %493 = vrot.lane.b32.xlu0 %v469, 127
        %v494 = vpop.permute.xlu0 %493
        %495 = vrot.lane.b32.xlu0 %v470, 127
        %v496 = vpop.permute.xlu0 %495
        %497 = vrot.lane.b32.xlu0 %v471, 127
        %v498 = vpop.permute.xlu0 %497
        %499 = vrot.lane.b32.xlu0 %v472, 127
        %v500 = vpop.permute.xlu0 %499
        %501 = vrot.lane.b32.xlu0 %v473, 127
        %v502 = vpop.permute.xlu0 %501
        %503 = vrot.lane.b32.xlu0 %v474, 127
        %v504 = vpop.permute.xlu0 %503
        %505 = vrot.lane.b32.xlu0 %v475, 127
        %v506 = vpop.permute.xlu0 %505
        %507 = vrot.lane.b32.xlu0 %v476, 127
        %v508 = vpop.permute.xlu0 %507
        %v517 = vmax.f32 %v469, %v494
        %v518 = vmax.f32 %v470, %v496
        %v519 = vmax.f32 %v471, %v498
        %v520 = vmax.f32 %v472, %v500
        %v521 = vmax.f32 %v473, %v502
        %v522 = vmax.f32 %v474, %v504
        %v523 = vmax.f32 %v475, %v506
        %v524 = vmax.f32 %v476, %v508
        %533 = vrot.lane.b32.xlu0 %v477, 127
        %v534 = vpop.permute.xlu0 %533
        %535 = vrot.lane.b32.xlu0 %v478, 127
        %v536 = vpop.permute.xlu0 %535
        %537 = vrot.lane.b32.xlu0 %v479, 127
        %v538 = vpop.permute.xlu0 %537
        %539 = vrot.lane.b32.xlu0 %v480, 127
        %v540 = vpop.permute.xlu0 %539
        %541 = vrot.lane.b32.xlu0 %v481, 127
        %v542 = vpop.permute.xlu0 %541
        %543 = vrot.lane.b32.xlu0 %v482, 127
        %v544 = vpop.permute.xlu0 %543
        %545 = vrot.lane.b32.xlu0 %v483, 127
        %v546 = vpop.permute.xlu0 %545
        %547 = vrot.lane.b32.xlu0 %v484, 127
        %v548 = vpop.permute.xlu0 %547
        %v557 = vmax.f32 %v477, %v534
        %v558 = vmax.f32 %v478, %v536
        %v559 = vmax.f32 %v479, %v538
        %v560 = vmax.f32 %v480, %v540
        %v561 = vmax.f32 %v481, %v542
        %v562 = vmax.f32 %v482, %v544
        %v563 = vmax.f32 %v483, %v546
        %v564 = vmax.f32 %v484, %v548
        %v565 = vmax.f32 %v517, %v557
        %v566 = vmax.f32 %v518, %v558
        %v567 = vmax.f32 %v519, %v559
        %v568 = vmax.f32 %v520, %v560
        %v569 = vmax.f32 %v521, %v561
        %v570 = vmax.f32 %v522, %v562
        %v571 = vmax.f32 %v523, %v563
        %v572 = vmax.f32 %v524, %v564
        %vm573 = vcmask 515072
        %v575 = vsel %vm573, %v465, 0
        %v578 = vsel %vm573, %v466, 0
        %v581 = vsel %vm573, %v467, 0
        %v584 = vsel %vm573, %v468, 0
        %vm586 = vcmask 1046528
        %v588 = vsel %vm586, %v572, 0
        %590 = vmatprep.subr.mxu0 0.0
        %591 = vmatpush1.msra.mxu0 %v565
        %592 = vmatprep.subr.mxu0 0.0
        %593 = vmatpush1.msra.mxu0 %v566
        %594 = vmatprep.subr.mxu0 0.0
        %595 = vmatpush1.msra.mxu0 %v567
        %596 = vmatprep.subr.mxu0 0.0
        %597 = vmatpush1.msra.mxu0 %v568
        %598 = vmatprep.subr.mxu0 0.0
        %599 = vmatpush1.msra.mxu0 %v569
        %600 = vmatprep.subr.mxu0 0.0
        %601 = vmatpush1.msra.mxu0 %v570
        %602 = vmatprep.subr.mxu0 0.0
        %603 = vmatpush1.msra.mxu0 %v571
        %604 = vmatprep.subr.mxu0 0.0
        %605 = vmatpush1.msra.mxu0 %v588
        %606 = vmatprep.subr.mxu0 0.0
        %607 = vmatpush1.msra.mxu0 0.0
        %608 = vmatprep.subr.mxu0 0.0
        %609 = vmatpush1.msra.mxu0 0.0
        %610 = vmatprep.subr.mxu0 0.0
        %611 = vmatpush1.msra.mxu0 0.0
        %612 = vmatprep.subr.mxu0 0.0
        %613 = vmatpush1.msra.mxu0 0.0
        %614 = vmatprep.subr.mxu0 0.0
        %615 = vmatpush1.msra.mxu0 0.0
        %616 = vmatprep.subr.mxu0 0.0
        %617 = vmatpush1.msra.mxu0 0.0
        %618 = vmatprep.subr.mxu0 0.0
        %619 = vmatpush1.msra.mxu0 0.0
        %620 = vmatprep.subr.mxu0 0.0
        %621 = vmatpush1.msra.mxu0 0.0
        %622 = vmatprep.subr.mxu0 0.0
        %623 = vmatpush1.msra.mxu0 0.0
        %624 = vmatprep.subr.mxu0 0.0
        %625 = vmatpush1.msra.mxu0 0.0
        %626 = vmatprep.subr.mxu0 0.0
        %627 = vmatpush1.msra.mxu0 0.0
        %628 = vmatprep.subr.mxu0 0.0
        %629 = vmatpush1.msra.mxu0 0.0
        %630 = vmatprep.subr.mxu0 0.0
        %631 = vmatpush1.msra.mxu0 0.0
        %632 = vmatprep.subr.mxu0 0.0
        %633 = vmatpush1.msra.mxu0 0.0
        %634 = vmatprep.subr.mxu0 0.0
        %635 = vmatpush1.msra.mxu0 0.0
        %636 = vmatprep.subr.mxu0 0.0
        %637 = vmatpush1.msra.mxu0 0.0
        %638 = vmatprep.subr.mxu0 0.0
        %639 = vmatpush1.msra.mxu0 0.0
        %640 = vmatprep.subr.mxu0 0.0
        %641 = vmatpush1.msra.mxu0 0.0
        %642 = vmatprep.subr.mxu0 0.0
        %643 = vmatpush1.msra.mxu0 0.0
        %644 = vmatprep.subr.mxu0 0.0
        %645 = vmatpush1.msra.mxu0 0.0
        %646 = vmatprep.subr.mxu0 0.0
        %647 = vmatpush1.msra.mxu0 0.0
        %648 = vmatprep.subr.mxu0 0.0
        %649 = vmatpush1.msra.mxu0 0.0
        %650 = vmatprep.subr.mxu0 0.0
        %651 = vmatpush1.msra.mxu0 0.0
        %652 = vmatprep.subr.mxu0 0.0
        %653 = vmatpush1.msra.mxu0 0.0
        %654 = vmatprep.mubr.f32.mxu0 0.0
        %655 = vmatmul.mubr.f32.gmra.mrb[0].mxu0 %v575
        %v656 = vpop.f32.mrb[0].mxu0
        %v657 = vadd.f32 0.0, %v656
        %v658 = vpop.f32.mrb[0].mxu0
        %659 = vmatprep.mubr.f32.mxu0 0.0
        %660 = vmatmul.mubr.f32.gmra.mrb[0].mxu0 %v578
        %v661 = vpop.f32.mrb[0].mxu0
        %v662 = vadd.f32 0.0, %v661
        %v663 = vpop.f32.mrb[0].mxu0
        %664 = vmatprep.mubr.f32.mxu0 0.0
        %665 = vmatmul.mubr.f32.gmra.mrb[0].mxu0 %v581
        %v666 = vpop.f32.mrb[0].mxu0
        %v667 = vadd.f32 0.0, %v666
        %v668 = vpop.f32.mrb[0].mxu0
        %669 = vmatprep.mubr.f32.mxu0 0.0
        %670 = vmatmul.mubr.f32.gmra.mrb[0].mxu0 %v584
        %v671 = vpop.f32.mrb[0].mxu0
        %v672 = vadd.f32 0.0, %v671
        %v673 = vpop.f32.mrb[0].mxu0
        %674 = vdwg.mxu0
        %s675 = scalar_lea.vmem %s464, 64
        %v676 = vld [vmem:[%s675] sm:$0xff]
        %v677 = vld [vmem:[%s675 + $0x8] sm:$0xff]
        %v678 = vld [vmem:[%s675 + $0x10] sm:$0xff]
        %v679 = vld [vmem:[%s675 + $0x18] sm:$0xff]
        %v680 = vld [vmem:[%s675 + $0x20] sm:$0xff]
        %v681 = vld [vmem:[%s675 + $0x28] sm:$0xff]
        %v682 = vld [vmem:[%s675 + $0x30] sm:$0xff]
        %v683 = vld [vmem:[%s675 + $0x38] sm:$0x7f]
        %v684 = vld [vmem:[%s675 + $0x1] sm:$0xff]
        %v685 = vld [vmem:[%s675 + $0x9] sm:$0xff]
        %v686 = vld [vmem:[%s675 + $0x11] sm:$0xff]
        %v687 = vld [vmem:[%s675 + $0x19] sm:$0xff]
        %v688 = vld [vmem:[%s675 + $0x21] sm:$0xff]
        %v689 = vld [vmem:[%s675 + $0x29] sm:$0xff]
        %v690 = vld [vmem:[%s675 + $0x31] sm:$0xff]
        %v691 = vld [vmem:[%s675 + $0x39] sm:$0x7f]
        %700 = vrot.lane.b32.xlu0 %v676, 127
        %v701 = vpop.permute.xlu0 %700
        %702 = vrot.lane.b32.xlu0 %v677, 127
        %v703 = vpop.permute.xlu0 %702
        %704 = vrot.lane.b32.xlu0 %v678, 127
        %v705 = vpop.permute.xlu0 %704
        %706 = vrot.lane.b32.xlu0 %v679, 127
        %v707 = vpop.permute.xlu0 %706
        %708 = vrot.lane.b32.xlu0 %v680, 127
        %v709 = vpop.permute.xlu0 %708
        %710 = vrot.lane.b32.xlu0 %v681, 127
        %v711 = vpop.permute.xlu0 %710
        %712 = vrot.lane.b32.xlu0 %v682, 127
        %v713 = vpop.permute.xlu0 %712
        %714 = vrot.lane.b32.xlu0 %v683, 127
        %v715 = vpop.permute.xlu0 %714
        %v724 = vmax.f32 %v676, %v701
        %v725 = vmax.f32 %v677, %v703
        %v726 = vmax.f32 %v678, %v705
        %v727 = vmax.f32 %v679, %v707
        %v728 = vmax.f32 %v680, %v709
        %v729 = vmax.f32 %v681, %v711
        %v730 = vmax.f32 %v682, %v713
        %v731 = vmax.f32 %v683, %v715
        %740 = vrot.lane.b32.xlu0 %v684, 127
        %v741 = vpop.permute.xlu0 %740
        %742 = vrot.lane.b32.xlu0 %v685, 127
        %v743 = vpop.permute.xlu0 %742
        %744 = vrot.lane.b32.xlu0 %v686, 127
        %v745 = vpop.permute.xlu0 %744
        %746 = vrot.lane.b32.xlu0 %v687, 127
        %v747 = vpop.permute.xlu0 %746
        %748 = vrot.lane.b32.xlu0 %v688, 127
        %v749 = vpop.permute.xlu0 %748
        %750 = vrot.lane.b32.xlu0 %v689, 127
        %v751 = vpop.permute.xlu0 %750
        %752 = vrot.lane.b32.xlu0 %v690, 127
        %v753 = vpop.permute.xlu0 %752
        %754 = vrot.lane.b32.xlu0 %v691, 127
        %v755 = vpop.permute.xlu0 %754
        %v764 = vmax.f32 %v684, %v741
        %v765 = vmax.f32 %v685, %v743
        %v766 = vmax.f32 %v686, %v745
        %v767 = vmax.f32 %v687, %v747
        %v768 = vmax.f32 %v688, %v749
        %v769 = vmax.f32 %v689, %v751
        %v770 = vmax.f32 %v690, %v753
        %v771 = vmax.f32 %v691, %v755
        %v772 = vmax.f32 %v724, %v764
        %v773 = vmax.f32 %v725, %v765
        %v774 = vmax.f32 %v726, %v766
        %v775 = vmax.f32 %v727, %v767
        %v776 = vmax.f32 %v728, %v768
        %v777 = vmax.f32 %v729, %v769
        %v778 = vmax.f32 %v730, %v770
        %v779 = vmax.f32 %v731, %v771
        %v781 = vsel %vm586, %v779, 0
        %783 = vmatprep.subr.mxu0 0.0
        %784 = vmatpush1.msra.mxu0 %v772
        %785 = vmatprep.subr.mxu0 0.0
        %786 = vmatpush1.msra.mxu0 %v773
        %787 = vmatprep.subr.mxu0 0.0
        %788 = vmatpush1.msra.mxu0 %v774
        %789 = vmatprep.subr.mxu0 0.0
        %790 = vmatpush1.msra.mxu0 %v775
        %791 = vmatprep.subr.mxu0 0.0
        %792 = vmatpush1.msra.mxu0 %v776
        %793 = vmatprep.subr.mxu0 0.0
        %794 = vmatpush1.msra.mxu0 %v777
        %795 = vmatprep.subr.mxu0 0.0
        %796 = vmatpush1.msra.mxu0 %v778
        %797 = vmatprep.subr.mxu0 0.0
        %798 = vmatpush1.msra.mxu0 %v781
        %799 = vmatprep.subr.mxu0 0.0
        %800 = vmatpush1.msra.mxu0 0.0
        %801 = vmatprep.subr.mxu0 0.0
        %802 = vmatpush1.msra.mxu0 0.0
        %803 = vmatprep.subr.mxu0 0.0
        %804 = vmatpush1.msra.mxu0 0.0
        %805 = vmatprep.subr.mxu0 0.0
        %806 = vmatpush1.msra.mxu0 0.0
        %807 = vmatprep.subr.mxu0 0.0
        %808 = vmatpush1.msra.mxu0 0.0
        %809 = vmatprep.subr.mxu0 0.0
        %810 = vmatpush1.msra.mxu0 0.0
        %811 = vmatprep.subr.mxu0 0.0
        %812 = vmatpush1.msra.mxu0 0.0
        %813 = vmatprep.subr.mxu0 0.0
        %814 = vmatpush1.msra.mxu0 0.0
        %815 = vmatprep.subr.mxu0 0.0
        %816 = vmatpush1.msra.mxu0 0.0
        %817 = vmatprep.subr.mxu0 0.0
        %818 = vmatpush1.msra.mxu0 0.0
        %819 = vmatprep.subr.mxu0 0.0
        %820 = vmatpush1.msra.mxu0 0.0
        %821 = vmatprep.subr.mxu0 0.0
        %822 = vmatpush1.msra.mxu0 0.0
        %823 = vmatprep.subr.mxu0 0.0
        %824 = vmatpush1.msra.mxu0 0.0
        %825 = vmatprep.subr.mxu0 0.0
        %826 = vmatpush1.msra.mxu0 0.0
        %827 = vmatprep.subr.mxu0 0.0
        %828 = vmatpush1.msra.mxu0 0.0
        %829 = vmatprep.subr.mxu0 0.0
        %830 = vmatpush1.msra.mxu0 0.0
        %831 = vmatprep.subr.mxu0 0.0
        %832 = vmatpush1.msra.mxu0 0.0
        %833 = vmatprep.subr.mxu0 0.0
        %834 = vmatpush1.msra.mxu0 0.0
        %835 = vmatprep.subr.mxu0 0.0
        %836 = vmatpush1.msra.mxu0 0.0
        %837 = vmatprep.subr.mxu0 0.0
        %838 = vmatpush1.msra.mxu0 0.0
        %839 = vmatprep.subr.mxu0 0.0
        %840 = vmatpush1.msra.mxu0 0.0
        %841 = vmatprep.subr.mxu0 0.0
        %842 = vmatpush1.msra.mxu0 0.0
        %843 = vmatprep.subr.mxu0 0.0
        %844 = vmatpush1.msra.mxu0 0.0
        %845 = vmatprep.subr.mxu0 0.0
        %846 = vmatpush1.msra.mxu0 0.0
        %847 = vmatprep.mubr.f32.mxu0 0.0
        %848 = vmatmul.mubr.f32.gmra.mrb[0].mxu0 %v575
        %v849 = vpop.f32.mrb[0].mxu0
        %v850 = vadd.f32 0.0, %v849
        %v851 = vpop.f32.mrb[0].mxu0
        %852 = vmatprep.mubr.f32.mxu0 0.0
        %853 = vmatmul.mubr.f32.gmra.mrb[0].mxu0 %v578
        %v854 = vpop.f32.mrb[0].mxu0
        %v855 = vadd.f32 0.0, %v854
        %v856 = vpop.f32.mrb[0].mxu0
        %857 = vmatprep.mubr.f32.mxu0 0.0
        %858 = vmatmul.mubr.f32.gmra.mrb[0].mxu0 %v581
        %v859 = vpop.f32.mrb[0].mxu0
        %v860 = vadd.f32 0.0, %v859
        %v861 = vpop.f32.mrb[0].mxu0
        %862 = vmatprep.mubr.f32.mxu0 0.0
        %863 = vmatmul.mubr.f32.gmra.mrb[0].mxu0 %v584
        %v864 = vpop.f32.mrb[0].mxu0
        %v865 = vadd.f32 0.0, %v864
        %v866 = vpop.f32.mrb[0].mxu0
        %867 = vdwg.mxu0
        %s868 = scalar_lea.vmem %s464, 128
        %v869 = vld [vmem:[%s868] sm:$0xff]
        %v870 = vld [vmem:[%s868 + $0x8] sm:$0xff]
        %v871 = vld [vmem:[%s868 + $0x10] sm:$0xff]
        %v872 = vld [vmem:[%s868 + $0x18] sm:$0xff]
        %v873 = vld [vmem:[%s868 + $0x20] sm:$0xff]
        %v874 = vld [vmem:[%s868 + $0x28] sm:$0xff]
        %v875 = vld [vmem:[%s868 + $0x30] sm:$0xff]
        %v876 = vld [vmem:[%s868 + $0x38] sm:$0x7f]
        %v877 = vld [vmem:[%s868 + $0x1] sm:$0xff]
        %v878 = vld [vmem:[%s868 + $0x9] sm:$0xff]
        %v879 = vld [vmem:[%s868 + $0x11] sm:$0xff]
        %v880 = vld [vmem:[%s868 + $0x19] sm:$0xff]
        %v881 = vld [vmem:[%s868 + $0x21] sm:$0xff]
        %v882 = vld [vmem:[%s868 + $0x29] sm:$0xff]
        %v883 = vld [vmem:[%s868 + $0x31] sm:$0xff]
        %v884 = vld [vmem:[%s868 + $0x39] sm:$0x7f]
        %893 = vrot.lane.b32.xlu0 %v869, 127
        %v894 = vpop.permute.xlu0 %893
        %895 = vrot.lane.b32.xlu0 %v870, 127
        %v896 = vpop.permute.xlu0 %895
        %897 = vrot.lane.b32.xlu0 %v871, 127
        %v898 = vpop.permute.xlu0 %897
        %899 = vrot.lane.b32.xlu0 %v872, 127
        %v900 = vpop.permute.xlu0 %899
        %901 = vrot.lane.b32.xlu0 %v873, 127
        %v902 = vpop.permute.xlu0 %901
        %903 = vrot.lane.b32.xlu0 %v874, 127
        %v904 = vpop.permute.xlu0 %903
        %905 = vrot.lane.b32.xlu0 %v875, 127
        %v906 = vpop.permute.xlu0 %905
        %907 = vrot.lane.b32.xlu0 %v876, 127
        %v908 = vpop.permute.xlu0 %907
        %v917 = vmax.f32 %v869, %v894
        %v918 = vmax.f32 %v870, %v896
        %v919 = vmax.f32 %v871, %v898
        %v920 = vmax.f32 %v872, %v900
        %v921 = vmax.f32 %v873, %v902
        %v922 = vmax.f32 %v874, %v904
        %v923 = vmax.f32 %v875, %v906
        %v924 = vmax.f32 %v876, %v908
        %933 = vrot.lane.b32.xlu0 %v877, 127
        %v934 = vpop.permute.xlu0 %933
        %935 = vrot.lane.b32.xlu0 %v878, 127
        %v936 = vpop.permute.xlu0 %935
        %937 = vrot.lane.b32.xlu0 %v879, 127
        %v938 = vpop.permute.xlu0 %937
        %939 = vrot.lane.b32.xlu0 %v880, 127
        %v940 = vpop.permute.xlu0 %939
        %941 = vrot.lane.b32.xlu0 %v881, 127
        %v942 = vpop.permute.xlu0 %941
        %943 = vrot.lane.b32.xlu0 %v882, 127
        %v944 = vpop.permute.xlu0 %943
        %945 = vrot.lane.b32.xlu0 %v883, 127
        %v946 = vpop.permute.xlu0 %945
        %947 = vrot.lane.b32.xlu0 %v884, 127
        %v948 = vpop.permute.xlu0 %947
        %v957 = vmax.f32 %v877, %v934
        %v958 = vmax.f32 %v878, %v936
        %v959 = vmax.f32 %v879, %v938
        %v960 = vmax.f32 %v880, %v940
        %v961 = vmax.f32 %v881, %v942
        %v962 = vmax.f32 %v882, %v944
        %v963 = vmax.f32 %v883, %v946
        %v964 = vmax.f32 %v884, %v948
        %v965 = vmax.f32 %v917, %v957
        %v966 = vmax.f32 %v918, %v958
        %v967 = vmax.f32 %v919, %v959
        %v968 = vmax.f32 %v920, %v960
        %v969 = vmax.f32 %v921, %v961
        %v970 = vmax.f32 %v922, %v962
        %v971 = vmax.f32 %v923, %v963
        %v972 = vmax.f32 %v924, %v964
        %v974 = vsel %vm586, %v972, 0
        %976 = vmatprep.subr.mxu0 0.0
        %977 = vmatpush1.msra.mxu0 %v965
        %978 = vmatprep.subr.mxu0 0.0
        %979 = vmatpush1.msra.mxu0 %v966
        %980 = vmatprep.subr.mxu0 0.0
        %981 = vmatpush1.msra.mxu0 %v967
        %982 = vmatprep.subr.mxu0 0.0
        %983 = vmatpush1.msra.mxu0 %v968
        %984 = vmatprep.subr.mxu0 0.0
        %985 = vmatpush1.msra.mxu0 %v969
        %986 = vmatprep.subr.mxu0 0.0
        %987 = vmatpush1.msra.mxu0 %v970
        %988 = vmatprep.subr.mxu0 0.0
        %989 = vmatpush1.msra.mxu0 %v971
        %990 = vmatprep.subr.mxu0 0.0
        %991 = vmatpush1.msra.mxu0 %v974
        %992 = vmatprep.subr.mxu0 0.0
        %993 = vmatpush1.msra.mxu0 0.0
        %994 = vmatprep.subr.mxu0 0.0
        %995 = vmatpush1.msra.mxu0 0.0
        %996 = vmatprep.subr.mxu0 0.0
        %997 = vmatpush1.msra.mxu0 0.0
        %998 = vmatprep.subr.mxu0 0.0
        %999 = vmatpush1.msra.mxu0 0.0
        %1000 = vmatprep.subr.mxu0 0.0
        %1001 = vmatpush1.msra.mxu0 0.0
        %1002 = vmatprep.subr.mxu0 0.0
        %1003 = vmatpush1.msra.mxu0 0.0
        %1004 = vmatprep.subr.mxu0 0.0
        %1005 = vmatpush1.msra.mxu0 0.0
        %1006 = vmatprep.subr.mxu0 0.0
        %1007 = vmatpush1.msra.mxu0 0.0
        %1008 = vmatprep.subr.mxu0 0.0
        %1009 = vmatpush1.msra.mxu0 0.0
        %1010 = vmatprep.subr.mxu0 0.0
        %1011 = vmatpush1.msra.mxu0 0.0
        %1012 = vmatprep.subr.mxu0 0.0
        %1013 = vmatpush1.msra.mxu0 0.0
        %1014 = vmatprep.subr.mxu0 0.0
        %1015 = vmatpush1.msra.mxu0 0.0
        %1016 = vmatprep.subr.mxu0 0.0
        %1017 = vmatpush1.msra.mxu0 0.0
        %1018 = vmatprep.subr.mxu0 0.0
        %1019 = vmatpush1.msra.mxu0 0.0
        %1020 = vmatprep.subr.mxu0 0.0
        %1021 = vmatpush1.msra.mxu0 0.0
        %1022 = vmatprep.subr.mxu0 0.0
        %1023 = vmatpush1.msra.mxu0 0.0
        %1024 = vmatprep.subr.mxu0 0.0
        %1025 = vmatpush1.msra.mxu0 0.0
        %1026 = vmatprep.subr.mxu0 0.0
        %1027 = vmatpush1.msra.mxu0 0.0
        %1028 = vmatprep.subr.mxu0 0.0
        %1029 = vmatpush1.msra.mxu0 0.0
        %1030 = vmatprep.subr.mxu0 0.0
        %1031 = vmatpush1.msra.mxu0 0.0
        %1032 = vmatprep.subr.mxu0 0.0
        %1033 = vmatpush1.msra.mxu0 0.0
        %1034 = vmatprep.subr.mxu0 0.0
        %1035 = vmatpush1.msra.mxu0 0.0
        %1036 = vmatprep.subr.mxu0 0.0
        %1037 = vmatpush1.msra.mxu0 0.0
        %1038 = vmatprep.subr.mxu0 0.0
        %1039 = vmatpush1.msra.mxu0 0.0
        %1040 = vmatprep.mubr.f32.mxu0 0.0
        %1041 = vmatmul.mubr.f32.gmra.mrb[0].mxu0 %v575
        %v1042 = vpop.f32.mrb[0].mxu0
        %v1043 = vadd.f32 0.0, %v1042
        %v1044 = vpop.f32.mrb[0].mxu0
        %1045 = vmatprep.mubr.f32.mxu0 0.0
        %1046 = vmatmul.mubr.f32.gmra.mrb[0].mxu0 %v578
        %v1047 = vpop.f32.mrb[0].mxu0
        %v1048 = vadd.f32 0.0, %v1047
        %v1049 = vpop.f32.mrb[0].mxu0
        %1050 = vmatprep.mubr.f32.mxu0 0.0
        %1051 = vmatmul.mubr.f32.gmra.mrb[0].mxu0 %v581
        %v1052 = vpop.f32.mrb[0].mxu0
        %v1053 = vadd.f32 0.0, %v1052
        %v1054 = vpop.f32.mrb[0].mxu0
        %1055 = vmatprep.mubr.f32.mxu0 0.0
        %1056 = vmatmul.mubr.f32.gmra.mrb[0].mxu0 %v584
        %v1057 = vpop.f32.mrb[0].mxu0
        %v1058 = vadd.f32 0.0, %v1057
        %v1059 = vpop.f32.mrb[0].mxu0
        %1060 = vdwg.mxu0
        %v1061 = vld [vmem:[%s2] sm:$0xff]
        %v1062 = vld [vmem:[%s2 + $0x8] sm:$0xff]
        %v1063 = vld [vmem:[%s2 + $0x10] sm:$0xff]
        %v1064 = vld [vmem:[%s2 + $0x18] sm:$0xff]
        %v1065 = vld [vmem:[%s2 + $0x20] sm:$0xff]
        %v1066 = vld [vmem:[%s2 + $0x28] sm:$0xff]
        %v1067 = vld [vmem:[%s2 + $0x30] sm:$0xff]
        %v1068 = vld [vmem:[%s2 + $0x38] sm:$0xff]
        %v1069 = vld [vmem:[%s2 + $0x40] sm:$0xff]
        %v1070 = vld [vmem:[%s2 + $0x48] sm:$0xff]
        %v1071 = vld [vmem:[%s2 + $0x50] sm:$0xff]
        %v1072 = vld [vmem:[%s2 + $0x58] sm:$0xff]
        %v1073 = vld [vmem:[%s2 + $0x60] sm:$0xff]
        %v1074 = vld [vmem:[%s2 + $0x68] sm:$0xff]
        %v1075 = vld [vmem:[%s2 + $0x70] sm:$0x7f]
        %v1076 = vld [vmem:[%s2 + $0x78] sm:$0x7f]
        %s1077 = scalar_lea.vmem %s2, 128
        %v1078 = vld [vmem:[%s1077] sm:$0xff]
        %v1079 = vld [vmem:[%s1077 + $0x8] sm:$0xff]
        %v1080 = vld [vmem:[%s1077 + $0x10] sm:$0xff]
        %v1081 = vld [vmem:[%s1077 + $0x18] sm:$0xff]
        %v1082 = vld [vmem:[%s1077 + $0x20] sm:$0xff]
        %v1083 = vld [vmem:[%s1077 + $0x28] sm:$0xff]
        %v1084 = vld [vmem:[%s1077 + $0x30] sm:$0xff]
        %v1085 = vld [vmem:[%s1077 + $0x38] sm:$0xff]
        %v1086 = vld [vmem:[%s1077 + $0x40] sm:$0xff]
        %v1087 = vld [vmem:[%s1077 + $0x48] sm:$0xff]
        %v1088 = vld [vmem:[%s1077 + $0x50] sm:$0xff]
        %v1089 = vld [vmem:[%s1077 + $0x58] sm:$0xff]
        %v1090 = vld [vmem:[%s1077 + $0x60] sm:$0xff]
        %v1091 = vld [vmem:[%s1077 + $0x68] sm:$0xff]
        %v1092 = vld [vmem:[%s1077 + $0x70] sm:$0x7f]
        %v1093 = vld [vmem:[%s1077 + $0x78] sm:$0x7f]
        %v1095 = vsel %vm573, %v850, 0
        %v1098 = vsel %vm573, %v855, 0
        %v1101 = vsel %vm573, %v860, 0
        %v1104 = vsel %vm573, %v865, 0
        %v1107 = vsel %vm586, %v1092, 0
        %v1110 = vsel %vm586, %v1093, 0
        %1112 = vmatprep.subr.mxu0 %v1079
        %1113 = vmatpush1.msra.mxu0 %v1078
        %1114 = vmatprep.subr.mxu0 %v1081
        %1115 = vmatpush1.msra.mxu0 %v1080
        %1116 = vmatprep.subr.mxu0 %v1083
        %1117 = vmatpush1.msra.mxu0 %v1082
        %1118 = vmatprep.subr.mxu0 %v1085
        %1119 = vmatpush1.msra.mxu0 %v1084
        %1120 = vmatprep.subr.mxu0 %v1087
        %1121 = vmatpush1.msra.mxu0 %v1086
        %1122 = vmatprep.subr.mxu0 %v1089
        %1123 = vmatpush1.msra.mxu0 %v1088
        %1124 = vmatprep.subr.mxu0 %v1091
        %1125 = vmatpush1.msra.mxu0 %v1090
        %1126 = vmatprep.subr.mxu0 %v1110
        %1127 = vmatpush1.msra.mxu0 %v1107
        %1128 = vmatprep.subr.mxu0 0.0
        %1129 = vmatpush1.msra.mxu0 0.0
        %1130 = vmatprep.subr.mxu0 0.0
        %1131 = vmatpush1.msra.mxu0 0.0
        %1132 = vmatprep.subr.mxu0 0.0
        %1133 = vmatpush1.msra.mxu0 0.0
        %1134 = vmatprep.subr.mxu0 0.0
        %1135 = vmatpush1.msra.mxu0 0.0
        %1136 = vmatprep.subr.mxu0 0.0
        %1137 = vmatpush1.msra.mxu0 0.0
        %1138 = vmatprep.subr.mxu0 0.0
        %1139 = vmatpush1.msra.mxu0 0.0
        %1140 = vmatprep.subr.mxu0 0.0
        %1141 = vmatpush1.msra.mxu0 0.0
        %1142 = vmatprep.subr.mxu0 0.0
        %1143 = vmatpush1.msra.mxu0 0.0
        %1144 = vmatprep.subr.mxu0 0.0
        %1145 = vmatpush1.msra.mxu0 0.0
        %1146 = vmatprep.subr.mxu0 0.0
        %1147 = vmatpush1.msra.mxu0 0.0
        %1148 = vmatprep.subr.mxu0 0.0
        %1149 = vmatpush1.msra.mxu0 0.0
        %1150 = vmatprep.subr.mxu0 0.0
        %1151 = vmatpush1.msra.mxu0 0.0
        %1152 = vmatprep.subr.mxu0 0.0
        %1153 = vmatpush1.msra.mxu0 0.0
        %1154 = vmatprep.subr.mxu0 0.0
        %1155 = vmatpush1.msra.mxu0 0.0
        %1156 = vmatprep.subr.mxu0 0.0
        %1157 = vmatpush1.msra.mxu0 0.0
        %1158 = vmatprep.subr.mxu0 0.0
        %1159 = vmatpush1.msra.mxu0 0.0
        %1160 = vmatprep.subr.mxu0 0.0
        %1161 = vmatpush1.msra.mxu0 0.0
        %1162 = vmatprep.subr.mxu0 0.0
        %1163 = vmatpush1.msra.mxu0 0.0
        %1164 = vmatprep.subr.mxu0 0.0
        %1165 = vmatpush1.msra.mxu0 0.0
        %1166 = vmatprep.subr.mxu0 0.0
        %1167 = vmatpush1.msra.mxu0 0.0
        %1168 = vmatprep.subr.mxu0 0.0
        %1169 = vmatpush1.msra.mxu0 0.0
        %1170 = vmatprep.subr.mxu0 0.0
        %1171 = vmatpush1.msra.mxu0 0.0
        %1172 = vmatprep.subr.mxu0 0.0
        %1173 = vmatpush1.msra.mxu0 0.0
        %1174 = vmatprep.subr.mxu0 0.0
        %1175 = vmatpush1.msra.mxu0 0.0
        %1176 = vmatprep.mubr.f32.mxu0 0.0
        %1177 = vmatmul.mubr.f32.gmra.mrb[0].mxu0 %v1095
        %v1178 = vpop.f32.mrb[0].mxu0
        %v1179 = vadd.f32 0.0, %v1178
        %v1180 = vpop.f32.mrb[0].mxu0
        %v1181 = vadd.f32 0.0, %v1180
        %1182 = vmatprep.mubr.f32.mxu0 0.0
        %1183 = vmatmul.mubr.f32.gmra.mrb[0].mxu0 %v1098
        %v1184 = vpop.f32.mrb[0].mxu0
        %v1185 = vadd.f32 0.0, %v1184
        %v1186 = vpop.f32.mrb[0].mxu0
        %v1187 = vadd.f32 0.0, %v1186
        %1188 = vmatprep.mubr.f32.mxu0 0.0
        %1189 = vmatmul.mubr.f32.gmra.mrb[0].mxu0 %v1101
        %v1190 = vpop.f32.mrb[0].mxu0
        %v1191 = vadd.f32 0.0, %v1190
        %v1192 = vpop.f32.mrb[0].mxu0
        %v1193 = vadd.f32 0.0, %v1192
        %1194 = vmatprep.mubr.f32.mxu0 0.0
        %1195 = vmatmul.mubr.f32.gmra.mrb[0].mxu0 %v1104
        %v1196 = vpop.f32.mrb[0].mxu0
        %v1197 = vadd.f32 0.0, %v1196
        %v1198 = vpop.f32.mrb[0].mxu0
        %v1199 = vadd.f32 0.0, %v1198
        %1200 = vdwg.mxu0
        %v1202 = vsel %vm573, %v657, 0
        %v1205 = vsel %vm573, %v662, 0
        %v1208 = vsel %vm573, %v667, 0
        %v1211 = vsel %vm573, %v672, 0
        %v1214 = vsel %vm586, %v1075, 0
        %v1217 = vsel %vm586, %v1076, 0
        %1219 = vmatprep.subr.mxu0 %v1062
        %1220 = vmatpush1.msra.mxu0 %v1061
        %1221 = vmatprep.subr.mxu0 %v1064
        %1222 = vmatpush1.msra.mxu0 %v1063
        %1223 = vmatprep.subr.mxu0 %v1066
        %1224 = vmatpush1.msra.mxu0 %v1065
        %1225 = vmatprep.subr.mxu0 %v1068
        %1226 = vmatpush1.msra.mxu0 %v1067
        %1227 = vmatprep.subr.mxu0 %v1070
        %1228 = vmatpush1.msra.mxu0 %v1069
        %1229 = vmatprep.subr.mxu0 %v1072
        %1230 = vmatpush1.msra.mxu0 %v1071
        %1231 = vmatprep.subr.mxu0 %v1074
        %1232 = vmatpush1.msra.mxu0 %v1073
        %1233 = vmatprep.subr.mxu0 %v1217
        %1234 = vmatpush1.msra.mxu0 %v1214
        %1235 = vmatprep.subr.mxu0 0.0
        %1236 = vmatpush1.msra.mxu0 0.0
        %1237 = vmatprep.subr.mxu0 0.0
        %1238 = vmatpush1.msra.mxu0 0.0
        %1239 = vmatprep.subr.mxu0 0.0
        %1240 = vmatpush1.msra.mxu0 0.0
        %1241 = vmatprep.subr.mxu0 0.0
        %1242 = vmatpush1.msra.mxu0 0.0
        %1243 = vmatprep.subr.mxu0 0.0
        %1244 = vmatpush1.msra.mxu0 0.0
        %1245 = vmatprep.subr.mxu0 0.0
        %1246 = vmatpush1.msra.mxu0 0.0
        %1247 = vmatprep.subr.mxu0 0.0
        %1248 = vmatpush1.msra.mxu0 0.0
        %1249 = vmatprep.subr.mxu0 0.0
        %1250 = vmatpush1.msra.mxu0 0.0
        %1251 = vmatprep.subr.mxu0 0.0
        %1252 = vmatpush1.msra.mxu0 0.0
        %1253 = vmatprep.subr.mxu0 0.0
        %1254 = vmatpush1.msra.mxu0 0.0
        %1255 = vmatprep.subr.mxu0 0.0
        %1256 = vmatpush1.msra.mxu0 0.0
        %1257 = vmatprep.subr.mxu0 0.0
        %1258 = vmatpush1.msra.mxu0 0.0
        %1259 = vmatprep.subr.mxu0 0.0
        %1260 = vmatpush1.msra.mxu0 0.0
        %1261 = vmatprep.subr.mxu0 0.0
        %1262 = vmatpush1.msra.mxu0 0.0
        %1263 = vmatprep.subr.mxu0 0.0
        %1264 = vmatpush1.msra.mxu0 0.0
        %1265 = vmatprep.subr.mxu0 0.0
        %1266 = vmatpush1.msra.mxu0 0.0
        %1267 = vmatprep.subr.mxu0 0.0
        %1268 = vmatpush1.msra.mxu0 0.0
        %1269 = vmatprep.subr.mxu0 0.0
        %1270 = vmatpush1.msra.mxu0 0.0
        %1271 = vmatprep.subr.mxu0 0.0
        %1272 = vmatpush1.msra.mxu0 0.0
        %1273 = vmatprep.subr.mxu0 0.0
        %1274 = vmatpush1.msra.mxu0 0.0
        %1275 = vmatprep.subr.mxu0 0.0
        %1276 = vmatpush1.msra.mxu0 0.0
        %1277 = vmatprep.subr.mxu0 0.0
        %1278 = vmatpush1.msra.mxu0 0.0
        %1279 = vmatprep.subr.mxu0 0.0
        %1280 = vmatpush1.msra.mxu0 0.0
        %1281 = vmatprep.subr.mxu0 0.0
        %1282 = vmatpush1.msra.mxu0 0.0
        %1283 = vmatprep.mubr.f32.mxu0 0.0
        %1284 = vmatmul.mubr.f32.gmra.mrb[0].mxu0 %v1202
        %v1285 = vpop.f32.mrb[0].mxu0
        %v1286 = vadd.f32 %v1179, %v1285
        %v1287 = vpop.f32.mrb[0].mxu0
        %v1288 = vadd.f32 %v1181, %v1287
        %1289 = vmatprep.mubr.f32.mxu0 0.0
        %1290 = vmatmul.mubr.f32.gmra.mrb[0].mxu0 %v1205
        %v1291 = vpop.f32.mrb[0].mxu0
        %v1292 = vadd.f32 %v1185, %v1291
        %v1293 = vpop.f32.mrb[0].mxu0
        %v1294 = vadd.f32 %v1187, %v1293
        %1295 = vmatprep.mubr.f32.mxu0 0.0
        %1296 = vmatmul.mubr.f32.gmra.mrb[0].mxu0 %v1208
        %v1297 = vpop.f32.mrb[0].mxu0
        %v1298 = vadd.f32 %v1191, %v1297
        %v1299 = vpop.f32.mrb[0].mxu0
        %v1300 = vadd.f32 %v1193, %v1299
        %1301 = vmatprep.mubr.f32.mxu0 0.0
        %1302 = vmatmul.mubr.f32.gmra.mrb[0].mxu0 %v1211
        %v1303 = vpop.f32.mrb[0].mxu0
        %v1304 = vadd.f32 %v1197, %v1303
        %v1305 = vpop.f32.mrb[0].mxu0
        %v1306 = vadd.f32 %v1199, %v1305
        %1307 = vdwg.mxu0
        %s1308 = scalar_lea.vmem %s2, 256
        %v1309 = vld [vmem:[%s1308] sm:$0xff]
        %v1310 = vld [vmem:[%s1308 + $0x8] sm:$0xff]
        %v1311 = vld [vmem:[%s1308 + $0x10] sm:$0xff]
        %v1312 = vld [vmem:[%s1308 + $0x18] sm:$0xff]
        %v1313 = vld [vmem:[%s1308 + $0x20] sm:$0xff]
        %v1314 = vld [vmem:[%s1308 + $0x28] sm:$0xff]
        %v1315 = vld [vmem:[%s1308 + $0x30] sm:$0xff]
        %v1316 = vld [vmem:[%s1308 + $0x38] sm:$0xff]
        %v1317 = vld [vmem:[%s1308 + $0x40] sm:$0xff]
        %v1318 = vld [vmem:[%s1308 + $0x48] sm:$0xff]
        %v1319 = vld [vmem:[%s1308 + $0x50] sm:$0xff]
        %v1320 = vld [vmem:[%s1308 + $0x58] sm:$0xff]
        %v1321 = vld [vmem:[%s1308 + $0x60] sm:$0xff]
        %v1322 = vld [vmem:[%s1308 + $0x68] sm:$0xff]
        %v1323 = vld [vmem:[%s1308 + $0x70] sm:$0x7f]
        %v1324 = vld [vmem:[%s1308 + $0x78] sm:$0x7f]
        %v1326 = vsel %vm573, %v1043, 0
        %v1329 = vsel %vm573, %v1048, 0
        %v1332 = vsel %vm573, %v1053, 0
        %v1335 = vsel %vm573, %v1058, 0
        %v1338 = vsel %vm586, %v1323, 0
        %v1341 = vsel %vm586, %v1324, 0
        %1343 = vmatprep.subr.mxu0 %v1310
        %1344 = vmatpush1.msra.mxu0 %v1309
        %1345 = vmatprep.subr.mxu0 %v1312
        %1346 = vmatpush1.msra.mxu0 %v1311
        %1347 = vmatprep.subr.mxu0 %v1314
        %1348 = vmatpush1.msra.mxu0 %v1313
        %1349 = vmatprep.subr.mxu0 %v1316
        %1350 = vmatpush1.msra.mxu0 %v1315
        %1351 = vmatprep.subr.mxu0 %v1318
        %1352 = vmatpush1.msra.mxu0 %v1317
        %1353 = vmatprep.subr.mxu0 %v1320
        %1354 = vmatpush1.msra.mxu0 %v1319
        %1355 = vmatprep.subr.mxu0 %v1322
        %1356 = vmatpush1.msra.mxu0 %v1321
        %1357 = vmatprep.subr.mxu0 %v1341
        %1358 = vmatpush1.msra.mxu0 %v1338
        %1359 = vmatprep.subr.mxu0 0.0
        %1360 = vmatpush1.msra.mxu0 0.0
        %1361 = vmatprep.subr.mxu0 0.0
        %1362 = vmatpush1.msra.mxu0 0.0
        %1363 = vmatprep.subr.mxu0 0.0
        %1364 = vmatpush1.msra.mxu0 0.0
        %1365 = vmatprep.subr.mxu0 0.0
        %1366 = vmatpush1.msra.mxu0 0.0
        %1367 = vmatprep.subr.mxu0 0.0
        %1368 = vmatpush1.msra.mxu0 0.0
        %1369 = vmatprep.subr.mxu0 0.0
        %1370 = vmatpush1.msra.mxu0 0.0
        %1371 = vmatprep.subr.mxu0 0.0
        %1372 = vmatpush1.msra.mxu0 0.0
        %1373 = vmatprep.subr.mxu0 0.0
        %1374 = vmatpush1.msra.mxu0 0.0
        %1375 = vmatprep.subr.mxu0 0.0
        %1376 = vmatpush1.msra.mxu0 0.0
        %1377 = vmatprep.subr.mxu0 0.0
        %1378 = vmatpush1.msra.mxu0 0.0
        %1379 = vmatprep.subr.mxu0 0.0
        %1380 = vmatpush1.msra.mxu0 0.0
        %1381 = vmatprep.subr.mxu0 0.0
        %1382 = vmatpush1.msra.mxu0 0.0
        %1383 = vmatprep.subr.mxu0 0.0
        %1384 = vmatpush1.msra.mxu0 0.0
        %1385 = vmatprep.subr.mxu0 0.0
        %1386 = vmatpush1.msra.mxu0 0.0
        %1387 = vmatprep.subr.mxu0 0.0
        %1388 = vmatpush1.msra.mxu0 0.0
        %1389 = vmatprep.subr.mxu0 0.0
        %1390 = vmatpush1.msra.mxu0 0.0
        %1391 = vmatprep.subr.mxu0 0.0
        %1392 = vmatpush1.msra.mxu0 0.0
        %1393 = vmatprep.subr.mxu0 0.0
        %1394 = vmatpush1.msra.mxu0 0.0
        %1395 = vmatprep.subr.mxu0 0.0
        %1396 = vmatpush1.msra.mxu0 0.0
        %1397 = vmatprep.subr.mxu0 0.0
        %1398 = vmatpush1.msra.mxu0 0.0
        %1399 = vmatprep.subr.mxu0 0.0
        %1400 = vmatpush1.msra.mxu0 0.0
        %1401 = vmatprep.subr.mxu0 0.0
        %1402 = vmatpush1.msra.mxu0 0.0
        %1403 = vmatprep.subr.mxu0 0.0
        %1404 = vmatpush1.msra.mxu0 0.0
        %1405 = vmatprep.subr.mxu0 0.0
        %1406 = vmatpush1.msra.mxu0 0.0
        %1407 = vmatprep.mubr.f32.mxu0 0.0
        %1408 = vmatmul.mubr.f32.gmra.mrb[0].mxu0 %v1326
        %v1409 = vpop.f32.mrb[0].mxu0
        %v1410 = vadd.f32 0.0, %v1409
        %v1411 = vpop.f32.mrb[0].mxu0
        %v1412 = vadd.f32 0.0, %v1411
        %1413 = vmatprep.mubr.f32.mxu0 0.0
        %1414 = vmatmul.mubr.f32.gmra.mrb[0].mxu0 %v1329
        %v1415 = vpop.f32.mrb[0].mxu0
        %v1416 = vadd.f32 0.0, %v1415
        %v1417 = vpop.f32.mrb[0].mxu0
        %v1418 = vadd.f32 0.0, %v1417
        %1419 = vmatprep.mubr.f32.mxu0 0.0
        %1420 = vmatmul.mubr.f32.gmra.mrb[0].mxu0 %v1332
        %v1421 = vpop.f32.mrb[0].mxu0
        %v1422 = vadd.f32 0.0, %v1421
        %v1423 = vpop.f32.mrb[0].mxu0
        %v1424 = vadd.f32 0.0, %v1423
        %1425 = vmatprep.mubr.f32.mxu0 0.0
        %1426 = vmatmul.mubr.f32.gmra.mrb[0].mxu0 %v1335
        %v1427 = vpop.f32.mrb[0].mxu0
        %v1428 = vadd.f32 0.0, %v1427
        %v1429 = vpop.f32.mrb[0].mxu0
        %v1430 = vadd.f32 0.0, %v1429
        %1431 = vdwg.mxu0
        %v1432 = vadd.f32 %v1286, %v1410
        %v1433 = vadd.f32 %v1288, %v1412
        %v1434 = vadd.f32 %v1292, %v1416
        %v1435 = vadd.f32 %v1294, %v1418
        %v1436 = vadd.f32 %v1298, %v1422
        %v1437 = vadd.f32 %v1300, %v1424
        %v1438 = vadd.f32 %v1304, %v1428
        %v1439 = vadd.f32 %v1306, %v1430
        %s1440 = scalar_lea.vmem %s2, 384
        %v1441 = vld [vmem:[%s1440] sm:$0xff]
        %v1442 = vld [vmem:[%s1440 + $0x8] sm:$0xff]
        %v1443 = vld [vmem:[%s1440 + $0x10] sm:$0xff]
        %v1444 = vld [vmem:[%s1440 + $0x18] sm:$0xff]
        %v1445 = vld [vmem:[%s1440 + $0x20] sm:$0xff]
        %v1446 = vld [vmem:[%s1440 + $0x28] sm:$0xff]
        %v1447 = vld [vmem:[%s1440 + $0x30] sm:$0xff]
        %v1448 = vld [vmem:[%s1440 + $0x38] sm:$0xff]
        %v1449 = vld [vmem:[%s1440 + $0x40] sm:$0xff]
        %v1450 = vld [vmem:[%s1440 + $0x48] sm:$0xff]
        %v1451 = vld [vmem:[%s1440 + $0x50] sm:$0xff]
        %v1452 = vld [vmem:[%s1440 + $0x58] sm:$0xff]
        %v1453 = vld [vmem:[%s1440 + $0x60] sm:$0xff]
        %v1454 = vld [vmem:[%s1440 + $0x68] sm:$0xff]
        %v1455 = vld [vmem:[%s1440 + $0x70] sm:$0x7f]
        %v1456 = vld [vmem:[%s1440 + $0x78] sm:$0x7f]
        %v1457 = vrot.slane %v657, 1
        %v1458 = vrot.slane %v662, 1
        %v1459 = vsel %vm586, %v1457, %v1458
        %v1460 = vrot.slane %v667, 1
        %v1461 = vsel %vm586, %v1458, %v1460
        %v1462 = vrot.slane %v672, 1
        %v1463 = vsel %vm586, %v1460, %v1462
        %v1464 = vsel %vm573, %v1459, 0
        %v1466 = vsel %vm573, %v1461, 0
        %v1468 = vsel %vm573, %v1463, 0
        %v1470 = vsel %vm573, %v1462, 0
        %v1473 = vsel %vm586, %v1455, 0
        %v1476 = vsel %vm586, %v1456, 0
        %1478 = vmatprep.subr.mxu0 %v1442
        %1479 = vmatpush1.msra.mxu0 %v1441
        %1480 = vmatprep.subr.mxu0 %v1444
        %1481 = vmatpush1.msra.mxu0 %v1443
        %1482 = vmatprep.subr.mxu0 %v1446
        %1483 = vmatpush1.msra.mxu0 %v1445
        %1484 = vmatprep.subr.mxu0 %v1448
        %1485 = vmatpush1.msra.mxu0 %v1447
        %1486 = vmatprep.subr.mxu0 %v1450
        %1487 = vmatpush1.msra.mxu0 %v1449
        %1488 = vmatprep.subr.mxu0 %v1452
        %1489 = vmatpush1.msra.mxu0 %v1451
        %1490 = vmatprep.subr.mxu0 %v1454
        %1491 = vmatpush1.msra.mxu0 %v1453
        %1492 = vmatprep.subr.mxu0 %v1476
        %1493 = vmatpush1.msra.mxu0 %v1473
        %1494 = vmatprep.subr.mxu0 0.0
        %1495 = vmatpush1.msra.mxu0 0.0
        %1496 = vmatprep.subr.mxu0 0.0
        %1497 = vmatpush1.msra.mxu0 0.0
        %1498 = vmatprep.subr.mxu0 0.0
        %1499 = vmatpush1.msra.mxu0 0.0
        %1500 = vmatprep.subr.mxu0 0.0
        %1501 = vmatpush1.msra.mxu0 0.0
        %1502 = vmatprep.subr.mxu0 0.0
        %1503 = vmatpush1.msra.mxu0 0.0
        %1504 = vmatprep.subr.mxu0 0.0
        %1505 = vmatpush1.msra.mxu0 0.0
        %1506 = vmatprep.subr.mxu0 0.0
        %1507 = vmatpush1.msra.mxu0 0.0
        %1508 = vmatprep.subr.mxu0 0.0
        %1509 = vmatpush1.msra.mxu0 0.0
        %1510 = vmatprep.subr.mxu0 0.0
        %1511 = vmatpush1.msra.mxu0 0.0
        %1512 = vmatprep.subr.mxu0 0.0
        %1513 = vmatpush1.msra.mxu0 0.0
        %1514 = vmatprep.subr.mxu0 0.0
        %1515 = vmatpush1.msra.mxu0 0.0
        %1516 = vmatprep.subr.mxu0 0.0
        %1517 = vmatpush1.msra.mxu0 0.0
        %1518 = vmatprep.subr.mxu0 0.0
        %1519 = vmatpush1.msra.mxu0 0.0
        %1520 = vmatprep.subr.mxu0 0.0
        %1521 = vmatpush1.msra.mxu0 0.0
        %1522 = vmatprep.subr.mxu0 0.0
        %1523 = vmatpush1.msra.mxu0 0.0
        %1524 = vmatprep.subr.mxu0 0.0
        %1525 = vmatpush1.msra.mxu0 0.0
        %1526 = vmatprep.subr.mxu0 0.0
        %1527 = vmatpush1.msra.mxu0 0.0
        %1528 = vmatprep.subr.mxu0 0.0
        %1529 = vmatpush1.msra.mxu0 0.0
        %1530 = vmatprep.subr.mxu0 0.0
        %1531 = vmatpush1.msra.mxu0 0.0
        %1532 = vmatprep.subr.mxu0 0.0
        %1533 = vmatpush1.msra.mxu0 0.0
        %1534 = vmatprep.subr.mxu0 0.0
        %1535 = vmatpush1.msra.mxu0 0.0
        %1536 = vmatprep.subr.mxu0 0.0
        %1537 = vmatpush1.msra.mxu0 0.0
        %1538 = vmatprep.subr.mxu0 0.0
        %1539 = vmatpush1.msra.mxu0 0.0
        %1540 = vmatprep.subr.mxu0 0.0
        %1541 = vmatpush1.msra.mxu0 0.0
        %1542 = vmatprep.mubr.f32.mxu0 0.0
        %1543 = vmatmul.mubr.f32.gmra.mrb[0].mxu0 %v1464
        %v1544 = vpop.f32.mrb[0].mxu0
        %v1545 = vadd.f32 0.0, %v1544
        %v1546 = vpop.f32.mrb[0].mxu0
        %v1547 = vadd.f32 0.0, %v1546
        %1548 = vmatprep.mubr.f32.mxu0 0.0
        %1549 = vmatmul.mubr.f32.gmra.mrb[0].mxu0 %v1466
        %v1550 = vpop.f32.mrb[0].mxu0
        %v1551 = vadd.f32 0.0, %v1550
        %v1552 = vpop.f32.mrb[0].mxu0
        %v1553 = vadd.f32 0.0, %v1552
        %1554 = vmatprep.mubr.f32.mxu0 0.0
        %1555 = vmatmul.mubr.f32.gmra.mrb[0].mxu0 %v1468
        %v1556 = vpop.f32.mrb[0].mxu0
        %v1557 = vadd.f32 0.0, %v1556
        %v1558 = vpop.f32.mrb[0].mxu0
        %v1559 = vadd.f32 0.0, %v1558
        %1560 = vmatprep.mubr.f32.mxu0 0.0
        %1561 = vmatmul.mubr.f32.gmra.mrb[0].mxu0 %v1470
        %v1562 = vpop.f32.mrb[0].mxu0
        %v1563 = vadd.f32 0.0, %v1562
        %v1564 = vpop.f32.mrb[0].mxu0
        %v1565 = vadd.f32 0.0, %v1564
        %1566 = vdwg.mxu0
        %v1567 = vadd.f32 %v1432, %v1545
        %v1568 = vadd.f32 %v1433, %v1547
        %v1569 = vadd.f32 %v1434, %v1551
        %v1570 = vadd.f32 %v1435, %v1553
        %v1571 = vadd.f32 %v1436, %v1557
        %v1572 = vadd.f32 %v1437, %v1559
        %v1573 = vadd.f32 %v1438, %v1563
        %v1574 = vadd.f32 %v1439, %v1565
        %s1575 = scalar_lea.vmem %s2, 512
        %v1576 = vld [vmem:[%s1575] sm:$0xff]
        %v1577 = vld [vmem:[%s1575 + $0x8] sm:$0xff]
        %v1578 = vld [vmem:[%s1575 + $0x10] sm:$0xff]
        %v1579 = vld [vmem:[%s1575 + $0x18] sm:$0xff]
        %v1580 = vld [vmem:[%s1575 + $0x20] sm:$0xff]
        %v1581 = vld [vmem:[%s1575 + $0x28] sm:$0xff]
        %v1582 = vld [vmem:[%s1575 + $0x30] sm:$0xff]
        %v1583 = vld [vmem:[%s1575 + $0x38] sm:$0xff]
        %v1584 = vld [vmem:[%s1575 + $0x40] sm:$0xff]
        %v1585 = vld [vmem:[%s1575 + $0x48] sm:$0xff]
        %v1586 = vld [vmem:[%s1575 + $0x50] sm:$0xff]
        %v1587 = vld [vmem:[%s1575 + $0x58] sm:$0xff]
        %v1588 = vld [vmem:[%s1575 + $0x60] sm:$0xff]
        %v1589 = vld [vmem:[%s1575 + $0x68] sm:$0xff]
        %v1590 = vld [vmem:[%s1575 + $0x70] sm:$0x7f]
        %v1591 = vld [vmem:[%s1575 + $0x78] sm:$0x7f]
        %v1592 = vrot.slane %v850, 1
        %v1593 = vrot.slane %v855, 1
        %v1594 = vsel %vm586, %v1592, %v1593
        %v1595 = vrot.slane %v860, 1
        %v1596 = vsel %vm586, %v1593, %v1595
        %v1597 = vrot.slane %v865, 1
        %v1598 = vsel %vm586, %v1595, %v1597
        %v1599 = vsel %vm573, %v1594, 0
        %v1601 = vsel %vm573, %v1596, 0
        %v1603 = vsel %vm573, %v1598, 0
        %v1605 = vsel %vm573, %v1597, 0
        %v1608 = vsel %vm586, %v1590, 0
        %v1611 = vsel %vm586, %v1591, 0
        %1613 = vmatprep.subr.mxu0 %v1577
        %1614 = vmatpush1.msra.mxu0 %v1576
        %1615 = vmatprep.subr.mxu0 %v1579
        %1616 = vmatpush1.msra.mxu0 %v1578
        %1617 = vmatprep.subr.mxu0 %v1581
        %1618 = vmatpush1.msra.mxu0 %v1580
        %1619 = vmatprep.subr.mxu0 %v1583
        %1620 = vmatpush1.msra.mxu0 %v1582
        %1621 = vmatprep.subr.mxu0 %v1585
        %1622 = vmatpush1.msra.mxu0 %v1584
        %1623 = vmatprep.subr.mxu0 %v1587
        %1624 = vmatpush1.msra.mxu0 %v1586
        %1625 = vmatprep.subr.mxu0 %v1589
        %1626 = vmatpush1.msra.mxu0 %v1588
        %1627 = vmatprep.subr.mxu0 %v1611
        %1628 = vmatpush1.msra.mxu0 %v1608
        %1629 = vmatprep.subr.mxu0 0.0
        %1630 = vmatpush1.msra.mxu0 0.0
        %1631 = vmatprep.subr.mxu0 0.0
        %1632 = vmatpush1.msra.mxu0 0.0
        %1633 = vmatprep.subr.mxu0 0.0
        %1634 = vmatpush1.msra.mxu0 0.0
        %1635 = vmatprep.subr.mxu0 0.0
        %1636 = vmatpush1.msra.mxu0 0.0
        %1637 = vmatprep.subr.mxu0 0.0
        %1638 = vmatpush1.msra.mxu0 0.0
        %1639 = vmatprep.subr.mxu0 0.0
        %1640 = vmatpush1.msra.mxu0 0.0
        %1641 = vmatprep.subr.mxu0 0.0
        %1642 = vmatpush1.msra.mxu0 0.0
        %1643 = vmatprep.subr.mxu0 0.0
        %1644 = vmatpush1.msra.mxu0 0.0
        %1645 = vmatprep.subr.mxu0 0.0
        %1646 = vmatpush1.msra.mxu0 0.0
        %1647 = vmatprep.subr.mxu0 0.0
        %1648 = vmatpush1.msra.mxu0 0.0
        %1649 = vmatprep.subr.mxu0 0.0
        %1650 = vmatpush1.msra.mxu0 0.0
        %1651 = vmatprep.subr.mxu0 0.0
        %1652 = vmatpush1.msra.mxu0 0.0
        %1653 = vmatprep.subr.mxu0 0.0
        %1654 = vmatpush1.msra.mxu0 0.0
        %1655 = vmatprep.subr.mxu0 0.0
        %1656 = vmatpush1.msra.mxu0 0.0
        %1657 = vmatprep.subr.mxu0 0.0
        %1658 = vmatpush1.msra.mxu0 0.0
        %1659 = vmatprep.subr.mxu0 0.0
        %1660 = vmatpush1.msra.mxu0 0.0
        %1661 = vmatprep.subr.mxu0 0.0
        %1662 = vmatpush1.msra.mxu0 0.0
        %1663 = vmatprep.subr.mxu0 0.0
        %1664 = vmatpush1.msra.mxu0 0.0
        %1665 = vmatprep.subr.mxu0 0.0
        %1666 = vmatpush1.msra.mxu0 0.0
        %1667 = vmatprep.subr.mxu0 0.0
        %1668 = vmatpush1.msra.mxu0 0.0
        %1669 = vmatprep.subr.mxu0 0.0
        %1670 = vmatpush1.msra.mxu0 0.0
        %1671 = vmatprep.subr.mxu0 0.0
        %1672 = vmatpush1.msra.mxu0 0.0
        %1673 = vmatprep.subr.mxu0 0.0
        %1674 = vmatpush1.msra.mxu0 0.0
        %1675 = vmatprep.subr.mxu0 0.0
        %1676 = vmatpush1.msra.mxu0 0.0
        %1677 = vmatprep.mubr.f32.mxu0 0.0
        %1678 = vmatmul.mubr.f32.gmra.mrb[0].mxu0 %v1599
        %v1679 = vpop.f32.mrb[0].mxu0
        %v1680 = vadd.f32 0.0, %v1679
        %v1681 = vpop.f32.mrb[0].mxu0
        %v1682 = vadd.f32 0.0, %v1681
        %1683 = vmatprep.mubr.f32.mxu0 0.0
        %1684 = vmatmul.mubr.f32.gmra.mrb[0].mxu0 %v1601
        %v1685 = vpop.f32.mrb[0].mxu0
        %v1686 = vadd.f32 0.0, %v1685
        %v1687 = vpop.f32.mrb[0].mxu0
        %v1688 = vadd.f32 0.0, %v1687
        %1689 = vmatprep.mubr.f32.mxu0 0.0
        %1690 = vmatmul.mubr.f32.gmra.mrb[0].mxu0 %v1603
        %v1691 = vpop.f32.mrb[0].mxu0
        %v1692 = vadd.f32 0.0, %v1691
        %v1693 = vpop.f32.mrb[0].mxu0
        %v1694 = vadd.f32 0.0, %v1693
        %1695 = vmatprep.mubr.f32.mxu0 0.0
        %1696 = vmatmul.mubr.f32.gmra.mrb[0].mxu0 %v1605
        %v1697 = vpop.f32.mrb[0].mxu0
        %v1698 = vadd.f32 0.0, %v1697
        %v1699 = vpop.f32.mrb[0].mxu0
        %v1700 = vadd.f32 0.0, %v1699
        %1701 = vdwg.mxu0
        %v1702 = vadd.f32 %v1567, %v1680
        %v1703 = vadd.f32 %v1568, %v1682
        %v1704 = vadd.f32 %v1569, %v1686
        %v1705 = vadd.f32 %v1570, %v1688
        %v1706 = vadd.f32 %v1571, %v1692
        %v1707 = vadd.f32 %v1572, %v1694
        %v1708 = vadd.f32 %v1573, %v1698
        %v1709 = vadd.f32 %v1574, %v1700
        %s1710 = scalar_lea.vmem %s2, 640
        %v1711 = vld [vmem:[%s1710] sm:$0xff]
        %v1712 = vld [vmem:[%s1710 + $0x8] sm:$0xff]
        %v1713 = vld [vmem:[%s1710 + $0x10] sm:$0xff]
        %v1714 = vld [vmem:[%s1710 + $0x18] sm:$0xff]
        %v1715 = vld [vmem:[%s1710 + $0x20] sm:$0xff]
        %v1716 = vld [vmem:[%s1710 + $0x28] sm:$0xff]
        %v1717 = vld [vmem:[%s1710 + $0x30] sm:$0xff]
        %v1718 = vld [vmem:[%s1710 + $0x38] sm:$0xff]
        %v1719 = vld [vmem:[%s1710 + $0x40] sm:$0xff]
        %v1720 = vld [vmem:[%s1710 + $0x48] sm:$0xff]
        %v1721 = vld [vmem:[%s1710 + $0x50] sm:$0xff]
        %v1722 = vld [vmem:[%s1710 + $0x58] sm:$0xff]
        %v1723 = vld [vmem:[%s1710 + $0x60] sm:$0xff]
        %v1724 = vld [vmem:[%s1710 + $0x68] sm:$0xff]
        %v1725 = vld [vmem:[%s1710 + $0x70] sm:$0x7f]
        %v1726 = vld [vmem:[%s1710 + $0x78] sm:$0x7f]
        %v1727 = vrot.slane %v1043, 1
        %v1728 = vrot.slane %v1048, 1
        %v1729 = vsel %vm586, %v1727, %v1728
        %v1730 = vrot.slane %v1053, 1
        %v1731 = vsel %vm586, %v1728, %v1730
        %v1732 = vrot.slane %v1058, 1
        %v1733 = vsel %vm586, %v1730, %v1732
        %v1734 = vsel %vm573, %v1729, 0
        %v1736 = vsel %vm573, %v1731, 0
        %v1738 = vsel %vm573, %v1733, 0
        %v1740 = vsel %vm573, %v1732, 0
        %v1743 = vsel %vm586, %v1725, 0
        %v1746 = vsel %vm586, %v1726, 0
        %1748 = vmatprep.subr.mxu0 %v1712
        %1749 = vmatpush1.msra.mxu0 %v1711
        %1750 = vmatprep.subr.mxu0 %v1714
        %1751 = vmatpush1.msra.mxu0 %v1713
        %1752 = vmatprep.subr.mxu0 %v1716
        %1753 = vmatpush1.msra.mxu0 %v1715
        %1754 = vmatprep.subr.mxu0 %v1718
        %1755 = vmatpush1.msra.mxu0 %v1717
        %1756 = vmatprep.subr.mxu0 %v1720
        %1757 = vmatpush1.msra.mxu0 %v1719
        %1758 = vmatprep.subr.mxu0 %v1722
        %1759 = vmatpush1.msra.mxu0 %v1721
        %1760 = vmatprep.subr.mxu0 %v1724
        %1761 = vmatpush1.msra.mxu0 %v1723
        %1762 = vmatprep.subr.mxu0 %v1746
        %1763 = vmatpush1.msra.mxu0 %v1743
        %1764 = vmatprep.subr.mxu0 0.0
        %1765 = vmatpush1.msra.mxu0 0.0
        %1766 = vmatprep.subr.mxu0 0.0
        %1767 = vmatpush1.msra.mxu0 0.0
        %1768 = vmatprep.subr.mxu0 0.0
        %1769 = vmatpush1.msra.mxu0 0.0
        %1770 = vmatprep.subr.mxu0 0.0
        %1771 = vmatpush1.msra.mxu0 0.0
        %1772 = vmatprep.subr.mxu0 0.0
        %1773 = vmatpush1.msra.mxu0 0.0
        %1774 = vmatprep.subr.mxu0 0.0
        %1775 = vmatpush1.msra.mxu0 0.0
        %1776 = vmatprep.subr.mxu0 0.0
        %1777 = vmatpush1.msra.mxu0 0.0
        %1778 = vmatprep.subr.mxu0 0.0
        %1779 = vmatpush1.msra.mxu0 0.0
        %1780 = vmatprep.subr.mxu0 0.0
        %1781 = vmatpush1.msra.mxu0 0.0
        %1782 = vmatprep.subr.mxu0 0.0
        %1783 = vmatpush1.msra.mxu0 0.0
        %1784 = vmatprep.subr.mxu0 0.0
        %1785 = vmatpush1.msra.mxu0 0.0
        %1786 = vmatprep.subr.mxu0 0.0
        %1787 = vmatpush1.msra.mxu0 0.0
        %1788 = vmatprep.subr.mxu0 0.0
        %1789 = vmatpush1.msra.mxu0 0.0
        %1790 = vmatprep.subr.mxu0 0.0
        %1791 = vmatpush1.msra.mxu0 0.0
        %1792 = vmatprep.subr.mxu0 0.0
        %1793 = vmatpush1.msra.mxu0 0.0
        %1794 = vmatprep.subr.mxu0 0.0
        %1795 = vmatpush1.msra.mxu0 0.0
        %1796 = vmatprep.subr.mxu0 0.0
        %1797 = vmatpush1.msra.mxu0 0.0
        %1798 = vmatprep.subr.mxu0 0.0
        %1799 = vmatpush1.msra.mxu0 0.0
        %1800 = vmatprep.subr.mxu0 0.0
        %1801 = vmatpush1.msra.mxu0 0.0
        %1802 = vmatprep.subr.mxu0 0.0
        %1803 = vmatpush1.msra.mxu0 0.0
        %1804 = vmatprep.subr.mxu0 0.0
        %1805 = vmatpush1.msra.mxu0 0.0
        %1806 = vmatprep.subr.mxu0 0.0
        %1807 = vmatpush1.msra.mxu0 0.0
        %1808 = vmatprep.subr.mxu0 0.0
        %1809 = vmatpush1.msra.mxu0 0.0
        %1810 = vmatprep.subr.mxu0 0.0
        %1811 = vmatpush1.msra.mxu0 0.0
        %1812 = vmatprep.mubr.f32.mxu0 0.0
        %1813 = vmatmul.mubr.f32.gmra.mrb[0].mxu0 %v1734
        %v1814 = vpop.f32.mrb[0].mxu0
        %v1815 = vadd.f32 0.0, %v1814
        %v1816 = vpop.f32.mrb[0].mxu0
        %v1817 = vadd.f32 0.0, %v1816
        %1818 = vmatprep.mubr.f32.mxu0 0.0
        %1819 = vmatmul.mubr.f32.gmra.mrb[0].mxu0 %v1736
        %v1820 = vpop.f32.mrb[0].mxu0
        %v1821 = vadd.f32 0.0, %v1820
        %v1822 = vpop.f32.mrb[0].mxu0
        %v1823 = vadd.f32 0.0, %v1822
        %1824 = vmatprep.mubr.f32.mxu0 0.0
        %1825 = vmatmul.mubr.f32.gmra.mrb[0].mxu0 %v1738
        %v1826 = vpop.f32.mrb[0].mxu0
        %v1827 = vadd.f32 0.0, %v1826
        %v1828 = vpop.f32.mrb[0].mxu0
        %v1829 = vadd.f32 0.0, %v1828
        %1830 = vmatprep.mubr.f32.mxu0 0.0
        %1831 = vmatmul.mubr.f32.gmra.mrb[0].mxu0 %v1740
        %v1832 = vpop.f32.mrb[0].mxu0
        %v1833 = vadd.f32 0.0, %v1832
        %v1834 = vpop.f32.mrb[0].mxu0
        %v1835 = vadd.f32 0.0, %v1834
        %1836 = vdwg.mxu0
        %v1837 = vadd.f32 %v1702, %v1815
        %v1838 = vadd.f32 %v1703, %v1817
        %v1839 = vadd.f32 %v1704, %v1821
        %v1840 = vadd.f32 %v1705, %v1823
        %v1841 = vadd.f32 %v1706, %v1827
        %v1842 = vadd.f32 %v1707, %v1829
        %v1843 = vadd.f32 %v1708, %v1833
        %v1844 = vadd.f32 %v1709, %v1835
        %s1845 = scalar_lea.vmem %s2, 768
        %v1846 = vld [vmem:[%s1845] sm:$0xff]
        %v1847 = vld [vmem:[%s1845 + $0x8] sm:$0xff]
        %v1848 = vld [vmem:[%s1845 + $0x10] sm:$0xff]
        %v1849 = vld [vmem:[%s1845 + $0x18] sm:$0xff]
        %v1850 = vld [vmem:[%s1845 + $0x20] sm:$0xff]
        %v1851 = vld [vmem:[%s1845 + $0x28] sm:$0xff]
        %v1852 = vld [vmem:[%s1845 + $0x30] sm:$0xff]
        %v1853 = vld [vmem:[%s1845 + $0x38] sm:$0xff]
        %v1854 = vld [vmem:[%s1845 + $0x40] sm:$0xff]
        %v1855 = vld [vmem:[%s1845 + $0x48] sm:$0xff]
        %v1856 = vld [vmem:[%s1845 + $0x50] sm:$0xff]
        %v1857 = vld [vmem:[%s1845 + $0x58] sm:$0xff]
        %v1858 = vld [vmem:[%s1845 + $0x60] sm:$0xff]
        %v1859 = vld [vmem:[%s1845 + $0x68] sm:$0xff]
        %v1860 = vld [vmem:[%s1845 + $0x70] sm:$0x7f]
        %v1861 = vld [vmem:[%s1845 + $0x78] sm:$0x7f]
        %vm1862 = vcmask 1045504
        %v1863 = vrot.slane %v657, 2
        %v1864 = vrot.slane %v662, 2
        %v1865 = vsel %vm1862, %v1863, %v1864
        %v1866 = vrot.slane %v667, 2
        %v1867 = vsel %vm1862, %v1864, %v1866
        %v1868 = vrot.slane %v672, 2
        %v1869 = vsel %vm1862, %v1866, %v1868
        %v1870 = vsel %vm573, %v1865, 0
        %v1872 = vsel %vm573, %v1867, 0
        %v1874 = vsel %vm573, %v1869, 0
        %v1876 = vsel %vm573, %v1868, 0
        %v1879 = vsel %vm586, %v1860, 0
        %v1882 = vsel %vm586, %v1861, 0
        %1884 = vmatprep.subr.mxu0 %v1847
        %1885 = vmatpush1.msra.mxu0 %v1846
        %1886 = vmatprep.subr.mxu0 %v1849
        %1887 = vmatpush1.msra.mxu0 %v1848
        %1888 = vmatprep.subr.mxu0 %v1851
        %1889 = vmatpush1.msra.mxu0 %v1850
        %1890 = vmatprep.subr.mxu0 %v1853
        %1891 = vmatpush1.msra.mxu0 %v1852
        %1892 = vmatprep.subr.mxu0 %v1855
        %1893 = vmatpush1.msra.mxu0 %v1854
        %1894 = vmatprep.subr.mxu0 %v1857
        %1895 = vmatpush1.msra.mxu0 %v1856
        %1896 = vmatprep.subr.mxu0 %v1859
        %1897 = vmatpush1.msra.mxu0 %v1858
        %1898 = vmatprep.subr.mxu0 %v1882
        %1899 = vmatpush1.msra.mxu0 %v1879
        %1900 = vmatprep.subr.mxu0 0.0
        %1901 = vmatpush1.msra.mxu0 0.0
        %1902 = vmatprep.subr.mxu0 0.0
        %1903 = vmatpush1.msra.mxu0 0.0
        %1904 = vmatprep.subr.mxu0 0.0
        %1905 = vmatpush1.msra.mxu0 0.0
        %1906 = vmatprep.subr.mxu0 0.0
        %1907 = vmatpush1.msra.mxu0 0.0
        %1908 = vmatprep.subr.mxu0 0.0
        %1909 = vmatpush1.msra.mxu0 0.0
        %1910 = vmatprep.subr.mxu0 0.0
        %1911 = vmatpush1.msra.mxu0 0.0
        %1912 = vmatprep.subr.mxu0 0.0
        %1913 = vmatpush1.msra.mxu0 0.0
        %1914 = vmatprep.subr.mxu0 0.0
        %1915 = vmatpush1.msra.mxu0 0.0
        %1916 = vmatprep.subr.mxu0 0.0
        %1917 = vmatpush1.msra.mxu0 0.0
        %1918 = vmatprep.subr.mxu0 0.0
        %1919 = vmatpush1.msra.mxu0 0.0
        %1920 = vmatprep.subr.mxu0 0.0
        %1921 = vmatpush1.msra.mxu0 0.0
        %1922 = vmatprep.subr.mxu0 0.0
        %1923 = vmatpush1.msra.mxu0 0.0
        %1924 = vmatprep.subr.mxu0 0.0
        %1925 = vmatpush1.msra.mxu0 0.0
        %1926 = vmatprep.subr.mxu0 0.0
        %1927 = vmatpush1.msra.mxu0 0.0
        %1928 = vmatprep.subr.mxu0 0.0
        %1929 = vmatpush1.msra.mxu0 0.0
        %1930 = vmatprep.subr.mxu0 0.0
        %1931 = vmatpush1.msra.mxu0 0.0
        %1932 = vmatprep.subr.mxu0 0.0
        %1933 = vmatpush1.msra.mxu0 0.0
        %1934 = vmatprep.subr.mxu0 0.0
        %1935 = vmatpush1.msra.mxu0 0.0
        %1936 = vmatprep.subr.mxu0 0.0
        %1937 = vmatpush1.msra.mxu0 0.0
        %1938 = vmatprep.subr.mxu0 0.0
        %1939 = vmatpush1.msra.mxu0 0.0
        %1940 = vmatprep.subr.mxu0 0.0
        %1941 = vmatpush1.msra.mxu0 0.0
        %1942 = vmatprep.subr.mxu0 0.0
        %1943 = vmatpush1.msra.mxu0 0.0
        %1944 = vmatprep.subr.mxu0 0.0
        %1945 = vmatpush1.msra.mxu0 0.0
        %1946 = vmatprep.subr.mxu0 0.0
        %1947 = vmatpush1.msra.mxu0 0.0
        %1948 = vmatprep.mubr.f32.mxu0 0.0
        %1949 = vmatmul.mubr.f32.gmra.mrb[0].mxu0 %v1870
        %v1950 = vpop.f32.mrb[0].mxu0
        %v1951 = vadd.f32 0.0, %v1950
        %v1952 = vpop.f32.mrb[0].mxu0
        %v1953 = vadd.f32 0.0, %v1952
        %1954 = vmatprep.mubr.f32.mxu0 0.0
        %1955 = vmatmul.mubr.f32.gmra.mrb[0].mxu0 %v1872
        %v1956 = vpop.f32.mrb[0].mxu0
        %v1957 = vadd.f32 0.0, %v1956
        %v1958 = vpop.f32.mrb[0].mxu0
        %v1959 = vadd.f32 0.0, %v1958
        %1960 = vmatprep.mubr.f32.mxu0 0.0
        %1961 = vmatmul.mubr.f32.gmra.mrb[0].mxu0 %v1874
        %v1962 = vpop.f32.mrb[0].mxu0
        %v1963 = vadd.f32 0.0, %v1962
        %v1964 = vpop.f32.mrb[0].mxu0
        %v1965 = vadd.f32 0.0, %v1964
        %1966 = vmatprep.mubr.f32.mxu0 0.0
        %1967 = vmatmul.mubr.f32.gmra.mrb[0].mxu0 %v1876
        %v1968 = vpop.f32.mrb[0].mxu0
        %v1969 = vadd.f32 0.0, %v1968
        %v1970 = vpop.f32.mrb[0].mxu0
        %v1971 = vadd.f32 0.0, %v1970
        %1972 = vdwg.mxu0
        %v1973 = vadd.f32 %v1837, %v1951
        %v1974 = vadd.f32 %v1838, %v1953
        %v1975 = vadd.f32 %v1839, %v1957
        %v1976 = vadd.f32 %v1840, %v1959
        %v1977 = vadd.f32 %v1841, %v1963
        %v1978 = vadd.f32 %v1842, %v1965
        %v1979 = vadd.f32 %v1843, %v1969
        %v1980 = vadd.f32 %v1844, %v1971
        %s1981 = scalar_lea.vmem %s2, 896
        %v1982 = vld [vmem:[%s1981] sm:$0xff]
        %v1983 = vld [vmem:[%s1981 + $0x8] sm:$0xff]
        %v1984 = vld [vmem:[%s1981 + $0x10] sm:$0xff]
        %v1985 = vld [vmem:[%s1981 + $0x18] sm:$0xff]
        %v1986 = vld [vmem:[%s1981 + $0x20] sm:$0xff]
        %v1987 = vld [vmem:[%s1981 + $0x28] sm:$0xff]
        %v1988 = vld [vmem:[%s1981 + $0x30] sm:$0xff]
        %v1989 = vld [vmem:[%s1981 + $0x38] sm:$0xff]
        %v1990 = vld [vmem:[%s1981 + $0x40] sm:$0xff]
        %v1991 = vld [vmem:[%s1981 + $0x48] sm:$0xff]
        %v1992 = vld [vmem:[%s1981 + $0x50] sm:$0xff]
        %v1993 = vld [vmem:[%s1981 + $0x58] sm:$0xff]
        %v1994 = vld [vmem:[%s1981 + $0x60] sm:$0xff]
        %v1995 = vld [vmem:[%s1981 + $0x68] sm:$0xff]
        %v1996 = vld [vmem:[%s1981 + $0x70] sm:$0x7f]
        %v1997 = vld [vmem:[%s1981 + $0x78] sm:$0x7f]
        %v1998 = vrot.slane %v850, 2
        %v1999 = vrot.slane %v855, 2
        %v2000 = vsel %vm1862, %v1998, %v1999
        %v2001 = vrot.slane %v860, 2
        %v2002 = vsel %vm1862, %v1999, %v2001
        %v2003 = vrot.slane %v865, 2
        %v2004 = vsel %vm1862, %v2001, %v2003
        %v2005 = vsel %vm573, %v2000, 0
        %v2007 = vsel %vm573, %v2002, 0
        %v2009 = vsel %vm573, %v2004, 0
        %v2011 = vsel %vm573, %v2003, 0
        %v2014 = vsel %vm586, %v1996, 0
        %v2017 = vsel %vm586, %v1997, 0
        %2019 = vmatprep.subr.mxu0 %v1983
        %2020 = vmatpush1.msra.mxu0 %v1982
        %2021 = vmatprep.subr.mxu0 %v1985
        %2022 = vmatpush1.msra.mxu0 %v1984
        %2023 = vmatprep.subr.mxu0 %v1987
        %2024 = vmatpush1.msra.mxu0 %v1986
        %2025 = vmatprep.subr.mxu0 %v1989
        %2026 = vmatpush1.msra.mxu0 %v1988
        %2027 = vmatprep.subr.mxu0 %v1991
        %2028 = vmatpush1.msra.mxu0 %v1990
        %2029 = vmatprep.subr.mxu0 %v1993
        %2030 = vmatpush1.msra.mxu0 %v1992
        %2031 = vmatprep.subr.mxu0 %v1995
        %2032 = vmatpush1.msra.mxu0 %v1994
        %2033 = vmatprep.subr.mxu0 %v2017
        %2034 = vmatpush1.msra.mxu0 %v2014
        %2035 = vmatprep.subr.mxu0 0.0
        %2036 = vmatpush1.msra.mxu0 0.0
        %2037 = vmatprep.subr.mxu0 0.0
        %2038 = vmatpush1.msra.mxu0 0.0
        %2039 = vmatprep.subr.mxu0 0.0
        %2040 = vmatpush1.msra.mxu0 0.0
        %2041 = vmatprep.subr.mxu0 0.0
        %2042 = vmatpush1.msra.mxu0 0.0
        %2043 = vmatprep.subr.mxu0 0.0
        %2044 = vmatpush1.msra.mxu0 0.0
        %2045 = vmatprep.subr.mxu0 0.0
        %2046 = vmatpush1.msra.mxu0 0.0
        %2047 = vmatprep.subr.mxu0 0.0
        %2048 = vmatpush1.msra.mxu0 0.0
        %2049 = vmatprep.subr.mxu0 0.0
        %2050 = vmatpush1.msra.mxu0 0.0
        %2051 = vmatprep.subr.mxu0 0.0
        %2052 = vmatpush1.msra.mxu0 0.0
        %2053 = vmatprep.subr.mxu0 0.0
        %2054 = vmatpush1.msra.mxu0 0.0
        %2055 = vmatprep.subr.mxu0 0.0
        %2056 = vmatpush1.msra.mxu0 0.0
        %2057 = vmatprep.subr.mxu0 0.0
        %2058 = vmatpush1.msra.mxu0 0.0
        %2059 = vmatprep.subr.mxu0 0.0
        %2060 = vmatpush1.msra.mxu0 0.0
        %2061 = vmatprep.subr.mxu0 0.0
        %2062 = vmatpush1.msra.mxu0 0.0
        %2063 = vmatprep.subr.mxu0 0.0
        %2064 = vmatpush1.msra.mxu0 0.0
        %2065 = vmatprep.subr.mxu0 0.0
        %2066 = vmatpush1.msra.mxu0 0.0
        %2067 = vmatprep.subr.mxu0 0.0
        %2068 = vmatpush1.msra.mxu0 0.0
        %2069 = vmatprep.subr.mxu0 0.0
        %2070 = vmatpush1.msra.mxu0 0.0
        %2071 = vmatprep.subr.mxu0 0.0
        %2072 = vmatpush1.msra.mxu0 0.0
        %2073 = vmatprep.subr.mxu0 0.0
        %2074 = vmatpush1.msra.mxu0 0.0
        %2075 = vmatprep.subr.mxu0 0.0
        %2076 = vmatpush1.msra.mxu0 0.0
        %2077 = vmatprep.subr.mxu0 0.0
        %2078 = vmatpush1.msra.mxu0 0.0
        %2079 = vmatprep.subr.mxu0 0.0
        %2080 = vmatpush1.msra.mxu0 0.0
        %2081 = vmatprep.subr.mxu0 0.0
        %2082 = vmatpush1.msra.mxu0 0.0
        %2083 = vmatprep.mubr.f32.mxu0 0.0
        %2084 = vmatmul.mubr.f32.gmra.mrb[0].mxu0 %v2005
        %v2085 = vpop.f32.mrb[0].mxu0
        %v2086 = vadd.f32 0.0, %v2085
        %v2087 = vpop.f32.mrb[0].mxu0
        %v2088 = vadd.f32 0.0, %v2087
        %2089 = vmatprep.mubr.f32.mxu0 0.0
        %2090 = vmatmul.mubr.f32.gmra.mrb[0].mxu0 %v2007
        %v2091 = vpop.f32.mrb[0].mxu0
        %v2092 = vadd.f32 0.0, %v2091
        %v2093 = vpop.f32.mrb[0].mxu0
        %v2094 = vadd.f32 0.0, %v2093
        %2095 = vmatprep.mubr.f32.mxu0 0.0
        %2096 = vmatmul.mubr.f32.gmra.mrb[0].mxu0 %v2009
        %v2097 = vpop.f32.mrb[0].mxu0
        %v2098 = vadd.f32 0.0, %v2097
        %v2099 = vpop.f32.mrb[0].mxu0
        %v2100 = vadd.f32 0.0, %v2099
        %2101 = vmatprep.mubr.f32.mxu0 0.0
        %2102 = vmatmul.mubr.f32.gmra.mrb[0].mxu0 %v2011
        %v2103 = vpop.f32.mrb[0].mxu0
        %v2104 = vadd.f32 0.0, %v2103
        %v2105 = vpop.f32.mrb[0].mxu0
        %v2106 = vadd.f32 0.0, %v2105
        %2107 = vdwg.mxu0
        %v2108 = vadd.f32 %v1973, %v2086
        %v2109 = vadd.f32 %v1974, %v2088
        %v2110 = vadd.f32 %v1975, %v2092
        %v2111 = vadd.f32 %v1976, %v2094
        %v2112 = vadd.f32 %v1977, %v2098
        %v2113 = vadd.f32 %v1978, %v2100
        %v2114 = vadd.f32 %v1979, %v2104
        %v2115 = vadd.f32 %v1980, %v2106
        %s2116 = scalar_lea.vmem %s2, 1024
        %v2117 = vld [vmem:[%s2116] sm:$0xff]
        %v2118 = vld [vmem:[%s2116 + $0x8] sm:$0xff]
        %v2119 = vld [vmem:[%s2116 + $0x10] sm:$0xff]
        %v2120 = vld [vmem:[%s2116 + $0x18] sm:$0xff]
        %v2121 = vld [vmem:[%s2116 + $0x20] sm:$0xff]
        %v2122 = vld [vmem:[%s2116 + $0x28] sm:$0xff]
        %v2123 = vld [vmem:[%s2116 + $0x30] sm:$0xff]
        %v2124 = vld [vmem:[%s2116 + $0x38] sm:$0xff]
        %v2125 = vld [vmem:[%s2116 + $0x40] sm:$0xff]
        %v2126 = vld [vmem:[%s2116 + $0x48] sm:$0xff]
        %v2127 = vld [vmem:[%s2116 + $0x50] sm:$0xff]
        %v2128 = vld [vmem:[%s2116 + $0x58] sm:$0xff]
        %v2129 = vld [vmem:[%s2116 + $0x60] sm:$0xff]
        %v2130 = vld [vmem:[%s2116 + $0x68] sm:$0xff]
        %v2131 = vld [vmem:[%s2116 + $0x70] sm:$0x7f]
        %v2132 = vld [vmem:[%s2116 + $0x78] sm:$0x7f]
        %v2133 = vrot.slane %v1043, 2
        %v2134 = vrot.slane %v1048, 2
        %v2135 = vsel %vm1862, %v2133, %v2134
        %v2136 = vrot.slane %v1053, 2
        %v2137 = vsel %vm1862, %v2134, %v2136
        %v2138 = vrot.slane %v1058, 2
        %v2139 = vsel %vm1862, %v2136, %v2138
        %v2140 = vsel %vm573, %v2135, 0
        %v2142 = vsel %vm573, %v2137, 0
        %v2144 = vsel %vm573, %v2139, 0
        %v2146 = vsel %vm573, %v2138, 0
        %v2149 = vsel %vm586, %v2131, 0
        %v2152 = vsel %vm586, %v2132, 0
        %2154 = vmatprep.subr.mxu0 %v2118
        %2155 = vmatpush1.msra.mxu0 %v2117
        %2156 = vmatprep.subr.mxu0 %v2120
        %2157 = vmatpush1.msra.mxu0 %v2119
        %2158 = vmatprep.subr.mxu0 %v2122
        %2159 = vmatpush1.msra.mxu0 %v2121
        %2160 = vmatprep.subr.mxu0 %v2124
        %2161 = vmatpush1.msra.mxu0 %v2123
        %2162 = vmatprep.subr.mxu0 %v2126
        %2163 = vmatpush1.msra.mxu0 %v2125
        %2164 = vmatprep.subr.mxu0 %v2128
        %2165 = vmatpush1.msra.mxu0 %v2127
        %2166 = vmatprep.subr.mxu0 %v2130
        %2167 = vmatpush1.msra.mxu0 %v2129
        %2168 = vmatprep.subr.mxu0 %v2152
        %2169 = vmatpush1.msra.mxu0 %v2149
        %2170 = vmatprep.subr.mxu0 0.0
        %2171 = vmatpush1.msra.mxu0 0.0
        %2172 = vmatprep.subr.mxu0 0.0
        %2173 = vmatpush1.msra.mxu0 0.0
        %2174 = vmatprep.subr.mxu0 0.0
        %2175 = vmatpush1.msra.mxu0 0.0
        %2176 = vmatprep.subr.mxu0 0.0
        %2177 = vmatpush1.msra.mxu0 0.0
        %2178 = vmatprep.subr.mxu0 0.0
        %2179 = vmatpush1.msra.mxu0 0.0
        %2180 = vmatprep.subr.mxu0 0.0
        %2181 = vmatpush1.msra.mxu0 0.0
        %2182 = vmatprep.subr.mxu0 0.0
        %2183 = vmatpush1.msra.mxu0 0.0
        %2184 = vmatprep.subr.mxu0 0.0
        %2185 = vmatpush1.msra.mxu0 0.0
        %2186 = vmatprep.subr.mxu0 0.0
        %2187 = vmatpush1.msra.mxu0 0.0
        %2188 = vmatprep.subr.mxu0 0.0
        %2189 = vmatpush1.msra.mxu0 0.0
        %2190 = vmatprep.subr.mxu0 0.0
        %2191 = vmatpush1.msra.mxu0 0.0
        %2192 = vmatprep.subr.mxu0 0.0
        %2193 = vmatpush1.msra.mxu0 0.0
        %2194 = vmatprep.subr.mxu0 0.0
        %2195 = vmatpush1.msra.mxu0 0.0
        %2196 = vmatprep.subr.mxu0 0.0
        %2197 = vmatpush1.msra.mxu0 0.0
        %2198 = vmatprep.subr.mxu0 0.0
        %2199 = vmatpush1.msra.mxu0 0.0
        %2200 = vmatprep.subr.mxu0 0.0
        %2201 = vmatpush1.msra.mxu0 0.0
        %2202 = vmatprep.subr.mxu0 0.0
        %2203 = vmatpush1.msra.mxu0 0.0
        %2204 = vmatprep.subr.mxu0 0.0
        %2205 = vmatpush1.msra.mxu0 0.0
        %2206 = vmatprep.subr.mxu0 0.0
        %2207 = vmatpush1.msra.mxu0 0.0
        %2208 = vmatprep.subr.mxu0 0.0
        %2209 = vmatpush1.msra.mxu0 0.0
        %2210 = vmatprep.subr.mxu0 0.0
        %2211 = vmatpush1.msra.mxu0 0.0
        %2212 = vmatprep.subr.mxu0 0.0
        %2213 = vmatpush1.msra.mxu0 0.0
        %2214 = vmatprep.subr.mxu0 0.0
        %2215 = vmatpush1.msra.mxu0 0.0
        %2216 = vmatprep.subr.mxu0 0.0
        %2217 = vmatpush1.msra.mxu0 0.0
        %2218 = vmatprep.mubr.f32.mxu0 0.0
        %2219 = vmatmul.mubr.f32.gmra.mrb[0].mxu0 %v2140
        %v2220 = vpop.f32.mrb[0].mxu0
        %v2221 = vadd.f32 0.0, %v2220
        %v2222 = vpop.f32.mrb[0].mxu0
        %v2223 = vadd.f32 0.0, %v2222
        %2224 = vmatprep.mubr.f32.mxu0 0.0
        %2225 = vmatmul.mubr.f32.gmra.mrb[0].mxu0 %v2142
        %v2226 = vpop.f32.mrb[0].mxu0
        %v2227 = vadd.f32 0.0, %v2226
        %v2228 = vpop.f32.mrb[0].mxu0
        %v2229 = vadd.f32 0.0, %v2228
        %2230 = vmatprep.mubr.f32.mxu0 0.0
        %2231 = vmatmul.mubr.f32.gmra.mrb[0].mxu0 %v2144
        %v2232 = vpop.f32.mrb[0].mxu0
        %v2233 = vadd.f32 0.0, %v2232
        %v2234 = vpop.f32.mrb[0].mxu0
        %v2235 = vadd.f32 0.0, %v2234
        %2236 = vmatprep.mubr.f32.mxu0 0.0
        %2237 = vmatmul.mubr.f32.gmra.mrb[0].mxu0 %v2146
        %v2238 = vpop.f32.mrb[0].mxu0
        %v2239 = vadd.f32 0.0, %v2238
        %v2240 = vpop.f32.mrb[0].mxu0
        %v2241 = vadd.f32 0.0, %v2240
        %2242 = vdwg.mxu0
        %v2243 = vadd.f32 %v2108, %v2221
        %v2244 = vadd.f32 %v2109, %v2223
        %v2245 = vadd.f32 %v2110, %v2227
        %v2246 = vadd.f32 %v2111, %v2229
        %v2247 = vadd.f32 %v2112, %v2233
        %v2248 = vadd.f32 %v2113, %v2235
        %v2249 = vadd.f32 %v2114, %v2239
        %v2250 = vadd.f32 %v2115, %v2241
        %s2251 = scalar_lea.vmem %s2, 1152
        %v2252 = vld [vmem:[%s2251] sm:$0xff]
        %v2253 = vld [vmem:[%s2251 + $0x8] sm:$0xff]
        %v2254 = vld [vmem:[%s2251 + $0x10] sm:$0xff]
        %v2255 = vld [vmem:[%s2251 + $0x18] sm:$0xff]
        %v2256 = vld [vmem:[%s2251 + $0x20] sm:$0xff]
        %v2257 = vld [vmem:[%s2251 + $0x28] sm:$0xff]
        %v2258 = vld [vmem:[%s2251 + $0x30] sm:$0xff]
        %v2259 = vld [vmem:[%s2251 + $0x38] sm:$0xff]
        %v2260 = vld [vmem:[%s2251 + $0x40] sm:$0xff]
        %v2261 = vld [vmem:[%s2251 + $0x48] sm:$0xff]
        %v2262 = vld [vmem:[%s2251 + $0x50] sm:$0xff]
        %v2263 = vld [vmem:[%s2251 + $0x58] sm:$0xff]
        %v2264 = vld [vmem:[%s2251 + $0x60] sm:$0xff]
        %v2265 = vld [vmem:[%s2251 + $0x68] sm:$0xff]
        %v2266 = vld [vmem:[%s2251 + $0x70] sm:$0x7f]
        %v2267 = vld [vmem:[%s2251 + $0x78] sm:$0x7f]
        %vm2268 = vcmask 1044480
        %v2269 = vrot.slane %v657, 3
        %v2270 = vrot.slane %v662, 3
        %v2271 = vsel %vm2268, %v2269, %v2270
        %v2272 = vrot.slane %v667, 3
        %v2273 = vsel %vm2268, %v2270, %v2272
        %v2274 = vrot.slane %v672, 3
        %v2275 = vsel %vm2268, %v2272, %v2274
        %v2276 = vsel %vm573, %v2271, 0
        %v2278 = vsel %vm573, %v2273, 0
        %v2280 = vsel %vm573, %v2275, 0
        %v2282 = vsel %vm573, %v2274, 0
        %v2285 = vsel %vm586, %v2266, 0
        %v2288 = vsel %vm586, %v2267, 0
        %2290 = vmatprep.subr.mxu0 %v2253
        %2291 = vmatpush1.msra.mxu0 %v2252
        %2292 = vmatprep.subr.mxu0 %v2255
        %2293 = vmatpush1.msra.mxu0 %v2254
        %2294 = vmatprep.subr.mxu0 %v2257
        %2295 = vmatpush1.msra.mxu0 %v2256
        %2296 = vmatprep.subr.mxu0 %v2259
        %2297 = vmatpush1.msra.mxu0 %v2258
        %2298 = vmatprep.subr.mxu0 %v2261
        %2299 = vmatpush1.msra.mxu0 %v2260
        %2300 = vmatprep.subr.mxu0 %v2263
        %2301 = vmatpush1.msra.mxu0 %v2262
        %2302 = vmatprep.subr.mxu0 %v2265
        %2303 = vmatpush1.msra.mxu0 %v2264
        %2304 = vmatprep.subr.mxu0 %v2288
        %2305 = vmatpush1.msra.mxu0 %v2285
        %2306 = vmatprep.subr.mxu0 0.0
        %2307 = vmatpush1.msra.mxu0 0.0
        %2308 = vmatprep.subr.mxu0 0.0
        %2309 = vmatpush1.msra.mxu0 0.0
        %2310 = vmatprep.subr.mxu0 0.0
        %2311 = vmatpush1.msra.mxu0 0.0
        %2312 = vmatprep.subr.mxu0 0.0
        %2313 = vmatpush1.msra.mxu0 0.0
        %2314 = vmatprep.subr.mxu0 0.0
        %2315 = vmatpush1.msra.mxu0 0.0
        %2316 = vmatprep.subr.mxu0 0.0
        %2317 = vmatpush1.msra.mxu0 0.0
        %2318 = vmatprep.subr.mxu0 0.0
        %2319 = vmatpush1.msra.mxu0 0.0
        %2320 = vmatprep.subr.mxu0 0.0
        %2321 = vmatpush1.msra.mxu0 0.0
        %2322 = vmatprep.subr.mxu0 0.0
        %2323 = vmatpush1.msra.mxu0 0.0
        %2324 = vmatprep.subr.mxu0 0.0
        %2325 = vmatpush1.msra.mxu0 0.0
        %2326 = vmatprep.subr.mxu0 0.0
        %2327 = vmatpush1.msra.mxu0 0.0
        %2328 = vmatprep.subr.mxu0 0.0
        %2329 = vmatpush1.msra.mxu0 0.0
        %2330 = vmatprep.subr.mxu0 0.0
        %2331 = vmatpush1.msra.mxu0 0.0
        %2332 = vmatprep.subr.mxu0 0.0
        %2333 = vmatpush1.msra.mxu0 0.0
        %2334 = vmatprep.subr.mxu0 0.0
        %2335 = vmatpush1.msra.mxu0 0.0
        %2336 = vmatprep.subr.mxu0 0.0
        %2337 = vmatpush1.msra.mxu0 0.0
        %2338 = vmatprep.subr.mxu0 0.0
        %2339 = vmatpush1.msra.mxu0 0.0
        %2340 = vmatprep.subr.mxu0 0.0
        %2341 = vmatpush1.msra.mxu0 0.0
        %2342 = vmatprep.subr.mxu0 0.0
        %2343 = vmatpush1.msra.mxu0 0.0
        %2344 = vmatprep.subr.mxu0 0.0
        %2345 = vmatpush1.msra.mxu0 0.0
        %2346 = vmatprep.subr.mxu0 0.0
        %2347 = vmatpush1.msra.mxu0 0.0
        %2348 = vmatprep.subr.mxu0 0.0
        %2349 = vmatpush1.msra.mxu0 0.0
        %2350 = vmatprep.subr.mxu0 0.0
        %2351 = vmatpush1.msra.mxu0 0.0
        %2352 = vmatprep.subr.mxu0 0.0
        %2353 = vmatpush1.msra.mxu0 0.0
        %2354 = vmatprep.mubr.f32.mxu0 0.0
        %2355 = vmatmul.mubr.f32.gmra.mrb[0].mxu0 %v2276
        %v2356 = vpop.f32.mrb[0].mxu0
        %v2357 = vadd.f32 0.0, %v2356
        %v2358 = vpop.f32.mrb[0].mxu0
        %v2359 = vadd.f32 0.0, %v2358
        %2360 = vmatprep.mubr.f32.mxu0 0.0
        %2361 = vmatmul.mubr.f32.gmra.mrb[0].mxu0 %v2278
        %v2362 = vpop.f32.mrb[0].mxu0
        %v2363 = vadd.f32 0.0, %v2362
        %v2364 = vpop.f32.mrb[0].mxu0
        %v2365 = vadd.f32 0.0, %v2364
        %2366 = vmatprep.mubr.f32.mxu0 0.0
        %2367 = vmatmul.mubr.f32.gmra.mrb[0].mxu0 %v2280
        %v2368 = vpop.f32.mrb[0].mxu0
        %v2369 = vadd.f32 0.0, %v2368
        %v2370 = vpop.f32.mrb[0].mxu0
        %v2371 = vadd.f32 0.0, %v2370
        %2372 = vmatprep.mubr.f32.mxu0 0.0
        %2373 = vmatmul.mubr.f32.gmra.mrb[0].mxu0 %v2282
        %v2374 = vpop.f32.mrb[0].mxu0
        %v2375 = vadd.f32 0.0, %v2374
        %v2376 = vpop.f32.mrb[0].mxu0
        %v2377 = vadd.f32 0.0, %v2376
        %2378 = vdwg.mxu0
        %v2379 = vadd.f32 %v2243, %v2357
        %v2380 = vadd.f32 %v2244, %v2359
        %v2381 = vadd.f32 %v2245, %v2363
        %v2382 = vadd.f32 %v2246, %v2365
        %v2383 = vadd.f32 %v2247, %v2369
        %v2384 = vadd.f32 %v2248, %v2371
        %v2385 = vadd.f32 %v2249, %v2375
        %v2386 = vadd.f32 %v2250, %v2377
        %s2387 = scalar_lea.vmem %s2, 1280
        %v2388 = vld [vmem:[%s2387] sm:$0xff]
        %v2389 = vld [vmem:[%s2387 + $0x8] sm:$0xff]
        %v2390 = vld [vmem:[%s2387 + $0x10] sm:$0xff]
        %v2391 = vld [vmem:[%s2387 + $0x18] sm:$0xff]
        %v2392 = vld [vmem:[%s2387 + $0x20] sm:$0xff]
        %v2393 = vld [vmem:[%s2387 + $0x28] sm:$0xff]
        %v2394 = vld [vmem:[%s2387 + $0x30] sm:$0xff]
        %v2395 = vld [vmem:[%s2387 + $0x38] sm:$0xff]
        %v2396 = vld [vmem:[%s2387 + $0x40] sm:$0xff]
        %v2397 = vld [vmem:[%s2387 + $0x48] sm:$0xff]
        %v2398 = vld [vmem:[%s2387 + $0x50] sm:$0xff]
        %v2399 = vld [vmem:[%s2387 + $0x58] sm:$0xff]
        %v2400 = vld [vmem:[%s2387 + $0x60] sm:$0xff]
        %v2401 = vld [vmem:[%s2387 + $0x68] sm:$0xff]
        %v2402 = vld [vmem:[%s2387 + $0x70] sm:$0x7f]
        %v2403 = vld [vmem:[%s2387 + $0x78] sm:$0x7f]
        %v2404 = vrot.slane %v850, 3
        %v2405 = vrot.slane %v855, 3
        %v2406 = vsel %vm2268, %v2404, %v2405
        %v2407 = vrot.slane %v860, 3
        %v2408 = vsel %vm2268, %v2405, %v2407
        %v2409 = vrot.slane %v865, 3
        %v2410 = vsel %vm2268, %v2407, %v2409
        %v2411 = vsel %vm573, %v2406, 0
        %v2413 = vsel %vm573, %v2408, 0
        %v2415 = vsel %vm573, %v2410, 0
        %v2417 = vsel %vm573, %v2409, 0
        %v2420 = vsel %vm586, %v2402, 0
        %v2423 = vsel %vm586, %v2403, 0
        %2425 = vmatprep.subr.mxu0 %v2389
        %2426 = vmatpush1.msra.mxu0 %v2388
        %2427 = vmatprep.subr.mxu0 %v2391
        %2428 = vmatpush1.msra.mxu0 %v2390
        %2429 = vmatprep.subr.mxu0 %v2393
        %2430 = vmatpush1.msra.mxu0 %v2392
        %2431 = vmatprep.subr.mxu0 %v2395
        %2432 = vmatpush1.msra.mxu0 %v2394
        %2433 = vmatprep.subr.mxu0 %v2397
        %2434 = vmatpush1.msra.mxu0 %v2396
        %2435 = vmatprep.subr.mxu0 %v2399
        %2436 = vmatpush1.msra.mxu0 %v2398
        %2437 = vmatprep.subr.mxu0 %v2401
        %2438 = vmatpush1.msra.mxu0 %v2400
        %2439 = vmatprep.subr.mxu0 %v2423
        %2440 = vmatpush1.msra.mxu0 %v2420
        %2441 = vmatprep.subr.mxu0 0.0
        %2442 = vmatpush1.msra.mxu0 0.0
        %2443 = vmatprep.subr.mxu0 0.0
        %2444 = vmatpush1.msra.mxu0 0.0
        %2445 = vmatprep.subr.mxu0 0.0
        %2446 = vmatpush1.msra.mxu0 0.0
        %2447 = vmatprep.subr.mxu0 0.0
        %2448 = vmatpush1.msra.mxu0 0.0
        %2449 = vmatprep.subr.mxu0 0.0
        %2450 = vmatpush1.msra.mxu0 0.0
        %2451 = vmatprep.subr.mxu0 0.0
        %2452 = vmatpush1.msra.mxu0 0.0
        %2453 = vmatprep.subr.mxu0 0.0
        %2454 = vmatpush1.msra.mxu0 0.0
        %2455 = vmatprep.subr.mxu0 0.0
        %2456 = vmatpush1.msra.mxu0 0.0
        %2457 = vmatprep.subr.mxu0 0.0
        %2458 = vmatpush1.msra.mxu0 0.0
        %2459 = vmatprep.subr.mxu0 0.0
        %2460 = vmatpush1.msra.mxu0 0.0
        %2461 = vmatprep.subr.mxu0 0.0
        %2462 = vmatpush1.msra.mxu0 0.0
        %2463 = vmatprep.subr.mxu0 0.0
        %2464 = vmatpush1.msra.mxu0 0.0
        %2465 = vmatprep.subr.mxu0 0.0
        %2466 = vmatpush1.msra.mxu0 0.0
        %2467 = vmatprep.subr.mxu0 0.0
        %2468 = vmatpush1.msra.mxu0 0.0
        %2469 = vmatprep.subr.mxu0 0.0
        %2470 = vmatpush1.msra.mxu0 0.0
        %2471 = vmatprep.subr.mxu0 0.0
        %2472 = vmatpush1.msra.mxu0 0.0
        %2473 = vmatprep.subr.mxu0 0.0
        %2474 = vmatpush1.msra.mxu0 0.0
        %2475 = vmatprep.subr.mxu0 0.0
        %2476 = vmatpush1.msra.mxu0 0.0
        %2477 = vmatprep.subr.mxu0 0.0
        %2478 = vmatpush1.msra.mxu0 0.0
        %2479 = vmatprep.subr.mxu0 0.0
        %2480 = vmatpush1.msra.mxu0 0.0
        %2481 = vmatprep.subr.mxu0 0.0
        %2482 = vmatpush1.msra.mxu0 0.0
        %2483 = vmatprep.subr.mxu0 0.0
        %2484 = vmatpush1.msra.mxu0 0.0
        %2485 = vmatprep.subr.mxu0 0.0
        %2486 = vmatpush1.msra.mxu0 0.0
        %2487 = vmatprep.subr.mxu0 0.0
        %2488 = vmatpush1.msra.mxu0 0.0
        %2489 = vmatprep.mubr.f32.mxu0 0.0
        %2490 = vmatmul.mubr.f32.gmra.mrb[0].mxu0 %v2411
        %v2491 = vpop.f32.mrb[0].mxu0
        %v2492 = vadd.f32 0.0, %v2491
        %v2493 = vpop.f32.mrb[0].mxu0
        %v2494 = vadd.f32 0.0, %v2493
        %2495 = vmatprep.mubr.f32.mxu0 0.0
        %2496 = vmatmul.mubr.f32.gmra.mrb[0].mxu0 %v2413
        %v2497 = vpop.f32.mrb[0].mxu0
        %v2498 = vadd.f32 0.0, %v2497
        %v2499 = vpop.f32.mrb[0].mxu0
        %v2500 = vadd.f32 0.0, %v2499
        %2501 = vmatprep.mubr.f32.mxu0 0.0
        %2502 = vmatmul.mubr.f32.gmra.mrb[0].mxu0 %v2415
        %v2503 = vpop.f32.mrb[0].mxu0
        %v2504 = vadd.f32 0.0, %v2503
        %v2505 = vpop.f32.mrb[0].mxu0
        %v2506 = vadd.f32 0.0, %v2505
        %2507 = vmatprep.mubr.f32.mxu0 0.0
        %2508 = vmatmul.mubr.f32.gmra.mrb[0].mxu0 %v2417
        %v2509 = vpop.f32.mrb[0].mxu0
        %v2510 = vadd.f32 0.0, %v2509
        %v2511 = vpop.f32.mrb[0].mxu0
        %v2512 = vadd.f32 0.0, %v2511
        %2513 = vdwg.mxu0
        %v2514 = vadd.f32 %v2379, %v2492
        %v2515 = vadd.f32 %v2380, %v2494
        %v2516 = vadd.f32 %v2381, %v2498
        %v2517 = vadd.f32 %v2382, %v2500
        %v2518 = vadd.f32 %v2383, %v2504
        %v2519 = vadd.f32 %v2384, %v2506
        %v2520 = vadd.f32 %v2385, %v2510
        %v2521 = vadd.f32 %v2386, %v2512
        %s2522 = scalar_lea.vmem %s2, 1408
        %v2523 = vld [vmem:[%s2522] sm:$0xff]
        %v2524 = vld [vmem:[%s2522 + $0x8] sm:$0xff]
        %v2525 = vld [vmem:[%s2522 + $0x10] sm:$0xff]
        %v2526 = vld [vmem:[%s2522 + $0x18] sm:$0xff]
        %v2527 = vld [vmem:[%s2522 + $0x20] sm:$0xff]
        %v2528 = vld [vmem:[%s2522 + $0x28] sm:$0xff]
        %v2529 = vld [vmem:[%s2522 + $0x30] sm:$0xff]
        %v2530 = vld [vmem:[%s2522 + $0x38] sm:$0xff]
        %v2531 = vld [vmem:[%s2522 + $0x40] sm:$0xff]
        %v2532 = vld [vmem:[%s2522 + $0x48] sm:$0xff]
        %v2533 = vld [vmem:[%s2522 + $0x50] sm:$0xff]
        %v2534 = vld [vmem:[%s2522 + $0x58] sm:$0xff]
        %v2535 = vld [vmem:[%s2522 + $0x60] sm:$0xff]
        %v2536 = vld [vmem:[%s2522 + $0x68] sm:$0xff]
        %v2537 = vld [vmem:[%s2522 + $0x70] sm:$0x7f]
        %v2538 = vld [vmem:[%s2522 + $0x78] sm:$0x7f]
        %v2539 = vrot.slane %v1043, 3
        %v2540 = vrot.slane %v1048, 3
        %v2541 = vsel %vm2268, %v2539, %v2540
        %v2542 = vrot.slane %v1053, 3
        %v2543 = vsel %vm2268, %v2540, %v2542
        %v2544 = vrot.slane %v1058, 3
        %v2545 = vsel %vm2268, %v2542, %v2544
        %v2546 = vsel %vm573, %v2541, 0
        %v2548 = vsel %vm573, %v2543, 0
        %v2550 = vsel %vm573, %v2545, 0
        %v2552 = vsel %vm573, %v2544, 0
        %v2555 = vsel %vm586, %v2537, 0
        %v2558 = vsel %vm586, %v2538, 0
        %2560 = vmatprep.subr.mxu0 %v2524
        %2561 = vmatpush1.msra.mxu0 %v2523
        %2562 = vmatprep.subr.mxu0 %v2526
        %2563 = vmatpush1.msra.mxu0 %v2525
        %2564 = vmatprep.subr.mxu0 %v2528
        %2565 = vmatpush1.msra.mxu0 %v2527
        %2566 = vmatprep.subr.mxu0 %v2530
        %2567 = vmatpush1.msra.mxu0 %v2529
        %2568 = vmatprep.subr.mxu0 %v2532
        %2569 = vmatpush1.msra.mxu0 %v2531
        %2570 = vmatprep.subr.mxu0 %v2534
        %2571 = vmatpush1.msra.mxu0 %v2533
        %2572 = vmatprep.subr.mxu0 %v2536
        %2573 = vmatpush1.msra.mxu0 %v2535
        %2574 = vmatprep.subr.mxu0 %v2558
        %2575 = vmatpush1.msra.mxu0 %v2555
        %2576 = vmatprep.subr.mxu0 0.0
        %2577 = vmatpush1.msra.mxu0 0.0
        %2578 = vmatprep.subr.mxu0 0.0
        %2579 = vmatpush1.msra.mxu0 0.0
        %2580 = vmatprep.subr.mxu0 0.0
        %2581 = vmatpush1.msra.mxu0 0.0
        %2582 = vmatprep.subr.mxu0 0.0
        %2583 = vmatpush1.msra.mxu0 0.0
        %2584 = vmatprep.subr.mxu0 0.0
        %2585 = vmatpush1.msra.mxu0 0.0
        %2586 = vmatprep.subr.mxu0 0.0
        %2587 = vmatpush1.msra.mxu0 0.0
        %2588 = vmatprep.subr.mxu0 0.0
        %2589 = vmatpush1.msra.mxu0 0.0
        %2590 = vmatprep.subr.mxu0 0.0
        %2591 = vmatpush1.msra.mxu0 0.0
        %2592 = vmatprep.subr.mxu0 0.0
        %2593 = vmatpush1.msra.mxu0 0.0
        %2594 = vmatprep.subr.mxu0 0.0
        %2595 = vmatpush1.msra.mxu0 0.0
        %2596 = vmatprep.subr.mxu0 0.0
        %2597 = vmatpush1.msra.mxu0 0.0
        %2598 = vmatprep.subr.mxu0 0.0
        %2599 = vmatpush1.msra.mxu0 0.0
        %2600 = vmatprep.subr.mxu0 0.0
        %2601 = vmatpush1.msra.mxu0 0.0
        %2602 = vmatprep.subr.mxu0 0.0
        %2603 = vmatpush1.msra.mxu0 0.0
        %2604 = vmatprep.subr.mxu0 0.0
        %2605 = vmatpush1.msra.mxu0 0.0
        %2606 = vmatprep.subr.mxu0 0.0
        %2607 = vmatpush1.msra.mxu0 0.0
        %2608 = vmatprep.subr.mxu0 0.0
        %2609 = vmatpush1.msra.mxu0 0.0
        %2610 = vmatprep.subr.mxu0 0.0
        %2611 = vmatpush1.msra.mxu0 0.0
        %2612 = vmatprep.subr.mxu0 0.0
        %2613 = vmatpush1.msra.mxu0 0.0
        %2614 = vmatprep.subr.mxu0 0.0
        %2615 = vmatpush1.msra.mxu0 0.0
        %2616 = vmatprep.subr.mxu0 0.0
        %2617 = vmatpush1.msra.mxu0 0.0
        %2618 = vmatprep.subr.mxu0 0.0
        %2619 = vmatpush1.msra.mxu0 0.0
        %2620 = vmatprep.subr.mxu0 0.0
        %2621 = vmatpush1.msra.mxu0 0.0
        %2622 = vmatprep.subr.mxu0 0.0
        %2623 = vmatpush1.msra.mxu0 0.0
        %2624 = vmatprep.mubr.f32.mxu0 0.0
        %2625 = vmatmul.mubr.f32.gmra.mrb[0].mxu0 %v2546
        %v2626 = vpop.f32.mrb[0].mxu0
        %v2627 = vadd.f32 0.0, %v2626
        %v2628 = vpop.f32.mrb[0].mxu0
        %v2629 = vadd.f32 0.0, %v2628
        %2630 = vmatprep.mubr.f32.mxu0 0.0
        %2631 = vmatmul.mubr.f32.gmra.mrb[0].mxu0 %v2548
        %v2632 = vpop.f32.mrb[0].mxu0
        %v2633 = vadd.f32 0.0, %v2632
        %v2634 = vpop.f32.mrb[0].mxu0
        %v2635 = vadd.f32 0.0, %v2634
        %2636 = vmatprep.mubr.f32.mxu0 0.0
        %2637 = vmatmul.mubr.f32.gmra.mrb[0].mxu0 %v2550
        %v2638 = vpop.f32.mrb[0].mxu0
        %v2639 = vadd.f32 0.0, %v2638
        %v2640 = vpop.f32.mrb[0].mxu0
        %v2641 = vadd.f32 0.0, %v2640
        %2642 = vmatprep.mubr.f32.mxu0 0.0
        %2643 = vmatmul.mubr.f32.gmra.mrb[0].mxu0 %v2552
        %v2644 = vpop.f32.mrb[0].mxu0
        %v2645 = vadd.f32 0.0, %v2644
        %v2646 = vpop.f32.mrb[0].mxu0
        %v2647 = vadd.f32 0.0, %v2646
        %2648 = vdwg.mxu0
        %v2649 = vadd.f32 %v2514, %v2627
        %v2650 = vadd.f32 %v2515, %v2629
        %v2651 = vadd.f32 %v2516, %v2633
        %v2652 = vadd.f32 %v2517, %v2635
        %v2653 = vadd.f32 %v2518, %v2639
        %v2654 = vadd.f32 %v2519, %v2641
        %v2655 = vadd.f32 %v2520, %v2645
        %v2656 = vadd.f32 %v2521, %v2647
        %s2657 = scalar_lea.vmem %s2, 1536
        %v2658 = vld [vmem:[%s2657] sm:$0xff]
        %v2659 = vld [vmem:[%s2657 + $0x8] sm:$0xff]
        %v2660 = vld [vmem:[%s2657 + $0x10] sm:$0xff]
        %v2661 = vld [vmem:[%s2657 + $0x18] sm:$0xff]
        %v2662 = vld [vmem:[%s2657 + $0x20] sm:$0xff]
        %v2663 = vld [vmem:[%s2657 + $0x28] sm:$0xff]
        %v2664 = vld [vmem:[%s2657 + $0x30] sm:$0xff]
        %v2665 = vld [vmem:[%s2657 + $0x38] sm:$0xff]
        %v2666 = vld [vmem:[%s2657 + $0x40] sm:$0xff]
        %v2667 = vld [vmem:[%s2657 + $0x48] sm:$0xff]
        %v2668 = vld [vmem:[%s2657 + $0x50] sm:$0xff]
        %v2669 = vld [vmem:[%s2657 + $0x58] sm:$0xff]
        %v2670 = vld [vmem:[%s2657 + $0x60] sm:$0xff]
        %v2671 = vld [vmem:[%s2657 + $0x68] sm:$0xff]
        %v2672 = vld [vmem:[%s2657 + $0x70] sm:$0x7f]
        %v2673 = vld [vmem:[%s2657 + $0x78] sm:$0x7f]
        %vm2674 = vcmask 1043456
        %v2675 = vrot.slane %v657, 4
        %v2676 = vrot.slane %v662, 4
        %v2677 = vsel %vm2674, %v2675, %v2676
        %v2678 = vrot.slane %v667, 4
        %v2679 = vsel %vm2674, %v2676, %v2678
        %v2680 = vrot.slane %v672, 4
        %v2681 = vsel %vm2674, %v2678, %v2680
        %v2682 = vsel %vm573, %v2677, 0
        %v2684 = vsel %vm573, %v2679, 0
        %v2686 = vsel %vm573, %v2681, 0
        %v2688 = vsel %vm573, %v2680, 0
        %v2691 = vsel %vm586, %v2672, 0
        %v2694 = vsel %vm586, %v2673, 0
        %2696 = vmatprep.subr.mxu0 %v2659
        %2697 = vmatpush1.msra.mxu0 %v2658
        %2698 = vmatprep.subr.mxu0 %v2661
        %2699 = vmatpush1.msra.mxu0 %v2660
        %2700 = vmatprep.subr.mxu0 %v2663
        %2701 = vmatpush1.msra.mxu0 %v2662
        %2702 = vmatprep.subr.mxu0 %v2665
        %2703 = vmatpush1.msra.mxu0 %v2664
        %2704 = vmatprep.subr.mxu0 %v2667
        %2705 = vmatpush1.msra.mxu0 %v2666
        %2706 = vmatprep.subr.mxu0 %v2669
        %2707 = vmatpush1.msra.mxu0 %v2668
        %2708 = vmatprep.subr.mxu0 %v2671
        %2709 = vmatpush1.msra.mxu0 %v2670
        %2710 = vmatprep.subr.mxu0 %v2694
        %2711 = vmatpush1.msra.mxu0 %v2691
        %2712 = vmatprep.subr.mxu0 0.0
        %2713 = vmatpush1.msra.mxu0 0.0
        %2714 = vmatprep.subr.mxu0 0.0
        %2715 = vmatpush1.msra.mxu0 0.0
        %2716 = vmatprep.subr.mxu0 0.0
        %2717 = vmatpush1.msra.mxu0 0.0
        %2718 = vmatprep.subr.mxu0 0.0
        %2719 = vmatpush1.msra.mxu0 0.0
        %2720 = vmatprep.subr.mxu0 0.0
        %2721 = vmatpush1.msra.mxu0 0.0
        %2722 = vmatprep.subr.mxu0 0.0
        %2723 = vmatpush1.msra.mxu0 0.0
        %2724 = vmatprep.subr.mxu0 0.0
        %2725 = vmatpush1.msra.mxu0 0.0
        %2726 = vmatprep.subr.mxu0 0.0
        %2727 = vmatpush1.msra.mxu0 0.0
        %2728 = vmatprep.subr.mxu0 0.0
        %2729 = vmatpush1.msra.mxu0 0.0
        %2730 = vmatprep.subr.mxu0 0.0
        %2731 = vmatpush1.msra.mxu0 0.0
        %2732 = vmatprep.subr.mxu0 0.0
        %2733 = vmatpush1.msra.mxu0 0.0
        %2734 = vmatprep.subr.mxu0 0.0
        %2735 = vmatpush1.msra.mxu0 0.0
        %2736 = vmatprep.subr.mxu0 0.0
        %2737 = vmatpush1.msra.mxu0 0.0
        %2738 = vmatprep.subr.mxu0 0.0
        %2739 = vmatpush1.msra.mxu0 0.0
        %2740 = vmatprep.subr.mxu0 0.0
        %2741 = vmatpush1.msra.mxu0 0.0
        %2742 = vmatprep.subr.mxu0 0.0
        %2743 = vmatpush1.msra.mxu0 0.0
        %2744 = vmatprep.subr.mxu0 0.0
        %2745 = vmatpush1.msra.mxu0 0.0
        %2746 = vmatprep.subr.mxu0 0.0
        %2747 = vmatpush1.msra.mxu0 0.0
        %2748 = vmatprep.subr.mxu0 0.0
        %2749 = vmatpush1.msra.mxu0 0.0
        %2750 = vmatprep.subr.mxu0 0.0
        %2751 = vmatpush1.msra.mxu0 0.0
        %2752 = vmatprep.subr.mxu0 0.0
        %2753 = vmatpush1.msra.mxu0 0.0
        %2754 = vmatprep.subr.mxu0 0.0
        %2755 = vmatpush1.msra.mxu0 0.0
        %2756 = vmatprep.subr.mxu0 0.0
        %2757 = vmatpush1.msra.mxu0 0.0
        %2758 = vmatprep.subr.mxu0 0.0
        %2759 = vmatpush1.msra.mxu0 0.0
        %2760 = vmatprep.mubr.f32.mxu0 0.0
        %2761 = vmatmul.mubr.f32.gmra.mrb[0].mxu0 %v2682
        %v2762 = vpop.f32.mrb[0].mxu0
        %v2763 = vadd.f32 0.0, %v2762
        %v2764 = vpop.f32.mrb[0].mxu0
        %v2765 = vadd.f32 0.0, %v2764
        %2766 = vmatprep.mubr.f32.mxu0 0.0
        %2767 = vmatmul.mubr.f32.gmra.mrb[0].mxu0 %v2684
        %v2768 = vpop.f32.mrb[0].mxu0
        %v2769 = vadd.f32 0.0, %v2768
        %v2770 = vpop.f32.mrb[0].mxu0
        %v2771 = vadd.f32 0.0, %v2770
        %2772 = vmatprep.mubr.f32.mxu0 0.0
        %2773 = vmatmul.mubr.f32.gmra.mrb[0].mxu0 %v2686
        %v2774 = vpop.f32.mrb[0].mxu0
        %v2775 = vadd.f32 0.0, %v2774
        %v2776 = vpop.f32.mrb[0].mxu0
        %v2777 = vadd.f32 0.0, %v2776
        %2778 = vmatprep.mubr.f32.mxu0 0.0
        %2779 = vmatmul.mubr.f32.gmra.mrb[0].mxu0 %v2688
        %v2780 = vpop.f32.mrb[0].mxu0
        %v2781 = vadd.f32 0.0, %v2780
        %v2782 = vpop.f32.mrb[0].mxu0
        %v2783 = vadd.f32 0.0, %v2782
        %2784 = vdwg.mxu0
        %v2785 = vadd.f32 %v2649, %v2763
        %v2786 = vadd.f32 %v2650, %v2765
        %v2787 = vadd.f32 %v2651, %v2769
        %v2788 = vadd.f32 %v2652, %v2771
        %v2789 = vadd.f32 %v2653, %v2775
        %v2790 = vadd.f32 %v2654, %v2777
        %v2791 = vadd.f32 %v2655, %v2781
        %v2792 = vadd.f32 %v2656, %v2783
        %s2793 = scalar_lea.vmem %s2, 1664
        %v2794 = vld [vmem:[%s2793] sm:$0xff]
        %v2795 = vld [vmem:[%s2793 + $0x8] sm:$0xff]
        %v2796 = vld [vmem:[%s2793 + $0x10] sm:$0xff]
        %v2797 = vld [vmem:[%s2793 + $0x18] sm:$0xff]
        %v2798 = vld [vmem:[%s2793 + $0x20] sm:$0xff]
        %v2799 = vld [vmem:[%s2793 + $0x28] sm:$0xff]
        %v2800 = vld [vmem:[%s2793 + $0x30] sm:$0xff]
        %v2801 = vld [vmem:[%s2793 + $0x38] sm:$0xff]
        %v2802 = vld [vmem:[%s2793 + $0x40] sm:$0xff]
        %v2803 = vld [vmem:[%s2793 + $0x48] sm:$0xff]
        %v2804 = vld [vmem:[%s2793 + $0x50] sm:$0xff]
        %v2805 = vld [vmem:[%s2793 + $0x58] sm:$0xff]
        %v2806 = vld [vmem:[%s2793 + $0x60] sm:$0xff]
        %v2807 = vld [vmem:[%s2793 + $0x68] sm:$0xff]
        %v2808 = vld [vmem:[%s2793 + $0x70] sm:$0x7f]
        %v2809 = vld [vmem:[%s2793 + $0x78] sm:$0x7f]
        %v2810 = vrot.slane %v850, 4
        %v2811 = vrot.slane %v855, 4
        %v2812 = vsel %vm2674, %v2810, %v2811
        %v2813 = vrot.slane %v860, 4
        %v2814 = vsel %vm2674, %v2811, %v2813
        %v2815 = vrot.slane %v865, 4
        %v2816 = vsel %vm2674, %v2813, %v2815
        %v2817 = vsel %vm573, %v2812, 0
        %v2819 = vsel %vm573, %v2814, 0
        %v2821 = vsel %vm573, %v2816, 0
        %v2823 = vsel %vm573, %v2815, 0
        %v2826 = vsel %vm586, %v2808, 0
        %v2829 = vsel %vm586, %v2809, 0
        %2831 = vmatprep.subr.mxu0 %v2795
        %2832 = vmatpush1.msra.mxu0 %v2794
        %2833 = vmatprep.subr.mxu0 %v2797
        %2834 = vmatpush1.msra.mxu0 %v2796
        %2835 = vmatprep.subr.mxu0 %v2799
        %2836 = vmatpush1.msra.mxu0 %v2798
        %2837 = vmatprep.subr.mxu0 %v2801
        %2838 = vmatpush1.msra.mxu0 %v2800
        %2839 = vmatprep.subr.mxu0 %v2803
        %2840 = vmatpush1.msra.mxu0 %v2802
        %2841 = vmatprep.subr.mxu0 %v2805
        %2842 = vmatpush1.msra.mxu0 %v2804
        %2843 = vmatprep.subr.mxu0 %v2807
        %2844 = vmatpush1.msra.mxu0 %v2806
        %2845 = vmatprep.subr.mxu0 %v2829
        %2846 = vmatpush1.msra.mxu0 %v2826
        %2847 = vmatprep.subr.mxu0 0.0
        %2848 = vmatpush1.msra.mxu0 0.0
        %2849 = vmatprep.subr.mxu0 0.0
        %2850 = vmatpush1.msra.mxu0 0.0
        %2851 = vmatprep.subr.mxu0 0.0
        %2852 = vmatpush1.msra.mxu0 0.0
        %2853 = vmatprep.subr.mxu0 0.0
        %2854 = vmatpush1.msra.mxu0 0.0
        %2855 = vmatprep.subr.mxu0 0.0
        %2856 = vmatpush1.msra.mxu0 0.0
        %2857 = vmatprep.subr.mxu0 0.0
        %2858 = vmatpush1.msra.mxu0 0.0
        %2859 = vmatprep.subr.mxu0 0.0
        %2860 = vmatpush1.msra.mxu0 0.0
        %2861 = vmatprep.subr.mxu0 0.0
        %2862 = vmatpush1.msra.mxu0 0.0
        %2863 = vmatprep.subr.mxu0 0.0
        %2864 = vmatpush1.msra.mxu0 0.0
        %2865 = vmatprep.subr.mxu0 0.0
        %2866 = vmatpush1.msra.mxu0 0.0
        %2867 = vmatprep.subr.mxu0 0.0
        %2868 = vmatpush1.msra.mxu0 0.0
        %2869 = vmatprep.subr.mxu0 0.0
        %2870 = vmatpush1.msra.mxu0 0.0
        %2871 = vmatprep.subr.mxu0 0.0
        %2872 = vmatpush1.msra.mxu0 0.0
        %2873 = vmatprep.subr.mxu0 0.0
        %2874 = vmatpush1.msra.mxu0 0.0
        %2875 = vmatprep.subr.mxu0 0.0
        %2876 = vmatpush1.msra.mxu0 0.0
        %2877 = vmatprep.subr.mxu0 0.0
        %2878 = vmatpush1.msra.mxu0 0.0
        %2879 = vmatprep.subr.mxu0 0.0
        %2880 = vmatpush1.msra.mxu0 0.0
        %2881 = vmatprep.subr.mxu0 0.0
        %2882 = vmatpush1.msra.mxu0 0.0
        %2883 = vmatprep.subr.mxu0 0.0
        %2884 = vmatpush1.msra.mxu0 0.0
        %2885 = vmatprep.subr.mxu0 0.0
        %2886 = vmatpush1.msra.mxu0 0.0
        %2887 = vmatprep.subr.mxu0 0.0
        %2888 = vmatpush1.msra.mxu0 0.0
        %2889 = vmatprep.subr.mxu0 0.0
        %2890 = vmatpush1.msra.mxu0 0.0
        %2891 = vmatprep.subr.mxu0 0.0
        %2892 = vmatpush1.msra.mxu0 0.0
        %2893 = vmatprep.subr.mxu0 0.0
        %2894 = vmatpush1.msra.mxu0 0.0
        %2895 = vmatprep.mubr.f32.mxu0 0.0
        %2896 = vmatmul.mubr.f32.gmra.mrb[0].mxu0 %v2817
        %v2897 = vpop.f32.mrb[0].mxu0
        %v2898 = vadd.f32 0.0, %v2897
        %v2899 = vpop.f32.mrb[0].mxu0
        %v2900 = vadd.f32 0.0, %v2899
        %2901 = vmatprep.mubr.f32.mxu0 0.0
        %2902 = vmatmul.mubr.f32.gmra.mrb[0].mxu0 %v2819
        %v2903 = vpop.f32.mrb[0].mxu0
        %v2904 = vadd.f32 0.0, %v2903
        %v2905 = vpop.f32.mrb[0].mxu0
        %v2906 = vadd.f32 0.0, %v2905
        %2907 = vmatprep.mubr.f32.mxu0 0.0
        %2908 = vmatmul.mubr.f32.gmra.mrb[0].mxu0 %v2821
        %v2909 = vpop.f32.mrb[0].mxu0
        %v2910 = vadd.f32 0.0, %v2909
        %v2911 = vpop.f32.mrb[0].mxu0
        %v2912 = vadd.f32 0.0, %v2911
        %2913 = vmatprep.mubr.f32.mxu0 0.0
        %2914 = vmatmul.mubr.f32.gmra.mrb[0].mxu0 %v2823
        %v2915 = vpop.f32.mrb[0].mxu0
        %v2916 = vadd.f32 0.0, %v2915
        %v2917 = vpop.f32.mrb[0].mxu0
        %v2918 = vadd.f32 0.0, %v2917
        %2919 = vdwg.mxu0
        %v2920 = vadd.f32 %v2785, %v2898
        %v2921 = vadd.f32 %v2786, %v2900
        %v2922 = vadd.f32 %v2787, %v2904
        %v2923 = vadd.f32 %v2788, %v2906
        %v2924 = vadd.f32 %v2789, %v2910
        %v2925 = vadd.f32 %v2790, %v2912
        %v2926 = vadd.f32 %v2791, %v2916
        %v2927 = vadd.f32 %v2792, %v2918
        %s2928 = scalar_lea.vmem %s2, 1792
        %v2929 = vld [vmem:[%s2928] sm:$0xff]
        %v2930 = vld [vmem:[%s2928 + $0x8] sm:$0xff]
        %v2931 = vld [vmem:[%s2928 + $0x10] sm:$0xff]
        %v2932 = vld [vmem:[%s2928 + $0x18] sm:$0xff]
        %v2933 = vld [vmem:[%s2928 + $0x20] sm:$0xff]
        %v2934 = vld [vmem:[%s2928 + $0x28] sm:$0xff]
        %v2935 = vld [vmem:[%s2928 + $0x30] sm:$0xff]
        %v2936 = vld [vmem:[%s2928 + $0x38] sm:$0xff]
        %v2937 = vld [vmem:[%s2928 + $0x40] sm:$0xff]
        %v2938 = vld [vmem:[%s2928 + $0x48] sm:$0xff]
        %v2939 = vld [vmem:[%s2928 + $0x50] sm:$0xff]
        %v2940 = vld [vmem:[%s2928 + $0x58] sm:$0xff]
        %v2941 = vld [vmem:[%s2928 + $0x60] sm:$0xff]
        %v2942 = vld [vmem:[%s2928 + $0x68] sm:$0xff]
        %v2943 = vld [vmem:[%s2928 + $0x70] sm:$0x7f]
        %v2944 = vld [vmem:[%s2928 + $0x78] sm:$0x7f]
        %v2945 = vrot.slane %v1043, 4
        %v2946 = vrot.slane %v1048, 4
        %v2947 = vsel %vm2674, %v2945, %v2946
        %v2948 = vrot.slane %v1053, 4
        %v2949 = vsel %vm2674, %v2946, %v2948
        %v2950 = vrot.slane %v1058, 4
        %v2951 = vsel %vm2674, %v2948, %v2950
        %v2952 = vsel %vm573, %v2947, 0
        %v2954 = vsel %vm573, %v2949, 0
        %v2956 = vsel %vm573, %v2951, 0
        %v2958 = vsel %vm573, %v2950, 0
        %v2961 = vsel %vm586, %v2943, 0
        %v2964 = vsel %vm586, %v2944, 0
        %2966 = vmatprep.subr.mxu0 %v2930
        %2967 = vmatpush1.msra.mxu0 %v2929
        %2968 = vmatprep.subr.mxu0 %v2932
        %2969 = vmatpush1.msra.mxu0 %v2931
        %2970 = vmatprep.subr.mxu0 %v2934
        %2971 = vmatpush1.msra.mxu0 %v2933
        %2972 = vmatprep.subr.mxu0 %v2936
        %2973 = vmatpush1.msra.mxu0 %v2935
        %2974 = vmatprep.subr.mxu0 %v2938
        %2975 = vmatpush1.msra.mxu0 %v2937
        %2976 = vmatprep.subr.mxu0 %v2940
        %2977 = vmatpush1.msra.mxu0 %v2939
        %2978 = vmatprep.subr.mxu0 %v2942
        %2979 = vmatpush1.msra.mxu0 %v2941
        %2980 = vmatprep.subr.mxu0 %v2964
        %2981 = vmatpush1.msra.mxu0 %v2961
        %2982 = vmatprep.subr.mxu0 0.0
        %2983 = vmatpush1.msra.mxu0 0.0
        %2984 = vmatprep.subr.mxu0 0.0
        %2985 = vmatpush1.msra.mxu0 0.0
        %2986 = vmatprep.subr.mxu0 0.0
        %2987 = vmatpush1.msra.mxu0 0.0
        %2988 = vmatprep.subr.mxu0 0.0
        %2989 = vmatpush1.msra.mxu0 0.0
        %2990 = vmatprep.subr.mxu0 0.0
        %2991 = vmatpush1.msra.mxu0 0.0
        %2992 = vmatprep.subr.mxu0 0.0
        %2993 = vmatpush1.msra.mxu0 0.0
        %2994 = vmatprep.subr.mxu0 0.0
        %2995 = vmatpush1.msra.mxu0 0.0
        %2996 = vmatprep.subr.mxu0 0.0
        %2997 = vmatpush1.msra.mxu0 0.0
        %2998 = vmatprep.subr.mxu0 0.0
        %2999 = vmatpush1.msra.mxu0 0.0
        %3000 = vmatprep.subr.mxu0 0.0
        %3001 = vmatpush1.msra.mxu0 0.0
        %3002 = vmatprep.subr.mxu0 0.0
        %3003 = vmatpush1.msra.mxu0 0.0
        %3004 = vmatprep.subr.mxu0 0.0
        %3005 = vmatpush1.msra.mxu0 0.0
        %3006 = vmatprep.subr.mxu0 0.0
        %3007 = vmatpush1.msra.mxu0 0.0
        %3008 = vmatprep.subr.mxu0 0.0
        %3009 = vmatpush1.msra.mxu0 0.0
        %3010 = vmatprep.subr.mxu0 0.0
        %3011 = vmatpush1.msra.mxu0 0.0
        %3012 = vmatprep.subr.mxu0 0.0
        %3013 = vmatpush1.msra.mxu0 0.0
        %3014 = vmatprep.subr.mxu0 0.0
        %3015 = vmatpush1.msra.mxu0 0.0
        %3016 = vmatprep.subr.mxu0 0.0
        %3017 = vmatpush1.msra.mxu0 0.0
        %3018 = vmatprep.subr.mxu0 0.0
        %3019 = vmatpush1.msra.mxu0 0.0
        %3020 = vmatprep.subr.mxu0 0.0
        %3021 = vmatpush1.msra.mxu0 0.0
        %3022 = vmatprep.subr.mxu0 0.0
        %3023 = vmatpush1.msra.mxu0 0.0
        %3024 = vmatprep.subr.mxu0 0.0
        %3025 = vmatpush1.msra.mxu0 0.0
        %3026 = vmatprep.subr.mxu0 0.0
        %3027 = vmatpush1.msra.mxu0 0.0
        %3028 = vmatprep.subr.mxu0 0.0
        %3029 = vmatpush1.msra.mxu0 0.0
        %3030 = vmatprep.mubr.f32.mxu0 0.0
        %3031 = vmatmul.mubr.f32.gmra.mrb[0].mxu0 %v2952
        %v3032 = vpop.f32.mrb[0].mxu0
        %v3033 = vadd.f32 0.0, %v3032
        %v3034 = vpop.f32.mrb[0].mxu0
        %v3035 = vadd.f32 0.0, %v3034
        %3036 = vmatprep.mubr.f32.mxu0 0.0
        %3037 = vmatmul.mubr.f32.gmra.mrb[0].mxu0 %v2954
        %v3038 = vpop.f32.mrb[0].mxu0
        %v3039 = vadd.f32 0.0, %v3038
        %v3040 = vpop.f32.mrb[0].mxu0
        %v3041 = vadd.f32 0.0, %v3040
        %3042 = vmatprep.mubr.f32.mxu0 0.0
        %3043 = vmatmul.mubr.f32.gmra.mrb[0].mxu0 %v2956
        %v3044 = vpop.f32.mrb[0].mxu0
        %v3045 = vadd.f32 0.0, %v3044
        %v3046 = vpop.f32.mrb[0].mxu0
        %v3047 = vadd.f32 0.0, %v3046
        %3048 = vmatprep.mubr.f32.mxu0 0.0
        %3049 = vmatmul.mubr.f32.gmra.mrb[0].mxu0 %v2958
        %v3050 = vpop.f32.mrb[0].mxu0
        %v3051 = vadd.f32 0.0, %v3050
        %v3052 = vpop.f32.mrb[0].mxu0
        %v3053 = vadd.f32 0.0, %v3052
        %3054 = vdwg.mxu0
        %v3055 = vadd.f32 %v2920, %v3033
        %v3056 = vadd.f32 %v2921, %v3035
        %v3057 = vadd.f32 %v2922, %v3039
        %v3058 = vadd.f32 %v2923, %v3041
        %v3059 = vadd.f32 %v2924, %v3045
        %v3060 = vadd.f32 %v2925, %v3047
        %v3061 = vadd.f32 %v2926, %v3051
        %v3062 = vadd.f32 %v2927, %v3053
        %v3063 = vld [vmem:[%s3] sm:$0x3]
        %v3065 = vlaneseq
        %v3066 = vshrl.u32 %v3065, 7
        %v3067 = vsub.s32 0, %v3066
        %v3068 = vrot.slane %v3063, %v3067
        %v3069 = vlaneseq
        %v3070 = vshrl.u32 %v3069, 7
        %v3071 = vsub.s32 1, %v3070
        %v3072 = vrot.slane %v3063, %v3071
        %v3075 = vadd.f32 %v3055, %v3068
        %v3076 = vadd.f32 %v3056, %v3072
        %v3077 = vadd.f32 %v3057, %v3068
        %v3078 = vadd.f32 %v3058, %v3072
        %v3079 = vadd.f32 %v3059, %v3068
        %v3080 = vadd.f32 %v3060, %v3072
        %v3081 = vadd.f32 %v3061, %v3068
        %v3082 = vadd.f32 %v3062, %v3072
        %v3083 = vmax.f32 %v3075, 0.0
        %v3084 = vmax.f32 %v3076, 0.0
        %v3085 = vmax.f32 %v3077, 0.0
        %v3086 = vmax.f32 %v3078, 0.0
        %v3087 = vmax.f32 %v3079, 0.0
        %v3088 = vmax.f32 %v3080, 0.0
        %v3089 = vmax.f32 %v3081, 0.0
        %v3090 = vmax.f32 %v3082, 0.0
        %3091 = vst [vmem:[#allocation2] sm:$0xff] %v3083
        %vm3092 = vcmask 326656
        %3093 = vst.msk [vmem:[#allocation2 + $0x8] sm:$0xff] %vm3092, %v3084
        %3094 = vst [vmem:[#allocation2 + $0x10] sm:$0xff] %v3085
        %3095 = vst.msk [vmem:[#allocation2 + $0x18] sm:$0xff] %vm3092, %v3086
        %3096 = vst [vmem:[#allocation2 + $0x20] sm:$0xff] %v3087
        %3097 = vst.msk [vmem:[#allocation2 + $0x28] sm:$0xff] %vm3092, %v3088
        %3098 = vst [vmem:[#allocation2 + $0x30] sm:$0xf] %v3089
        %vm3099 = vcmask 322560
        %3100 = vst.msk [vmem:[#allocation2 + $0x38] sm:$0xf] %vm3099, %v3090
        %v3101 = vld [vmem:[#allocation2] sm:$0xff]
        %v3102 = vld [vmem:[#allocation2 + $0x8] sm:$0xff]
        %v3103 = vld [vmem:[#allocation2 + $0x10] sm:$0xff]
        %v3104 = vld [vmem:[#allocation2 + $0x18] sm:$0xff]
        %v3105 = vld [vmem:[#allocation2 + $0x20] sm:$0xff]
        %v3106 = vld [vmem:[#allocation2 + $0x28] sm:$0xff]
        %v3107 = vld [vmem:[#allocation2 + $0x30] sm:$0x7]
        %v3108 = vld [vmem:[#allocation2 + $0x38] sm:$0x7]
        %v3109 = vld [vmem:[#allocation2] sm:$0xfe]
        %v3110 = vld [vmem:[#allocation2 + $0x8] sm:$0xfe]
        %v3111 = vld [vmem:[#allocation2 + $0x30] sm:$0xf]
        %v3112 = vld [vmem:[#allocation2 + $0x38] sm:$0xf]
        %3121 = vrot.lane.b32.xlu0 %v3101, 122
        %v3122 = vpop.permute.xlu0 %3121
        %3123 = vrot.lane.b32.xlu0 %v3102, 122
        %v3124 = vpop.permute.xlu0 %3123
        %3125 = vrot.lane.b32.xlu0 %v3103, 122
        %v3126 = vpop.permute.xlu0 %3125
        %3127 = vrot.lane.b32.xlu0 %v3104, 122
        %v3128 = vpop.permute.xlu0 %3127
        %3129 = vrot.lane.b32.xlu0 %v3105, 122
        %v3130 = vpop.permute.xlu0 %3129
        %3131 = vrot.lane.b32.xlu0 %v3106, 122
        %v3132 = vpop.permute.xlu0 %3131
        %3133 = vrot.lane.b32.xlu0 %v3107, 122
        %v3134 = vpop.permute.xlu0 %3133
        %3135 = vrot.lane.b32.xlu0 %v3108, 122
        %v3136 = vpop.permute.xlu0 %3135
        %vm3137 = vcmask 998400
        %v3138 = vsel %vm3137, %v3122, %v3124
        %v3139 = vsel %vm3137, %v3126, %v3128
        %v3140 = vsel %vm3137, %v3130, %v3132
        %v3141 = vsel %vm3137, %v3134, %v3136
        %v3150 = vmax.f32 %v3101, %v3138
        %v3151 = vmax.f32 %v3102, %v3124
        %v3152 = vmax.f32 %v3103, %v3139
        %v3153 = vmax.f32 %v3104, %v3128
        %v3154 = vmax.f32 %v3105, %v3140
        %v3155 = vmax.f32 %v3106, %v3132
        %v3156 = vmax.f32 %v3107, %v3141
        %v3157 = vmax.f32 %v3108, %v3136
        %3162 = vrot.lane.b32.xlu0 %v3109, 122
        %v3163 = vpop.permute.xlu0 %3162
        %3164 = vrot.lane.b32.xlu0 %v3110, 122
        %v3165 = vpop.permute.xlu0 %3164
        %3166 = vrot.lane.b32.xlu0 %v3111, 122
        %v3167 = vpop.permute.xlu0 %3166
        %3168 = vrot.lane.b32.xlu0 %v3112, 122
        %v3169 = vpop.permute.xlu0 %3168
        %v3170 = vsel %vm3137, %v3163, %v3165
        %v3171 = vsel %vm3137, %v3167, %v3169
        %v3176 = vmax.f32 %v3109, %v3170
        %v3177 = vmax.f32 %v3110, %v3165
        %v3178 = vmax.f32 %v3111, %v3171
        %v3179 = vmax.f32 %v3112, %v3169
        %v3188 = vrot.slane %v3176, 1
        %v3189 = vrot.slane %v3152, 1
        %v3190 = vsel %vm586, %v3188, %v3189
        %v3191 = vrot.slane %v3177, 1
        %v3192 = vrot.slane %v3153, 1
        %v3193 = vsel %vm586, %v3191, %v3192
        %v3194 = vrot.slane %v3154, 1
        %v3195 = vsel %vm586, %v3189, %v3194
        %v3196 = vrot.slane %v3155, 1
        %v3197 = vsel %vm586, %v3192, %v3196
        %v3198 = vrot.slane %v3178, 1
        %v3199 = vsel %vm586, %v3194, %v3198
        %v3200 = vrot.slane %v3179, 1
        %v3201 = vsel %vm586, %v3196, %v3200
        %v3210 = vmax.f32 %v3150, %v3190
        %v3211 = vmax.f32 %v3151, %v3193
        %v3212 = vmax.f32 %v3152, %v3195
        %v3213 = vmax.f32 %v3153, %v3197
        %v3214 = vmax.f32 %v3154, %v3199
        %v3215 = vmax.f32 %v3155, %v3201
        %v3216 = vmax.f32 %v3156, %v3198
        %v3217 = vmax.f32 %v3157, %v3200
        %v3218 = vld [vmem:[%s4] sm:$0xff]
        %v3219 = vld [vmem:[%s4 + $0x8] sm:$0x3f]
        %vm3220 = vcmask 220160
        %v3222 = vsel %vm3220, %v3218, 0
        %v3225 = vsel %vm3220, %v3219, 0
        %vm3227 = vcmask 1042432
        %v3229 = vsel %vm3227, %v3216, 0
        %v3232 = vsel %vm3227, %v3217, 0
        %3234 = vmatprep.subr.mxu0 %v3211
        %3235 = vmatpush1.msra.mxu0 %v3210
        %3236 = vmatprep.subr.mxu0 %v3213
        %3237 = vmatpush1.msra.mxu0 %v3212
        %3238 = vmatprep.subr.mxu0 %v3215
        %3239 = vmatpush1.msra.mxu0 %v3214
        %3240 = vmatprep.subr.mxu0 %v3232
        %3241 = vmatpush1.msra.mxu0 %v3229
        %3242 = vmatprep.subr.mxu0 0.0
        %3243 = vmatpush1.msra.mxu0 0.0
        %3244 = vmatprep.subr.mxu0 0.0
        %3245 = vmatpush1.msra.mxu0 0.0
        %3246 = vmatprep.subr.mxu0 0.0
        %3247 = vmatpush1.msra.mxu0 0.0
        %3248 = vmatprep.subr.mxu0 0.0
        %3249 = vmatpush1.msra.mxu0 0.0
        %3250 = vmatprep.subr.mxu0 0.0
        %3251 = vmatpush1.msra.mxu0 0.0
        %3252 = vmatprep.subr.mxu0 0.0
        %3253 = vmatpush1.msra.mxu0 0.0
        %3254 = vmatprep.subr.mxu0 0.0
        %3255 = vmatpush1.msra.mxu0 0.0
        %3256 = vmatprep.subr.mxu0 0.0
        %3257 = vmatpush1.msra.mxu0 0.0
        %3258 = vmatprep.subr.mxu0 0.0
        %3259 = vmatpush1.msra.mxu0 0.0
        %3260 = vmatprep.subr.mxu0 0.0
        %3261 = vmatpush1.msra.mxu0 0.0
        %3262 = vmatprep.subr.mxu0 0.0
        %3263 = vmatpush1.msra.mxu0 0.0
        %3264 = vmatprep.subr.mxu0 0.0
        %3265 = vmatpush1.msra.mxu0 0.0
        %3266 = vmatprep.subr.mxu0 0.0
        %3267 = vmatpush1.msra.mxu0 0.0
        %3268 = vmatprep.subr.mxu0 0.0
        %3269 = vmatpush1.msra.mxu0 0.0
        %3270 = vmatprep.subr.mxu0 0.0
        %3271 = vmatpush1.msra.mxu0 0.0
        %3272 = vmatprep.subr.mxu0 0.0
        %3273 = vmatpush1.msra.mxu0 0.0
        %3274 = vmatprep.subr.mxu0 0.0
        %3275 = vmatpush1.msra.mxu0 0.0
        %3276 = vmatprep.subr.mxu0 0.0
        %3277 = vmatpush1.msra.mxu0 0.0
        %3278 = vmatprep.subr.mxu0 0.0
        %3279 = vmatpush1.msra.mxu0 0.0
        %3280 = vmatprep.subr.mxu0 0.0
        %3281 = vmatpush1.msra.mxu0 0.0
        %3282 = vmatprep.subr.mxu0 0.0
        %3283 = vmatpush1.msra.mxu0 0.0
        %3284 = vmatprep.subr.mxu0 0.0
        %3285 = vmatpush1.msra.mxu0 0.0
        %3286 = vmatprep.subr.mxu0 0.0
        %3287 = vmatpush1.msra.mxu0 0.0
        %3288 = vmatprep.subr.mxu0 0.0
        %3289 = vmatpush1.msra.mxu0 0.0
        %3290 = vmatprep.subr.mxu0 0.0
        %3291 = vmatpush1.msra.mxu0 0.0
        %3292 = vmatprep.subr.mxu0 0.0
        %3293 = vmatpush1.msra.mxu0 0.0
        %3294 = vmatprep.subr.mxu0 0.0
        %3295 = vmatpush1.msra.mxu0 0.0
        %3296 = vmatprep.subr.mxu0 0.0
        %3297 = vmatpush1.msra.mxu0 0.0
        %3298 = vmatprep.mubr.f32.mxu0 0.0
        %3299 = vmatmul.mubr.f32.gmra.mrb[0].mxu0 %v3222
        %v3300 = vpop.f32.mrb[0].mxu0
        %v3301 = vadd.f32 0.0, %v3300
        %v3302 = vpop.f32.mrb[0].mxu0
        %v3303 = vadd.f32 0.0, %v3302
        %3304 = vmatprep.mubr.f32.mxu0 0.0
        %3305 = vmatmul.mubr.f32.gmra.mrb[0].mxu0 %v3225
        %v3306 = vpop.f32.mrb[0].mxu0
        %v3307 = vadd.f32 0.0, %v3306
        %v3308 = vpop.f32.mrb[0].mxu0
        %v3309 = vadd.f32 0.0, %v3308
        %3310 = vdwg.mxu0
        %v3311 = vld [vmem:[%s5] sm:$0xff]
        %v3312 = vld [vmem:[%s5 + $0x8] sm:$0xff]
        %v3313 = vld [vmem:[%s5 + $0x10] sm:$0xff]
        %v3314 = vld [vmem:[%s5 + $0x18] sm:$0xff]
        %v3315 = vld [vmem:[%s5 + $0x20] sm:$0xff]
        %v3316 = vld [vmem:[%s5 + $0x28] sm:$0xff]
        %v3317 = vld [vmem:[%s5 + $0x30] sm:$0xff]
        %v3318 = vld [vmem:[%s5 + $0x38] sm:$0xff]
        %v3319 = vld [vmem:[%s5 + $0x40] sm:$0xff]
        %v3320 = vld [vmem:[%s5 + $0x48] sm:$0xff]
        %v3321 = vld [vmem:[%s5 + $0x50] sm:$0xff]
        %v3322 = vld [vmem:[%s5 + $0x58] sm:$0xff]
        %v3323 = vld [vmem:[%s5 + $0x60] sm:$0xff]
        %v3324 = vld [vmem:[%s5 + $0x68] sm:$0xff]
        %v3325 = vld [vmem:[%s5 + $0x70] sm:$0xff]
        %v3326 = vld [vmem:[%s5 + $0x78] sm:$0xff]
        %v3327 = vld [vmem:[%s5 + $0x80] sm:$0xff]
        %v3328 = vld [vmem:[%s5 + $0x88] sm:$0xff]
        %v3329 = vld [vmem:[%s5 + $0x90] sm:$0xff]
        %v3330 = vld [vmem:[%s5 + $0x98] sm:$0xff]
        %v3331 = vld [vmem:[%s5 + $0xa0] sm:$0xff]
        %v3332 = vld [vmem:[%s5 + $0xa8] sm:$0xff]
        %v3333 = vld [vmem:[%s5 + $0xb0] sm:$0xff]
        %v3334 = vld [vmem:[%s5 + $0xb8] sm:$0xff]
        %v3335 = vld [vmem:[%s5 + $0xc0] sm:$0xff]
        %v3336 = vld [vmem:[%s5 + $0xc8] sm:$0xff]
        %v3337 = vld [vmem:[%s5 + $0xd0] sm:$0xff]
        %v3338 = vld [vmem:[%s5 + $0xd8] sm:$0xff]
        %v3339 = vld [vmem:[%s5 + $0xe0] sm:$0xff]
        %v3340 = vld [vmem:[%s5 + $0xe8] sm:$0xff]
        %v3341 = vld [vmem:[%s5 + $0xf0] sm:$0xff]
        %v3342 = vld [vmem:[%s5 + $0xf8] sm:$0xff]
        %v3343 = vld [vmem:[%s5 + $0x100] sm:$0xff]
        %v3344 = vld [vmem:[%s5 + $0x108] sm:$0xff]
        %v3345 = vld [vmem:[%s5 + $0x110] sm:$0xff]
        %v3346 = vld [vmem:[%s5 + $0x118] sm:$0xff]
        %v3347 = vld [vmem:[%s5 + $0x120] sm:$0xff]
        %v3348 = vld [vmem:[%s5 + $0x128] sm:$0xff]
        %v3349 = vld [vmem:[%s5 + $0x130] sm:$0xff]
        %v3350 = vld [vmem:[%s5 + $0x138] sm:$0xff]
        %v3351 = vld [vmem:[%s5 + $0x140] sm:$0x3]
        %v3352 = vld [vmem:[%s5 + $0x148] sm:$0x3]
        %s3353 = scalar_lea.vmem %s5, 336
        %v3354 = vld [vmem:[%s3353] sm:$0xff]
        %v3355 = vld [vmem:[%s3353 + $0x8] sm:$0xff]
        %v3356 = vld [vmem:[%s3353 + $0x10] sm:$0xff]
        %v3357 = vld [vmem:[%s3353 + $0x18] sm:$0xff]
        %v3358 = vld [vmem:[%s3353 + $0x20] sm:$0xff]
        %v3359 = vld [vmem:[%s3353 + $0x28] sm:$0xff]
        %v3360 = vld [vmem:[%s3353 + $0x30] sm:$0xff]
        %v3361 = vld [vmem:[%s3353 + $0x38] sm:$0xff]
        %v3362 = vld [vmem:[%s3353 + $0x40] sm:$0xff]
        %v3363 = vld [vmem:[%s3353 + $0x48] sm:$0xff]
        %v3364 = vld [vmem:[%s3353 + $0x50] sm:$0xff]
        %v3365 = vld [vmem:[%s3353 + $0x58] sm:$0xff]
        %v3366 = vld [vmem:[%s3353 + $0x60] sm:$0xff]
        %v3367 = vld [vmem:[%s3353 + $0x68] sm:$0xff]
        %v3368 = vld [vmem:[%s3353 + $0x70] sm:$0xff]
        %v3369 = vld [vmem:[%s3353 + $0x78] sm:$0xff]
        %v3370 = vld [vmem:[%s3353 + $0x80] sm:$0xff]
        %v3371 = vld [vmem:[%s3353 + $0x88] sm:$0xff]
        %v3372 = vld [vmem:[%s3353 + $0x90] sm:$0xff]
        %v3373 = vld [vmem:[%s3353 + $0x98] sm:$0xff]
        %v3374 = vld [vmem:[%s3353 + $0xa0] sm:$0xff]
        %v3375 = vld [vmem:[%s3353 + $0xa8] sm:$0xff]
        %v3376 = vld [vmem:[%s3353 + $0xb0] sm:$0xff]
        %v3377 = vld [vmem:[%s3353 + $0xb8] sm:$0xff]
        %v3378 = vld [vmem:[%s3353 + $0xc0] sm:$0xff]
        %v3379 = vld [vmem:[%s3353 + $0xc8] sm:$0xff]
        %v3380 = vld [vmem:[%s3353 + $0xd0] sm:$0xff]
        %v3381 = vld [vmem:[%s3353 + $0xd8] sm:$0xff]
        %v3382 = vld [vmem:[%s3353 + $0xe0] sm:$0xff]
        %v3383 = vld [vmem:[%s3353 + $0xe8] sm:$0xff]
        %v3384 = vld [vmem:[%s3353 + $0xf0] sm:$0xff]
        %v3385 = vld [vmem:[%s3353 + $0xf8] sm:$0xff]
        %v3386 = vld [vmem:[%s3353 + $0x100] sm:$0xff]
        %v3387 = vld [vmem:[%s3353 + $0x108] sm:$0xff]
        %v3388 = vld [vmem:[%s3353 + $0x110] sm:$0xff]
        %v3389 = vld [vmem:[%s3353 + $0x118] sm:$0xff]
        %v3390 = vld [vmem:[%s3353 + $0x120] sm:$0xff]
        %v3391 = vld [vmem:[%s3353 + $0x128] sm:$0xff]
        %v3392 = vld [vmem:[%s3353 + $0x130] sm:$0xff]
        %v3393 = vld [vmem:[%s3353 + $0x138] sm:$0xff]
        %v3394 = vld [vmem:[%s3353 + $0x140] sm:$0x3]
        %v3395 = vld [vmem:[%s3353 + $0x148] sm:$0x3]
        %v3400 = vrot.slane %v3301, 1
        %v3401 = vrot.slane %v3307, 1
        %v3402 = vsel %vm586, %v3400, %v3401
        %v3403 = vrot.slane %v3303, 1
        %v3404 = vrot.slane %v3309, 1
        %v3405 = vsel %vm586, %v3403, %v3404
        %vm3408 = vcmask 277504
        %v3409 = vsel %vm3408, %v3405, 0
        %v3411 = vsel %vm3408, %v3404, 0
        %vm3413 = vcmask 1041408
        %v3415 = vsel %vm3413, %v3394, 0
        %v3418 = vsel %vm3413, %v3395, 0
        %3420 = vmatprep.subr.mxu0 %v3355
        %3421 = vmatpush1.msra.mxu0 %v3354
        %3422 = vmatprep.subr.mxu0 %v3357
        %3423 = vmatpush1.msra.mxu0 %v3356
        %3424 = vmatprep.subr.mxu0 %v3359
        %3425 = vmatpush1.msra.mxu0 %v3358
        %3426 = vmatprep.subr.mxu0 %v3361
        %3427 = vmatpush1.msra.mxu0 %v3360
        %3428 = vmatprep.subr.mxu0 %v3363
        %3429 = vmatpush1.msra.mxu0 %v3362
        %3430 = vmatprep.subr.mxu0 %v3365
        %3431 = vmatpush1.msra.mxu0 %v3364
        %3432 = vmatprep.subr.mxu0 %v3367
        %3433 = vmatpush1.msra.mxu0 %v3366
        %3434 = vmatprep.subr.mxu0 %v3369
        %3435 = vmatpush1.msra.mxu0 %v3368
        %3436 = vmatprep.subr.mxu0 %v3371
        %3437 = vmatpush1.msra.mxu0 %v3370
        %3438 = vmatprep.subr.mxu0 %v3373
        %3439 = vmatpush1.msra.mxu0 %v3372
        %3440 = vmatprep.subr.mxu0 %v3375
        %3441 = vmatpush1.msra.mxu0 %v3374
        %3442 = vmatprep.subr.mxu0 %v3377
        %3443 = vmatpush1.msra.mxu0 %v3376
        %3444 = vmatprep.subr.mxu0 %v3379
        %3445 = vmatpush1.msra.mxu0 %v3378
        %3446 = vmatprep.subr.mxu0 %v3381
        %3447 = vmatpush1.msra.mxu0 %v3380
        %3448 = vmatprep.subr.mxu0 %v3383
        %3449 = vmatpush1.msra.mxu0 %v3382
        %3450 = vmatprep.subr.mxu0 %v3385
        %3451 = vmatpush1.msra.mxu0 %v3384
        %3452 = vmatprep.subr.mxu0 %v3387
        %3453 = vmatpush1.msra.mxu0 %v3386
        %3454 = vmatprep.subr.mxu0 %v3389
        %3455 = vmatpush1.msra.mxu0 %v3388
        %3456 = vmatprep.subr.mxu0 %v3391
        %3457 = vmatpush1.msra.mxu0 %v3390
        %3458 = vmatprep.subr.mxu0 %v3393
        %3459 = vmatpush1.msra.mxu0 %v3392
        %3460 = vmatprep.subr.mxu0 %v3418
        %3461 = vmatpush1.msra.mxu0 %v3415
        %3462 = vmatprep.subr.mxu0 0.0
        %3463 = vmatpush1.msra.mxu0 0.0
        %3464 = vmatprep.subr.mxu0 0.0
        %3465 = vmatpush1.msra.mxu0 0.0
        %3466 = vmatprep.subr.mxu0 0.0
        %3467 = vmatpush1.msra.mxu0 0.0
        %3468 = vmatprep.subr.mxu0 0.0
        %3469 = vmatpush1.msra.mxu0 0.0
        %3470 = vmatprep.subr.mxu0 0.0
        %3471 = vmatpush1.msra.mxu0 0.0
        %3472 = vmatprep.subr.mxu0 0.0
        %3473 = vmatpush1.msra.mxu0 0.0
        %3474 = vmatprep.subr.mxu0 0.0
        %3475 = vmatpush1.msra.mxu0 0.0
        %3476 = vmatprep.subr.mxu0 0.0
        %3477 = vmatpush1.msra.mxu0 0.0
        %3478 = vmatprep.subr.mxu0 0.0
        %3479 = vmatpush1.msra.mxu0 0.0
        %3480 = vmatprep.subr.mxu0 0.0
        %3481 = vmatpush1.msra.mxu0 0.0
        %3482 = vmatprep.subr.mxu0 0.0
        %3483 = vmatpush1.msra.mxu0 0.0
        %3484 = vmatprep.mubr.f32.mxu0 %v3409
        %3485 = vmatmul.mubr.f32.gmra.mrb[0].mxu0 %v3402
        %v3486 = vpop.f32.mrb[0].mxu0
        %v3487 = vadd.f32 0.0, %v3486
        %v3488 = vpop.f32.mrb[0].mxu0
        %v3489 = vadd.f32 0.0, %v3488
        %3490 = vmatprep.mubr.f32.mxu0 %v3411
        %3491 = vmatmul.mubr.f32.gmra.mrb[0].mxu0 %v3401
        %v3492 = vpop.f32.mrb[0].mxu0
        %v3493 = vadd.f32 0.0, %v3492
        %v3494 = vpop.f32.mrb[0].mxu0
        %v3495 = vadd.f32 0.0, %v3494
        %3496 = vdwg.mxu0
        %v3497 = vsel %vm3408, %v3303, 0
        %v3499 = vsel %vm3408, %v3309, 0
        %v3502 = vsel %vm3413, %v3351, 0
        %v3505 = vsel %vm3413, %v3352, 0
        %3507 = vmatprep.subr.mxu0 %v3312
        %3508 = vmatpush1.msra.mxu0 %v3311
        %3509 = vmatprep.subr.mxu0 %v3314
        %3510 = vmatpush1.msra.mxu0 %v3313
        %3511 = vmatprep.subr.mxu0 %v3316
        %3512 = vmatpush1.msra.mxu0 %v3315
        %3513 = vmatprep.subr.mxu0 %v3318
        %3514 = vmatpush1.msra.mxu0 %v3317
        %3515 = vmatprep.subr.mxu0 %v3320
        %3516 = vmatpush1.msra.mxu0 %v3319
        %3517 = vmatprep.subr.mxu0 %v3322
        %3518 = vmatpush1.msra.mxu0 %v3321
        %3519 = vmatprep.subr.mxu0 %v3324
        %3520 = vmatpush1.msra.mxu0 %v3323
        %3521 = vmatprep.subr.mxu0 %v3326
        %3522 = vmatpush1.msra.mxu0 %v3325
        %3523 = vmatprep.subr.mxu0 %v3328
        %3524 = vmatpush1.msra.mxu0 %v3327
        %3525 = vmatprep.subr.mxu0 %v3330
        %3526 = vmatpush1.msra.mxu0 %v3329
        %3527 = vmatprep.subr.mxu0 %v3332
        %3528 = vmatpush1.msra.mxu0 %v3331
        %3529 = vmatprep.subr.mxu0 %v3334
        %3530 = vmatpush1.msra.mxu0 %v3333
        %3531 = vmatprep.subr.mxu0 %v3336
        %3532 = vmatpush1.msra.mxu0 %v3335
        %3533 = vmatprep.subr.mxu0 %v3338
        %3534 = vmatpush1.msra.mxu0 %v3337
        %3535 = vmatprep.subr.mxu0 %v3340
        %3536 = vmatpush1.msra.mxu0 %v3339
        %3537 = vmatprep.subr.mxu0 %v3342
        %3538 = vmatpush1.msra.mxu0 %v3341
        %3539 = vmatprep.subr.mxu0 %v3344
        %3540 = vmatpush1.msra.mxu0 %v3343
        %3541 = vmatprep.subr.mxu0 %v3346
        %3542 = vmatpush1.msra.mxu0 %v3345
        %3543 = vmatprep.subr.mxu0 %v3348
        %3544 = vmatpush1.msra.mxu0 %v3347
        %3545 = vmatprep.subr.mxu0 %v3350
        %3546 = vmatpush1.msra.mxu0 %v3349
        %3547 = vmatprep.subr.mxu0 %v3505
        %3548 = vmatpush1.msra.mxu0 %v3502
        %3549 = vmatprep.subr.mxu0 0.0
        %3550 = vmatpush1.msra.mxu0 0.0
        %3551 = vmatprep.subr.mxu0 0.0
        %3552 = vmatpush1.msra.mxu0 0.0
        %3553 = vmatprep.subr.mxu0 0.0
        %3554 = vmatpush1.msra.mxu0 0.0
        %3555 = vmatprep.subr.mxu0 0.0
        %3556 = vmatpush1.msra.mxu0 0.0
        %3557 = vmatprep.subr.mxu0 0.0
        %3558 = vmatpush1.msra.mxu0 0.0
        %3559 = vmatprep.subr.mxu0 0.0
        %3560 = vmatpush1.msra.mxu0 0.0
        %3561 = vmatprep.subr.mxu0 0.0
        %3562 = vmatpush1.msra.mxu0 0.0
        %3563 = vmatprep.subr.mxu0 0.0
        %3564 = vmatpush1.msra.mxu0 0.0
        %3565 = vmatprep.subr.mxu0 0.0
        %3566 = vmatpush1.msra.mxu0 0.0
        %3567 = vmatprep.subr.mxu0 0.0
        %3568 = vmatpush1.msra.mxu0 0.0
        %3569 = vmatprep.subr.mxu0 0.0
        %3570 = vmatpush1.msra.mxu0 0.0
        %3571 = vmatprep.mubr.f32.mxu0 %v3497
        %3572 = vmatmul.mubr.f32.gmra.mrb[0].mxu0 %v3301
        %v3573 = vpop.f32.mrb[0].mxu0
        %v3574 = vadd.f32 %v3487, %v3573
        %v3575 = vpop.f32.mrb[0].mxu0
        %v3576 = vadd.f32 %v3489, %v3575
        %3577 = vmatprep.mubr.f32.mxu0 %v3499
        %3578 = vmatmul.mubr.f32.gmra.mrb[0].mxu0 %v3307
        %v3579 = vpop.f32.mrb[0].mxu0
        %v3580 = vadd.f32 %v3493, %v3579
        %v3581 = vpop.f32.mrb[0].mxu0
        %v3582 = vadd.f32 %v3495, %v3581
        %3583 = vdwg.mxu0
        %s3584 = scalar_lea.vmem %s5, 672
        %v3585 = vld [vmem:[%s3584] sm:$0xff]
        %v3586 = vld [vmem:[%s3584 + $0x8] sm:$0xff]
        %v3587 = vld [vmem:[%s3584 + $0x10] sm:$0xff]
        %v3588 = vld [vmem:[%s3584 + $0x18] sm:$0xff]
        %v3589 = vld [vmem:[%s3584 + $0x20] sm:$0xff]
        %v3590 = vld [vmem:[%s3584 + $0x28] sm:$0xff]
        %v3591 = vld [vmem:[%s3584 + $0x30] sm:$0xff]
        %v3592 = vld [vmem:[%s3584 + $0x38] sm:$0xff]
        %v3593 = vld [vmem:[%s3584 + $0x40] sm:$0xff]
        %v3594 = vld [vmem:[%s3584 + $0x48] sm:$0xff]
        %v3595 = vld [vmem:[%s3584 + $0x50] sm:$0xff]
        %v3596 = vld [vmem:[%s3584 + $0x58] sm:$0xff]
        %v3597 = vld [vmem:[%s3584 + $0x60] sm:$0xff]
        %v3598 = vld [vmem:[%s3584 + $0x68] sm:$0xff]
        %v3599 = vld [vmem:[%s3584 + $0x70] sm:$0xff]
        %v3600 = vld [vmem:[%s3584 + $0x78] sm:$0xff]
        %v3601 = vld [vmem:[%s3584 + $0x80] sm:$0xff]
        %v3602 = vld [vmem:[%s3584 + $0x88] sm:$0xff]
        %v3603 = vld [vmem:[%s3584 + $0x90] sm:$0xff]
        %v3604 = vld [vmem:[%s3584 + $0x98] sm:$0xff]
        %v3605 = vld [vmem:[%s3584 + $0xa0] sm:$0xff]
        %v3606 = vld [vmem:[%s3584 + $0xa8] sm:$0xff]
        %v3607 = vld [vmem:[%s3584 + $0xb0] sm:$0xff]
        %v3608 = vld [vmem:[%s3584 + $0xb8] sm:$0xff]
        %v3609 = vld [vmem:[%s3584 + $0xc0] sm:$0xff]
        %v3610 = vld [vmem:[%s3584 + $0xc8] sm:$0xff]
        %v3611 = vld [vmem:[%s3584 + $0xd0] sm:$0xff]
        %v3612 = vld [vmem:[%s3584 + $0xd8] sm:$0xff]
        %v3613 = vld [vmem:[%s3584 + $0xe0] sm:$0xff]
        %v3614 = vld [vmem:[%s3584 + $0xe8] sm:$0xff]
        %v3615 = vld [vmem:[%s3584 + $0xf0] sm:$0xff]
        %v3616 = vld [vmem:[%s3584 + $0xf8] sm:$0xff]
        %v3617 = vld [vmem:[%s3584 + $0x100] sm:$0xff]
        %v3618 = vld [vmem:[%s3584 + $0x108] sm:$0xff]
        %v3619 = vld [vmem:[%s3584 + $0x110] sm:$0xff]
        %v3620 = vld [vmem:[%s3584 + $0x118] sm:$0xff]
        %v3621 = vld [vmem:[%s3584 + $0x120] sm:$0xff]
        %v3622 = vld [vmem:[%s3584 + $0x128] sm:$0xff]
        %v3623 = vld [vmem:[%s3584 + $0x130] sm:$0xff]
        %v3624 = vld [vmem:[%s3584 + $0x138] sm:$0xff]
        %v3625 = vld [vmem:[%s3584 + $0x140] sm:$0x3]
        %v3626 = vld [vmem:[%s3584 + $0x148] sm:$0x3]
        %v3627 = vrot.slane %v3301, 2
        %v3628 = vrot.slane %v3307, 2
        %v3629 = vsel %vm1862, %v3627, %v3628
        %v3630 = vrot.slane %v3303, 2
        %v3631 = vrot.slane %v3309, 2
        %v3632 = vsel %vm1862, %v3630, %v3631
        %v3635 = vsel %vm3408, %v3632, 0
        %v3637 = vsel %vm3408, %v3631, 0
        %v3640 = vsel %vm3413, %v3625, 0
        %v3643 = vsel %vm3413, %v3626, 0
        %3645 = vmatprep.subr.mxu0 %v3586
        %3646 = vmatpush1.msra.mxu0 %v3585
        %3647 = vmatprep.subr.mxu0 %v3588
        %3648 = vmatpush1.msra.mxu0 %v3587
        %3649 = vmatprep.subr.mxu0 %v3590
        %3650 = vmatpush1.msra.mxu0 %v3589
        %3651 = vmatprep.subr.mxu0 %v3592
        %3652 = vmatpush1.msra.mxu0 %v3591
        %3653 = vmatprep.subr.mxu0 %v3594
        %3654 = vmatpush1.msra.mxu0 %v3593
        %3655 = vmatprep.subr.mxu0 %v3596
        %3656 = vmatpush1.msra.mxu0 %v3595
        %3657 = vmatprep.subr.mxu0 %v3598
        %3658 = vmatpush1.msra.mxu0 %v3597
        %3659 = vmatprep.subr.mxu0 %v3600
        %3660 = vmatpush1.msra.mxu0 %v3599
        %3661 = vmatprep.subr.mxu0 %v3602
        %3662 = vmatpush1.msra.mxu0 %v3601
        %3663 = vmatprep.subr.mxu0 %v3604
        %3664 = vmatpush1.msra.mxu0 %v3603
        %3665 = vmatprep.subr.mxu0 %v3606
        %3666 = vmatpush1.msra.mxu0 %v3605
        %3667 = vmatprep.subr.mxu0 %v3608
        %3668 = vmatpush1.msra.mxu0 %v3607
        %3669 = vmatprep.subr.mxu0 %v3610
        %3670 = vmatpush1.msra.mxu0 %v3609
        %3671 = vmatprep.subr.mxu0 %v3612
        %3672 = vmatpush1.msra.mxu0 %v3611
        %3673 = vmatprep.subr.mxu0 %v3614
        %3674 = vmatpush1.msra.mxu0 %v3613
        %3675 = vmatprep.subr.mxu0 %v3616
        %3676 = vmatpush1.msra.mxu0 %v3615
        %3677 = vmatprep.subr.mxu0 %v3618
        %3678 = vmatpush1.msra.mxu0 %v3617
        %3679 = vmatprep.subr.mxu0 %v3620
        %3680 = vmatpush1.msra.mxu0 %v3619
        %3681 = vmatprep.subr.mxu0 %v3622
        %3682 = vmatpush1.msra.mxu0 %v3621
        %3683 = vmatprep.subr.mxu0 %v3624
        %3684 = vmatpush1.msra.mxu0 %v3623
        %3685 = vmatprep.subr.mxu0 %v3643
        %3686 = vmatpush1.msra.mxu0 %v3640
        %3687 = vmatprep.subr.mxu0 0.0
        %3688 = vmatpush1.msra.mxu0 0.0
        %3689 = vmatprep.subr.mxu0 0.0
        %3690 = vmatpush1.msra.mxu0 0.0
        %3691 = vmatprep.subr.mxu0 0.0
        %3692 = vmatpush1.msra.mxu0 0.0
        %3693 = vmatprep.subr.mxu0 0.0
        %3694 = vmatpush1.msra.mxu0 0.0
        %3695 = vmatprep.subr.mxu0 0.0
        %3696 = vmatpush1.msra.mxu0 0.0
        %3697 = vmatprep.subr.mxu0 0.0
        %3698 = vmatpush1.msra.mxu0 0.0
        %3699 = vmatprep.subr.mxu0 0.0
        %3700 = vmatpush1.msra.mxu0 0.0
        %3701 = vmatprep.subr.mxu0 0.0
        %3702 = vmatpush1.msra.mxu0 0.0
        %3703 = vmatprep.subr.mxu0 0.0
        %3704 = vmatpush1.msra.mxu0 0.0
        %3705 = vmatprep.subr.mxu0 0.0
        %3706 = vmatpush1.msra.mxu0 0.0
        %3707 = vmatprep.subr.mxu0 0.0
        %3708 = vmatpush1.msra.mxu0 0.0
        %3709 = vmatprep.mubr.f32.mxu0 %v3635
        %3710 = vmatmul.mubr.f32.gmra.mrb[0].mxu0 %v3629
        %v3711 = vpop.f32.mrb[0].mxu0
        %v3712 = vadd.f32 0.0, %v3711
        %v3713 = vpop.f32.mrb[0].mxu0
        %v3714 = vadd.f32 0.0, %v3713
        %3715 = vmatprep.mubr.f32.mxu0 %v3637
        %3716 = vmatmul.mubr.f32.gmra.mrb[0].mxu0 %v3628
        %v3717 = vpop.f32.mrb[0].mxu0
        %v3718 = vadd.f32 0.0, %v3717
        %v3719 = vpop.f32.mrb[0].mxu0
        %v3720 = vadd.f32 0.0, %v3719
        %3721 = vdwg.mxu0
        %v3722 = vadd.f32 %v3574, %v3712
        %v3723 = vadd.f32 %v3576, %v3714
        %v3724 = vadd.f32 %v3580, %v3718
        %v3725 = vadd.f32 %v3582, %v3720
        %s3726 = scalar_lea.vmem %s5, 1008
        %v3727 = vld [vmem:[%s3726] sm:$0xff]
        %v3728 = vld [vmem:[%s3726 + $0x8] sm:$0xff]
        %v3729 = vld [vmem:[%s3726 + $0x10] sm:$0xff]
        %v3730 = vld [vmem:[%s3726 + $0x18] sm:$0xff]
        %v3731 = vld [vmem:[%s3726 + $0x20] sm:$0xff]
        %v3732 = vld [vmem:[%s3726 + $0x28] sm:$0xff]
        %v3733 = vld [vmem:[%s3726 + $0x30] sm:$0xff]
        %v3734 = vld [vmem:[%s3726 + $0x38] sm:$0xff]
        %v3735 = vld [vmem:[%s3726 + $0x40] sm:$0xff]
        %v3736 = vld [vmem:[%s3726 + $0x48] sm:$0xff]
        %v3737 = vld [vmem:[%s3726 + $0x50] sm:$0xff]
        %v3738 = vld [vmem:[%s3726 + $0x58] sm:$0xff]
        %v3739 = vld [vmem:[%s3726 + $0x60] sm:$0xff]
        %v3740 = vld [vmem:[%s3726 + $0x68] sm:$0xff]
        %v3741 = vld [vmem:[%s3726 + $0x70] sm:$0xff]
        %v3742 = vld [vmem:[%s3726 + $0x78] sm:$0xff]
        %v3743 = vld [vmem:[%s3726 + $0x80] sm:$0xff]
        %v3744 = vld [vmem:[%s3726 + $0x88] sm:$0xff]
        %v3745 = vld [vmem:[%s3726 + $0x90] sm:$0xff]
        %v3746 = vld [vmem:[%s3726 + $0x98] sm:$0xff]
        %v3747 = vld [vmem:[%s3726 + $0xa0] sm:$0xff]
        %v3748 = vld [vmem:[%s3726 + $0xa8] sm:$0xff]
        %v3749 = vld [vmem:[%s3726 + $0xb0] sm:$0xff]
        %v3750 = vld [vmem:[%s3726 + $0xb8] sm:$0xff]
        %v3751 = vld [vmem:[%s3726 + $0xc0] sm:$0xff]
        %v3752 = vld [vmem:[%s3726 + $0xc8] sm:$0xff]
        %v3753 = vld [vmem:[%s3726 + $0xd0] sm:$0xff]
        %v3754 = vld [vmem:[%s3726 + $0xd8] sm:$0xff]
        %v3755 = vld [vmem:[%s3726 + $0xe0] sm:$0xff]
        %v3756 = vld [vmem:[%s3726 + $0xe8] sm:$0xff]
        %v3757 = vld [vmem:[%s3726 + $0xf0] sm:$0xff]
        %v3758 = vld [vmem:[%s3726 + $0xf8] sm:$0xff]
        %v3759 = vld [vmem:[%s3726 + $0x100] sm:$0xff]
        %v3760 = vld [vmem:[%s3726 + $0x108] sm:$0xff]
        %v3761 = vld [vmem:[%s3726 + $0x110] sm:$0xff]
        %v3762 = vld [vmem:[%s3726 + $0x118] sm:$0xff]
        %v3763 = vld [vmem:[%s3726 + $0x120] sm:$0xff]
        %v3764 = vld [vmem:[%s3726 + $0x128] sm:$0xff]
        %v3765 = vld [vmem:[%s3726 + $0x130] sm:$0xff]
        %v3766 = vld [vmem:[%s3726 + $0x138] sm:$0xff]
        %v3767 = vld [vmem:[%s3726 + $0x140] sm:$0x3]
        %v3768 = vld [vmem:[%s3726 + $0x148] sm:$0x3]
        %v3769 = vrot.slane %v3301, 3
        %v3770 = vrot.slane %v3307, 3
        %v3771 = vsel %vm2268, %v3769, %v3770
        %v3772 = vrot.slane %v3303, 3
        %v3773 = vrot.slane %v3309, 3
        %v3774 = vsel %vm2268, %v3772, %v3773
        %v3777 = vsel %vm3408, %v3774, 0
        %v3779 = vsel %vm3408, %v3773, 0
        %v3782 = vsel %vm3413, %v3767, 0
        %v3785 = vsel %vm3413, %v3768, 0
        %3787 = vmatprep.subr.mxu0 %v3728
        %3788 = vmatpush1.msra.mxu0 %v3727
        %3789 = vmatprep.subr.mxu0 %v3730
        %3790 = vmatpush1.msra.mxu0 %v3729
        %3791 = vmatprep.subr.mxu0 %v3732
        %3792 = vmatpush1.msra.mxu0 %v3731
        %3793 = vmatprep.subr.mxu0 %v3734
        %3794 = vmatpush1.msra.mxu0 %v3733
        %3795 = vmatprep.subr.mxu0 %v3736
        %3796 = vmatpush1.msra.mxu0 %v3735
        %3797 = vmatprep.subr.mxu0 %v3738
        %3798 = vmatpush1.msra.mxu0 %v3737
        %3799 = vmatprep.subr.mxu0 %v3740
        %3800 = vmatpush1.msra.mxu0 %v3739
        %3801 = vmatprep.subr.mxu0 %v3742
        %3802 = vmatpush1.msra.mxu0 %v3741
        %3803 = vmatprep.subr.mxu0 %v3744
        %3804 = vmatpush1.msra.mxu0 %v3743
        %3805 = vmatprep.subr.mxu0 %v3746
        %3806 = vmatpush1.msra.mxu0 %v3745
        %3807 = vmatprep.subr.mxu0 %v3748
        %3808 = vmatpush1.msra.mxu0 %v3747
        %3809 = vmatprep.subr.mxu0 %v3750
        %3810 = vmatpush1.msra.mxu0 %v3749
        %3811 = vmatprep.subr.mxu0 %v3752
        %3812 = vmatpush1.msra.mxu0 %v3751
        %3813 = vmatprep.subr.mxu0 %v3754
        %3814 = vmatpush1.msra.mxu0 %v3753
        %3815 = vmatprep.subr.mxu0 %v3756
        %3816 = vmatpush1.msra.mxu0 %v3755
        %3817 = vmatprep.subr.mxu0 %v3758
        %3818 = vmatpush1.msra.mxu0 %v3757
        %3819 = vmatprep.subr.mxu0 %v3760
        %3820 = vmatpush1.msra.mxu0 %v3759
        %3821 = vmatprep.subr.mxu0 %v3762
        %3822 = vmatpush1.msra.mxu0 %v3761
        %3823 = vmatprep.subr.mxu0 %v3764
        %3824 = vmatpush1.msra.mxu0 %v3763
        %3825 = vmatprep.subr.mxu0 %v3766
        %3826 = vmatpush1.msra.mxu0 %v3765
        %3827 = vmatprep.subr.mxu0 %v3785
        %3828 = vmatpush1.msra.mxu0 %v3782
        %3829 = vmatprep.subr.mxu0 0.0
        %3830 = vmatpush1.msra.mxu0 0.0
        %3831 = vmatprep.subr.mxu0 0.0
        %3832 = vmatpush1.msra.mxu0 0.0
        %3833 = vmatprep.subr.mxu0 0.0
        %3834 = vmatpush1.msra.mxu0 0.0
        %3835 = vmatprep.subr.mxu0 0.0
        %3836 = vmatpush1.msra.mxu0 0.0
        %3837 = vmatprep.subr.mxu0 0.0
        %3838 = vmatpush1.msra.mxu0 0.0
        %3839 = vmatprep.subr.mxu0 0.0
        %3840 = vmatpush1.msra.mxu0 0.0
        %3841 = vmatprep.subr.mxu0 0.0
        %3842 = vmatpush1.msra.mxu0 0.0
        %3843 = vmatprep.subr.mxu0 0.0
        %3844 = vmatpush1.msra.mxu0 0.0
        %3845 = vmatprep.subr.mxu0 0.0
        %3846 = vmatpush1.msra.mxu0 0.0
        %3847 = vmatprep.subr.mxu0 0.0
        %3848 = vmatpush1.msra.mxu0 0.0
        %3849 = vmatprep.subr.mxu0 0.0
        %3850 = vmatpush1.msra.mxu0 0.0
        %3851 = vmatprep.mubr.f32.mxu0 %v3777
        %3852 = vmatmul.mubr.f32.gmra.mrb[0].mxu0 %v3771
        %v3853 = vpop.f32.mrb[0].mxu0
        %v3854 = vadd.f32 0.0, %v3853
        %v3855 = vpop.f32.mrb[0].mxu0
        %v3856 = vadd.f32 0.0, %v3855
        %3857 = vmatprep.mubr.f32.mxu0 %v3779
        %3858 = vmatmul.mubr.f32.gmra.mrb[0].mxu0 %v3770
        %v3859 = vpop.f32.mrb[0].mxu0
        %v3860 = vadd.f32 0.0, %v3859
        %v3861 = vpop.f32.mrb[0].mxu0
        %v3862 = vadd.f32 0.0, %v3861
        %3863 = vdwg.mxu0
        %v3864 = vadd.f32 %v3722, %v3854
        %v3865 = vadd.f32 %v3723, %v3856
        %v3866 = vadd.f32 %v3724, %v3860
        %v3867 = vadd.f32 %v3725, %v3862
        %s3868 = scalar_lea.vmem %s5, 1344
        %v3869 = vld [vmem:[%s3868] sm:$0xff]
        %v3870 = vld [vmem:[%s3868 + $0x8] sm:$0xff]
        %v3871 = vld [vmem:[%s3868 + $0x10] sm:$0xff]
        %v3872 = vld [vmem:[%s3868 + $0x18] sm:$0xff]
        %v3873 = vld [vmem:[%s3868 + $0x20] sm:$0xff]
        %v3874 = vld [vmem:[%s3868 + $0x28] sm:$0xff]
        %v3875 = vld [vmem:[%s3868 + $0x30] sm:$0xff]
        %v3876 = vld [vmem:[%s3868 + $0x38] sm:$0xff]
        %v3877 = vld [vmem:[%s3868 + $0x40] sm:$0xff]
        %v3878 = vld [vmem:[%s3868 + $0x48] sm:$0xff]
        %v3879 = vld [vmem:[%s3868 + $0x50] sm:$0xff]
        %v3880 = vld [vmem:[%s3868 + $0x58] sm:$0xff]
        %v3881 = vld [vmem:[%s3868 + $0x60] sm:$0xff]
        %v3882 = vld [vmem:[%s3868 + $0x68] sm:$0xff]
        %v3883 = vld [vmem:[%s3868 + $0x70] sm:$0xff]
        %v3884 = vld [vmem:[%s3868 + $0x78] sm:$0xff]
        %v3885 = vld [vmem:[%s3868 + $0x80] sm:$0xff]
        %v3886 = vld [vmem:[%s3868 + $0x88] sm:$0xff]
        %v3887 = vld [vmem:[%s3868 + $0x90] sm:$0xff]
        %v3888 = vld [vmem:[%s3868 + $0x98] sm:$0xff]
        %v3889 = vld [vmem:[%s3868 + $0xa0] sm:$0xff]
        %v3890 = vld [vmem:[%s3868 + $0xa8] sm:$0xff]
        %v3891 = vld [vmem:[%s3868 + $0xb0] sm:$0xff]
        %v3892 = vld [vmem:[%s3868 + $0xb8] sm:$0xff]
        %v3893 = vld [vmem:[%s3868 + $0xc0] sm:$0xff]
        %v3894 = vld [vmem:[%s3868 + $0xc8] sm:$0xff]
        %v3895 = vld [vmem:[%s3868 + $0xd0] sm:$0xff]
        %v3896 = vld [vmem:[%s3868 + $0xd8] sm:$0xff]
        %v3897 = vld [vmem:[%s3868 + $0xe0] sm:$0xff]
        %v3898 = vld [vmem:[%s3868 + $0xe8] sm:$0xff]
        %v3899 = vld [vmem:[%s3868 + $0xf0] sm:$0xff]
        %v3900 = vld [vmem:[%s3868 + $0xf8] sm:$0xff]
        %v3901 = vld [vmem:[%s3868 + $0x100] sm:$0xff]
        %v3902 = vld [vmem:[%s3868 + $0x108] sm:$0xff]
        %v3903 = vld [vmem:[%s3868 + $0x110] sm:$0xff]
        %v3904 = vld [vmem:[%s3868 + $0x118] sm:$0xff]
        %v3905 = vld [vmem:[%s3868 + $0x120] sm:$0xff]
        %v3906 = vld [vmem:[%s3868 + $0x128] sm:$0xff]
        %v3907 = vld [vmem:[%s3868 + $0x130] sm:$0xff]
        %v3908 = vld [vmem:[%s3868 + $0x138] sm:$0xff]
        %v3909 = vld [vmem:[%s3868 + $0x140] sm:$0x3]
        %v3910 = vld [vmem:[%s3868 + $0x148] sm:$0x3]
        %v3911 = vrot.slane %v3301, 4
        %v3912 = vrot.slane %v3307, 4
        %v3913 = vsel %vm2674, %v3911, %v3912
        %v3914 = vrot.slane %v3303, 4
        %v3915 = vrot.slane %v3309, 4
        %v3916 = vsel %vm2674, %v3914, %v3915
        %v3919 = vsel %vm3408, %v3916, 0
        %v3921 = vsel %vm3408, %v3915, 0
        %v3924 = vsel %vm3413, %v3909, 0
        %v3927 = vsel %vm3413, %v3910, 0
        %3929 = vmatprep.subr.mxu0 %v3870
        %3930 = vmatpush1.msra.mxu0 %v3869
        %3931 = vmatprep.subr.mxu0 %v3872
        %3932 = vmatpush1.msra.mxu0 %v3871
        %3933 = vmatprep.subr.mxu0 %v3874
        %3934 = vmatpush1.msra.mxu0 %v3873
        %3935 = vmatprep.subr.mxu0 %v3876
        %3936 = vmatpush1.msra.mxu0 %v3875
        %3937 = vmatprep.subr.mxu0 %v3878
        %3938 = vmatpush1.msra.mxu0 %v3877
        %3939 = vmatprep.subr.mxu0 %v3880
        %3940 = vmatpush1.msra.mxu0 %v3879
        %3941 = vmatprep.subr.mxu0 %v3882
        %3942 = vmatpush1.msra.mxu0 %v3881
        %3943 = vmatprep.subr.mxu0 %v3884
        %3944 = vmatpush1.msra.mxu0 %v3883
        %3945 = vmatprep.subr.mxu0 %v3886
        %3946 = vmatpush1.msra.mxu0 %v3885
        %3947 = vmatprep.subr.mxu0 %v3888
        %3948 = vmatpush1.msra.mxu0 %v3887
        %3949 = vmatprep.subr.mxu0 %v3890
        %3950 = vmatpush1.msra.mxu0 %v3889
        %3951 = vmatprep.subr.mxu0 %v3892
        %3952 = vmatpush1.msra.mxu0 %v3891
        %3953 = vmatprep.subr.mxu0 %v3894
        %3954 = vmatpush1.msra.mxu0 %v3893
        %3955 = vmatprep.subr.mxu0 %v3896
        %3956 = vmatpush1.msra.mxu0 %v3895
        %3957 = vmatprep.subr.mxu0 %v3898
        %3958 = vmatpush1.msra.mxu0 %v3897
        %3959 = vmatprep.subr.mxu0 %v3900
        %3960 = vmatpush1.msra.mxu0 %v3899
        %3961 = vmatprep.subr.mxu0 %v3902
        %3962 = vmatpush1.msra.mxu0 %v3901
        %3963 = vmatprep.subr.mxu0 %v3904
        %3964 = vmatpush1.msra.mxu0 %v3903
        %3965 = vmatprep.subr.mxu0 %v3906
        %3966 = vmatpush1.msra.mxu0 %v3905
        %3967 = vmatprep.subr.mxu0 %v3908
        %3968 = vmatpush1.msra.mxu0 %v3907
        %3969 = vmatprep.subr.mxu0 %v3927
        %3970 = vmatpush1.msra.mxu0 %v3924
        %3971 = vmatprep.subr.mxu0 0.0
        %3972 = vmatpush1.msra.mxu0 0.0
        %3973 = vmatprep.subr.mxu0 0.0
        %3974 = vmatpush1.msra.mxu0 0.0
        %3975 = vmatprep.subr.mxu0 0.0
        %3976 = vmatpush1.msra.mxu0 0.0
        %3977 = vmatprep.subr.mxu0 0.0
        %3978 = vmatpush1.msra.mxu0 0.0
        %3979 = vmatprep.subr.mxu0 0.0
        %3980 = vmatpush1.msra.mxu0 0.0
        %3981 = vmatprep.subr.mxu0 0.0
        %3982 = vmatpush1.msra.mxu0 0.0
        %3983 = vmatprep.subr.mxu0 0.0
        %3984 = vmatpush1.msra.mxu0 0.0
        %3985 = vmatprep.subr.mxu0 0.0
        %3986 = vmatpush1.msra.mxu0 0.0
        %3987 = vmatprep.subr.mxu0 0.0
        %3988 = vmatpush1.msra.mxu0 0.0
        %3989 = vmatprep.subr.mxu0 0.0
        %3990 = vmatpush1.msra.mxu0 0.0
        %3991 = vmatprep.subr.mxu0 0.0
        %3992 = vmatpush1.msra.mxu0 0.0
        %3993 = vmatprep.mubr.f32.mxu0 %v3919
        %3994 = vmatmul.mubr.f32.gmra.mrb[0].mxu0 %v3913
        %v3995 = vpop.f32.mrb[0].mxu0
        %v3996 = vadd.f32 0.0, %v3995
        %v3997 = vpop.f32.mrb[0].mxu0
        %v3998 = vadd.f32 0.0, %v3997
        %3999 = vmatprep.mubr.f32.mxu0 %v3921
        %4000 = vmatmul.mubr.f32.gmra.mrb[0].mxu0 %v3912
        %v4001 = vpop.f32.mrb[0].mxu0
        %v4002 = vadd.f32 0.0, %v4001
        %v4003 = vpop.f32.mrb[0].mxu0
        %v4004 = vadd.f32 0.0, %v4003
        %4005 = vdwg.mxu0
        %v4006 = vadd.f32 %v3864, %v3996
        %v4007 = vadd.f32 %v3865, %v3998
        %v4008 = vadd.f32 %v3866, %v4002
        %v4009 = vadd.f32 %v3867, %v4004
        %v4010 = vld [vmem:[%s6] sm:$0x3]
        %v4012 = vlaneseq
        %v4013 = vshrl.u32 %v4012, 7
        %v4014 = vsub.s32 0, %v4013
        %v4015 = vrot.slane %v4010, %v4014
        %v4016 = vlaneseq
        %v4017 = vshrl.u32 %v4016, 7
        %v4018 = vsub.s32 1, %v4017
        %v4019 = vrot.slane %v4010, %v4018
        %v4022 = vadd.f32 %v4006, %v4015
        %v4023 = vadd.f32 %v4007, %v4019
        %v4024 = vadd.f32 %v4008, %v4015
        %v4025 = vadd.f32 %v4009, %v4019
        %v4026 = vmax.f32 %v4022, 0.0
        %v4027 = vmax.f32 %v4023, 0.0
        %v4028 = vmax.f32 %v4024, 0.0
        %v4029 = vmax.f32 %v4025, 0.0
        %4030 = vst [vmem:[#allocation3] sm:$0xff] %v4026
        %vm4031 = vcmask 261120
        %4032 = vst.msk [vmem:[#allocation3 + $0x8] sm:$0xff] %vm4031, %v4027
        %4033 = vst [vmem:[#allocation3 + $0x10] sm:$0x3] %v4028
        %vm4034 = vcmask 254976
        %4035 = vst.msk [vmem:[#allocation3 + $0x18] sm:$0x3] %vm4034, %v4029
        %v4036 = vld [vmem:[#allocation3] sm:$0xff]
        %v4037 = vld [vmem:[#allocation3 + $0x8] sm:$0xff]
        %v4038 = vld [vmem:[#allocation3 + $0x10] sm:$0x1]
        %v4039 = vld [vmem:[#allocation3 + $0x18] sm:$0x1]
        %v4040 = vld [vmem:[#allocation3] sm:$0xfe]
        %v4041 = vld [vmem:[#allocation3 + $0x8] sm:$0xfe]
        %v4042 = vld [vmem:[#allocation3 + $0x10] sm:$0x3]
        %v4043 = vld [vmem:[#allocation3 + $0x18] sm:$0x3]
        %4048 = vrot.lane.b32.xlu0 %v4036, 112
        %v4049 = vpop.permute.xlu0 %4048
        %4050 = vrot.lane.b32.xlu0 %v4037, 112
        %v4051 = vpop.permute.xlu0 %4050
        %4052 = vrot.lane.b32.xlu0 %v4038, 112
        %v4053 = vpop.permute.xlu0 %4052
        %4054 = vrot.lane.b32.xlu0 %v4039, 112
        %v4055 = vpop.permute.xlu0 %4054
        %vm4056 = vcmask 916480
        %v4057 = vsel %vm4056, %v4049, %v4051
        %v4058 = vsel %vm4056, %v4053, %v4055
        %v4063 = vmax.f32 %v4036, %v4057
        %v4064 = vmax.f32 %v4037, %v4051
        %v4065 = vmax.f32 %v4038, %v4058
        %v4066 = vmax.f32 %v4039, %v4055
        %4071 = vrot.lane.b32.xlu0 %v4040, 112
        %v4072 = vpop.permute.xlu0 %4071
        %4073 = vrot.lane.b32.xlu0 %v4041, 112
        %v4074 = vpop.permute.xlu0 %4073
        %4075 = vrot.lane.b32.xlu0 %v4042, 112
        %v4076 = vpop.permute.xlu0 %4075
        %4077 = vrot.lane.b32.xlu0 %v4043, 112
        %v4078 = vpop.permute.xlu0 %4077
        %v4079 = vsel %vm4056, %v4072, %v4074
        %v4080 = vsel %vm4056, %v4076, %v4078
        %v4085 = vmax.f32 %v4040, %v4079
        %v4086 = vmax.f32 %v4041, %v4074
        %v4087 = vmax.f32 %v4042, %v4080
        %v4088 = vmax.f32 %v4043, %v4078
        %v4093 = vrot.slane %v4085, 1
        %v4094 = vrot.slane %v4087, 1
        %v4095 = vsel %vm586, %v4093, %v4094
        %v4096 = vrot.slane %v4086, 1
        %v4097 = vrot.slane %v4088, 1
        %v4098 = vsel %vm586, %v4096, %v4097
        %v4103 = vmax.f32 %v4063, %v4095
        %v4104 = vmax.f32 %v4064, %v4098
        %v4105 = vmax.f32 %v4065, %v4094
        %v4106 = vmax.f32 %v4066, %v4097
        %v4107 = vld [vmem:[%s7] sm:$0x1f]
        %vm4108 = vcmask 72704
        %v4110 = vsel %vm4108, %v4107, 0
        %vm4112 = vcmask 1040384
        %v4114 = vsel %vm4112, %v4105, 0
        %v4117 = vsel %vm4112, %v4106, 0
        %4119 = vmatprep.subr.mxu0 %v4104
        %4120 = vmatpush1.msra.mxu0 %v4103
        %4121 = vmatprep.subr.mxu0 %v4117
        %4122 = vmatpush1.msra.mxu0 %v4114
        %4123 = vmatprep.subr.mxu0 0.0
        %4124 = vmatpush1.msra.mxu0 0.0
        %4125 = vmatprep.subr.mxu0 0.0
        %4126 = vmatpush1.msra.mxu0 0.0
        %4127 = vmatprep.subr.mxu0 0.0
        %4128 = vmatpush1.msra.mxu0 0.0
        %4129 = vmatprep.subr.mxu0 0.0
        %4130 = vmatpush1.msra.mxu0 0.0
        %4131 = vmatprep.subr.mxu0 0.0
        %4132 = vmatpush1.msra.mxu0 0.0
        %4133 = vmatprep.subr.mxu0 0.0
        %4134 = vmatpush1.msra.mxu0 0.0
        %4135 = vmatprep.subr.mxu0 0.0
        %4136 = vmatpush1.msra.mxu0 0.0
        %4137 = vmatprep.subr.mxu0 0.0
        %4138 = vmatpush1.msra.mxu0 0.0
        %4139 = vmatprep.subr.mxu0 0.0
        %4140 = vmatpush1.msra.mxu0 0.0
        %4141 = vmatprep.subr.mxu0 0.0
        %4142 = vmatpush1.msra.mxu0 0.0
        %4143 = vmatprep.subr.mxu0 0.0
        %4144 = vmatpush1.msra.mxu0 0.0
        %4145 = vmatprep.subr.mxu0 0.0
        %4146 = vmatpush1.msra.mxu0 0.0
        %4147 = vmatprep.subr.mxu0 0.0
        %4148 = vmatpush1.msra.mxu0 0.0
        %4149 = vmatprep.subr.mxu0 0.0
        %4150 = vmatpush1.msra.mxu0 0.0
        %4151 = vmatprep.subr.mxu0 0.0
        %4152 = vmatpush1.msra.mxu0 0.0
        %4153 = vmatprep.subr.mxu0 0.0
        %4154 = vmatpush1.msra.mxu0 0.0
        %4155 = vmatprep.subr.mxu0 0.0
        %4156 = vmatpush1.msra.mxu0 0.0
        %4157 = vmatprep.subr.mxu0 0.0
        %4158 = vmatpush1.msra.mxu0 0.0
        %4159 = vmatprep.subr.mxu0 0.0
        %4160 = vmatpush1.msra.mxu0 0.0
        %4161 = vmatprep.subr.mxu0 0.0
        %4162 = vmatpush1.msra.mxu0 0.0
        %4163 = vmatprep.subr.mxu0 0.0
        %4164 = vmatpush1.msra.mxu0 0.0
        %4165 = vmatprep.subr.mxu0 0.0
        %4166 = vmatpush1.msra.mxu0 0.0
        %4167 = vmatprep.subr.mxu0 0.0
        %4168 = vmatpush1.msra.mxu0 0.0
        %4169 = vmatprep.subr.mxu0 0.0
        %4170 = vmatpush1.msra.mxu0 0.0
        %4171 = vmatprep.subr.mxu0 0.0
        %4172 = vmatpush1.msra.mxu0 0.0
        %4173 = vmatprep.subr.mxu0 0.0
        %4174 = vmatpush1.msra.mxu0 0.0
        %4175 = vmatprep.subr.mxu0 0.0
        %4176 = vmatpush1.msra.mxu0 0.0
        %4177 = vmatprep.subr.mxu0 0.0
        %4178 = vmatpush1.msra.mxu0 0.0
        %4179 = vmatprep.subr.mxu0 0.0
        %4180 = vmatpush1.msra.mxu0 0.0
        %4181 = vmatprep.subr.mxu0 0.0
        %4182 = vmatpush1.msra.mxu0 0.0
        %4183 = vmatprep.mubr.f32.mxu0 0.0
        %4184 = vmatmul.mubr.f32.gmra.mrb[0].mxu0 %v4110
        %v4185 = vpop.f32.mrb[0].mxu0
        %v4186 = vadd.f32 0.0, %v4185
        %v4187 = vpop.f32.mrb[0].mxu0
        %v4188 = vadd.f32 0.0, %v4187
        %4189 = vdwg.mxu0
        %v4190 = vld [vmem:[%s8] sm:$0xff]
        %v4191 = vld [vmem:[%s8 + $0x8] sm:$0xff]
        %v4192 = vld [vmem:[%s8 + $0x10] sm:$0xff]
        %v4193 = vld [vmem:[%s8 + $0x18] sm:$0xff]
        %v4194 = vld [vmem:[%s8 + $0x20] sm:$0xff]
        %v4195 = vld [vmem:[%s8 + $0x28] sm:$0xff]
        %v4196 = vld [vmem:[%s8 + $0x30] sm:$0xff]
        %v4197 = vld [vmem:[%s8 + $0x38] sm:$0xff]
        %v4198 = vld [vmem:[%s8 + $0x40] sm:$0xff]
        %v4199 = vld [vmem:[%s8 + $0x48] sm:$0xff]
        %v4200 = vld [vmem:[%s8 + $0x50] sm:$0xff]
        %v4201 = vld [vmem:[%s8 + $0x58] sm:$0xff]
        %v4202 = vld [vmem:[%s8 + $0x60] sm:$0xff]
        %v4203 = vld [vmem:[%s8 + $0x68] sm:$0xff]
        %v4204 = vld [vmem:[%s8 + $0x70] sm:$0xff]
        %v4205 = vld [vmem:[%s8 + $0x78] sm:$0xff]
        %v4206 = vld [vmem:[%s8 + $0x80] sm:$0xff]
        %v4207 = vld [vmem:[%s8 + $0x88] sm:$0xff]
        %s4208 = scalar_lea.vmem %s8, 144
        %v4209 = vld [vmem:[%s4208] sm:$0xff]
        %v4210 = vld [vmem:[%s4208 + $0x8] sm:$0xff]
        %v4211 = vld [vmem:[%s4208 + $0x10] sm:$0xff]
        %v4212 = vld [vmem:[%s4208 + $0x18] sm:$0xff]
        %v4213 = vld [vmem:[%s4208 + $0x20] sm:$0xff]
        %v4214 = vld [vmem:[%s4208 + $0x28] sm:$0xff]
        %v4215 = vld [vmem:[%s4208 + $0x30] sm:$0xff]
        %v4216 = vld [vmem:[%s4208 + $0x38] sm:$0xff]
        %v4217 = vld [vmem:[%s4208 + $0x40] sm:$0xff]
        %v4218 = vld [vmem:[%s4208 + $0x48] sm:$0xff]
        %v4219 = vld [vmem:[%s4208 + $0x50] sm:$0xff]
        %v4220 = vld [vmem:[%s4208 + $0x58] sm:$0xff]
        %v4221 = vld [vmem:[%s4208 + $0x60] sm:$0xff]
        %v4222 = vld [vmem:[%s4208 + $0x68] sm:$0xff]
        %v4223 = vld [vmem:[%s4208 + $0x70] sm:$0xff]
        %v4224 = vld [vmem:[%s4208 + $0x78] sm:$0xff]
        %v4225 = vld [vmem:[%s4208 + $0x80] sm:$0xff]
        %v4226 = vld [vmem:[%s4208 + $0x88] sm:$0xff]
        %v4229 = vrot.slane %v4186, 1
        %v4230 = vrot.slane %v4188, 1
        %vm4232 = vcmask 130048
        %v4233 = vsel %vm4232, %v4230, 0
        %4235 = vmatprep.subr.mxu0 0.0
        %4236 = vmatpush1.msra.mxu0 %v4209
        %4237 = vmatprep.subr.mxu0 0.0
        %4238 = vmatpush1.msra.mxu0 %v4210
        %4239 = vmatprep.subr.mxu0 0.0
        %4240 = vmatpush1.msra.mxu0 %v4211
        %4241 = vmatprep.subr.mxu0 0.0
        %4242 = vmatpush1.msra.mxu0 %v4212
        %4243 = vmatprep.subr.mxu0 0.0
        %4244 = vmatpush1.msra.mxu0 %v4213
        %4245 = vmatprep.subr.mxu0 0.0
        %4246 = vmatpush1.msra.mxu0 %v4214
        %4247 = vmatprep.subr.mxu0 0.0
        %4248 = vmatpush1.msra.mxu0 %v4215
        %4249 = vmatprep.subr.mxu0 0.0
        %4250 = vmatpush1.msra.mxu0 %v4216
        %4251 = vmatprep.subr.mxu0 0.0
        %4252 = vmatpush1.msra.mxu0 %v4217
        %4253 = vmatprep.subr.mxu0 0.0
        %4254 = vmatpush1.msra.mxu0 %v4218
        %4255 = vmatprep.subr.mxu0 0.0
        %4256 = vmatpush1.msra.mxu0 %v4219
        %4257 = vmatprep.subr.mxu0 0.0
        %4258 = vmatpush1.msra.mxu0 %v4220
        %4259 = vmatprep.subr.mxu0 0.0
        %4260 = vmatpush1.msra.mxu0 %v4221
        %4261 = vmatprep.subr.mxu0 0.0
        %4262 = vmatpush1.msra.mxu0 %v4222
        %4263 = vmatprep.subr.mxu0 0.0
        %4264 = vmatpush1.msra.mxu0 %v4223
        %4265 = vmatprep.subr.mxu0 0.0
        %4266 = vmatpush1.msra.mxu0 %v4224
        %4267 = vmatprep.subr.mxu0 0.0
        %4268 = vmatpush1.msra.mxu0 %v4225
        %4269 = vmatprep.subr.mxu0 0.0
        %4270 = vmatpush1.msra.mxu0 %v4226
        %4271 = vmatprep.subr.mxu0 0.0
        %4272 = vmatpush1.msra.mxu0 0.0
        %4273 = vmatprep.subr.mxu0 0.0
        %4274 = vmatpush1.msra.mxu0 0.0
        %4275 = vmatprep.subr.mxu0 0.0
        %4276 = vmatpush1.msra.mxu0 0.0
        %4277 = vmatprep.subr.mxu0 0.0
        %4278 = vmatpush1.msra.mxu0 0.0
        %4279 = vmatprep.subr.mxu0 0.0
        %4280 = vmatpush1.msra.mxu0 0.0
        %4281 = vmatprep.subr.mxu0 0.0
        %4282 = vmatpush1.msra.mxu0 0.0
        %4283 = vmatprep.subr.mxu0 0.0
        %4284 = vmatpush1.msra.mxu0 0.0
        %4285 = vmatprep.subr.mxu0 0.0
        %4286 = vmatpush1.msra.mxu0 0.0
        %4287 = vmatprep.subr.mxu0 0.0
        %4288 = vmatpush1.msra.mxu0 0.0
        %4289 = vmatprep.subr.mxu0 0.0
        %4290 = vmatpush1.msra.mxu0 0.0
        %4291 = vmatprep.subr.mxu0 0.0
        %4292 = vmatpush1.msra.mxu0 0.0
        %4293 = vmatprep.subr.mxu0 0.0
        %4294 = vmatpush1.msra.mxu0 0.0
        %4295 = vmatprep.subr.mxu0 0.0
        %4296 = vmatpush1.msra.mxu0 0.0
        %4297 = vmatprep.subr.mxu0 0.0
        %4298 = vmatpush1.msra.mxu0 0.0
        %4299 = vmatprep.mubr.f32.mxu0 %v4233
        %4300 = vmatmul.mubr.f32.gmra.mrb[0].mxu0 %v4229
        %v4301 = vpop.f32.mrb[0].mxu0
        %v4302 = vadd.f32 0.0, %v4301
        %v4303 = vpop.f32.mrb[0].mxu0
        %4304 = vdwg.mxu0
        %v4305 = vsel %vm4232, %v4188, 0
        %4307 = vmatprep.subr.mxu0 0.0
        %4308 = vmatpush1.msra.mxu0 %v4190
        %4309 = vmatprep.subr.mxu0 0.0
        %4310 = vmatpush1.msra.mxu0 %v4191
        %4311 = vmatprep.subr.mxu0 0.0
        %4312 = vmatpush1.msra.mxu0 %v4192
        %4313 = vmatprep.subr.mxu0 0.0
        %4314 = vmatpush1.msra.mxu0 %v4193
        %4315 = vmatprep.subr.mxu0 0.0
        %4316 = vmatpush1.msra.mxu0 %v4194
        %4317 = vmatprep.subr.mxu0 0.0
        %4318 = vmatpush1.msra.mxu0 %v4195
        %4319 = vmatprep.subr.mxu0 0.0
        %4320 = vmatpush1.msra.mxu0 %v4196
        %4321 = vmatprep.subr.mxu0 0.0
        %4322 = vmatpush1.msra.mxu0 %v4197
        %4323 = vmatprep.subr.mxu0 0.0
        %4324 = vmatpush1.msra.mxu0 %v4198
        %4325 = vmatprep.subr.mxu0 0.0
        %4326 = vmatpush1.msra.mxu0 %v4199
        %4327 = vmatprep.subr.mxu0 0.0
        %4328 = vmatpush1.msra.mxu0 %v4200
        %4329 = vmatprep.subr.mxu0 0.0
        %4330 = vmatpush1.msra.mxu0 %v4201
        %4331 = vmatprep.subr.mxu0 0.0
        %4332 = vmatpush1.msra.mxu0 %v4202
        %4333 = vmatprep.subr.mxu0 0.0
        %4334 = vmatpush1.msra.mxu0 %v4203
        %4335 = vmatprep.subr.mxu0 0.0
        %4336 = vmatpush1.msra.mxu0 %v4204
        %4337 = vmatprep.subr.mxu0 0.0
        %4338 = vmatpush1.msra.mxu0 %v4205
        %4339 = vmatprep.subr.mxu0 0.0
        %4340 = vmatpush1.msra.mxu0 %v4206
        %4341 = vmatprep.subr.mxu0 0.0
        %4342 = vmatpush1.msra.mxu0 %v4207
        %4343 = vmatprep.subr.mxu0 0.0
        %4344 = vmatpush1.msra.mxu0 0.0
        %4345 = vmatprep.subr.mxu0 0.0
        %4346 = vmatpush1.msra.mxu0 0.0
        %4347 = vmatprep.subr.mxu0 0.0
        %4348 = vmatpush1.msra.mxu0 0.0
        %4349 = vmatprep.subr.mxu0 0.0
        %4350 = vmatpush1.msra.mxu0 0.0
        %4351 = vmatprep.subr.mxu0 0.0
        %4352 = vmatpush1.msra.mxu0 0.0
        %4353 = vmatprep.subr.mxu0 0.0
        %4354 = vmatpush1.msra.mxu0 0.0
        %4355 = vmatprep.subr.mxu0 0.0
        %4356 = vmatpush1.msra.mxu0 0.0
        %4357 = vmatprep.subr.mxu0 0.0
        %4358 = vmatpush1.msra.mxu0 0.0
        %4359 = vmatprep.subr.mxu0 0.0
        %4360 = vmatpush1.msra.mxu0 0.0
        %4361 = vmatprep.subr.mxu0 0.0
        %4362 = vmatpush1.msra.mxu0 0.0
        %4363 = vmatprep.subr.mxu0 0.0
        %4364 = vmatpush1.msra.mxu0 0.0
        %4365 = vmatprep.subr.mxu0 0.0
        %4366 = vmatpush1.msra.mxu0 0.0
        %4367 = vmatprep.subr.mxu0 0.0
        %4368 = vmatpush1.msra.mxu0 0.0
        %4369 = vmatprep.subr.mxu0 0.0
        %4370 = vmatpush1.msra.mxu0 0.0
        %4371 = vmatprep.mubr.f32.mxu0 %v4305
        %4372 = vmatmul.mubr.f32.gmra.mrb[0].mxu0 %v4186
        %v4373 = vpop.f32.mrb[0].mxu0
        %v4374 = vadd.f32 %v4302, %v4373
        %v4375 = vpop.f32.mrb[0].mxu0
        %4376 = vdwg.mxu0
        %s4377 = scalar_lea.vmem %s8, 288
        %v4378 = vld [vmem:[%s4377] sm:$0xff]
        %v4379 = vld [vmem:[%s4377 + $0x8] sm:$0xff]
        %v4380 = vld [vmem:[%s4377 + $0x10] sm:$0xff]
        %v4381 = vld [vmem:[%s4377 + $0x18] sm:$0xff]
        %v4382 = vld [vmem:[%s4377 + $0x20] sm:$0xff]
        %v4383 = vld [vmem:[%s4377 + $0x28] sm:$0xff]
        %v4384 = vld [vmem:[%s4377 + $0x30] sm:$0xff]
        %v4385 = vld [vmem:[%s4377 + $0x38] sm:$0xff]
        %v4386 = vld [vmem:[%s4377 + $0x40] sm:$0xff]
        %v4387 = vld [vmem:[%s4377 + $0x48] sm:$0xff]
        %v4388 = vld [vmem:[%s4377 + $0x50] sm:$0xff]
        %v4389 = vld [vmem:[%s4377 + $0x58] sm:$0xff]
        %v4390 = vld [vmem:[%s4377 + $0x60] sm:$0xff]
        %v4391 = vld [vmem:[%s4377 + $0x68] sm:$0xff]
        %v4392 = vld [vmem:[%s4377 + $0x70] sm:$0xff]
        %v4393 = vld [vmem:[%s4377 + $0x78] sm:$0xff]
        %v4394 = vld [vmem:[%s4377 + $0x80] sm:$0xff]
        %v4395 = vld [vmem:[%s4377 + $0x88] sm:$0xff]
        %v4396 = vrot.slane %v4186, 2
        %v4397 = vrot.slane %v4188, 2
        %v4399 = vsel %vm4232, %v4397, 0
        %4401 = vmatprep.subr.mxu0 0.0
        %4402 = vmatpush1.msra.mxu0 %v4378
        %4403 = vmatprep.subr.mxu0 0.0
        %4404 = vmatpush1.msra.mxu0 %v4379
        %4405 = vmatprep.subr.mxu0 0.0
        %4406 = vmatpush1.msra.mxu0 %v4380
        %4407 = vmatprep.subr.mxu0 0.0
        %4408 = vmatpush1.msra.mxu0 %v4381
        %4409 = vmatprep.subr.mxu0 0.0
        %4410 = vmatpush1.msra.mxu0 %v4382
        %4411 = vmatprep.subr.mxu0 0.0
        %4412 = vmatpush1.msra.mxu0 %v4383
        %4413 = vmatprep.subr.mxu0 0.0
        %4414 = vmatpush1.msra.mxu0 %v4384
        %4415 = vmatprep.subr.mxu0 0.0
        %4416 = vmatpush1.msra.mxu0 %v4385
        %4417 = vmatprep.subr.mxu0 0.0
        %4418 = vmatpush1.msra.mxu0 %v4386
        %4419 = vmatprep.subr.mxu0 0.0
        %4420 = vmatpush1.msra.mxu0 %v4387
        %4421 = vmatprep.subr.mxu0 0.0
        %4422 = vmatpush1.msra.mxu0 %v4388
        %4423 = vmatprep.subr.mxu0 0.0
        %4424 = vmatpush1.msra.mxu0 %v4389
        %4425 = vmatprep.subr.mxu0 0.0
        %4426 = vmatpush1.msra.mxu0 %v4390
        %4427 = vmatprep.subr.mxu0 0.0
        %4428 = vmatpush1.msra.mxu0 %v4391
        %4429 = vmatprep.subr.mxu0 0.0
        %4430 = vmatpush1.msra.mxu0 %v4392
        %4431 = vmatprep.subr.mxu0 0.0
        %4432 = vmatpush1.msra.mxu0 %v4393
        %4433 = vmatprep.subr.mxu0 0.0
        %4434 = vmatpush1.msra.mxu0 %v4394
        %4435 = vmatprep.subr.mxu0 0.0
        %4436 = vmatpush1.msra.mxu0 %v4395
        %4437 = vmatprep.subr.mxu0 0.0
        %4438 = vmatpush1.msra.mxu0 0.0
        %4439 = vmatprep.subr.mxu0 0.0
        %4440 = vmatpush1.msra.mxu0 0.0
        %4441 = vmatprep.subr.mxu0 0.0
        %4442 = vmatpush1.msra.mxu0 0.0
        %4443 = vmatprep.subr.mxu0 0.0
        %4444 = vmatpush1.msra.mxu0 0.0
        %4445 = vmatprep.subr.mxu0 0.0
        %4446 = vmatpush1.msra.mxu0 0.0
        %4447 = vmatprep.subr.mxu0 0.0
        %4448 = vmatpush1.msra.mxu0 0.0
        %4449 = vmatprep.subr.mxu0 0.0
        %4450 = vmatpush1.msra.mxu0 0.0
        %4451 = vmatprep.subr.mxu0 0.0
        %4452 = vmatpush1.msra.mxu0 0.0
        %4453 = vmatprep.subr.mxu0 0.0
        %4454 = vmatpush1.msra.mxu0 0.0
        %4455 = vmatprep.subr.mxu0 0.0
        %4456 = vmatpush1.msra.mxu0 0.0
        %4457 = vmatprep.subr.mxu0 0.0
        %4458 = vmatpush1.msra.mxu0 0.0
        %4459 = vmatprep.subr.mxu0 0.0
        %4460 = vmatpush1.msra.mxu0 0.0
        %4461 = vmatprep.subr.mxu0 0.0
        %4462 = vmatpush1.msra.mxu0 0.0
        %4463 = vmatprep.subr.mxu0 0.0
        %4464 = vmatpush1.msra.mxu0 0.0
        %4465 = vmatprep.mubr.f32.mxu0 %v4399
        %4466 = vmatmul.mubr.f32.gmra.mrb[0].mxu0 %v4396
        %v4467 = vpop.f32.mrb[0].mxu0
        %v4468 = vadd.f32 0.0, %v4467
        %v4469 = vpop.f32.mrb[0].mxu0
        %4470 = vdwg.mxu0
        %v4471 = vadd.f32 %v4374, %v4468
        %s4472 = scalar_lea.vmem %s8, 432
        %v4473 = vld [vmem:[%s4472] sm:$0xff]
        %v4474 = vld [vmem:[%s4472 + $0x8] sm:$0xff]
        %v4475 = vld [vmem:[%s4472 + $0x10] sm:$0xff]
        %v4476 = vld [vmem:[%s4472 + $0x18] sm:$0xff]
        %v4477 = vld [vmem:[%s4472 + $0x20] sm:$0xff]
        %v4478 = vld [vmem:[%s4472 + $0x28] sm:$0xff]
        %v4479 = vld [vmem:[%s4472 + $0x30] sm:$0xff]
        %v4480 = vld [vmem:[%s4472 + $0x38] sm:$0xff]
        %v4481 = vld [vmem:[%s4472 + $0x40] sm:$0xff]
        %v4482 = vld [vmem:[%s4472 + $0x48] sm:$0xff]
        %v4483 = vld [vmem:[%s4472 + $0x50] sm:$0xff]
        %v4484 = vld [vmem:[%s4472 + $0x58] sm:$0xff]
        %v4485 = vld [vmem:[%s4472 + $0x60] sm:$0xff]
        %v4486 = vld [vmem:[%s4472 + $0x68] sm:$0xff]
        %v4487 = vld [vmem:[%s4472 + $0x70] sm:$0xff]
        %v4488 = vld [vmem:[%s4472 + $0x78] sm:$0xff]
        %v4489 = vld [vmem:[%s4472 + $0x80] sm:$0xff]
        %v4490 = vld [vmem:[%s4472 + $0x88] sm:$0xff]
        %v4491 = vrot.slane %v4186, 3
        %v4492 = vrot.slane %v4188, 3
        %v4494 = vsel %vm4232, %v4492, 0
        %4496 = vmatprep.subr.mxu0 0.0
        %4497 = vmatpush1.msra.mxu0 %v4473
        %4498 = vmatprep.subr.mxu0 0.0
        %4499 = vmatpush1.msra.mxu0 %v4474
        %4500 = vmatprep.subr.mxu0 0.0
        %4501 = vmatpush1.msra.mxu0 %v4475
        %4502 = vmatprep.subr.mxu0 0.0
        %4503 = vmatpush1.msra.mxu0 %v4476
        %4504 = vmatprep.subr.mxu0 0.0
        %4505 = vmatpush1.msra.mxu0 %v4477
        %4506 = vmatprep.subr.mxu0 0.0
        %4507 = vmatpush1.msra.mxu0 %v4478
        %4508 = vmatprep.subr.mxu0 0.0
        %4509 = vmatpush1.msra.mxu0 %v4479
        %4510 = vmatprep.subr.mxu0 0.0
        %4511 = vmatpush1.msra.mxu0 %v4480
        %4512 = vmatprep.subr.mxu0 0.0
        %4513 = vmatpush1.msra.mxu0 %v4481
        %4514 = vmatprep.subr.mxu0 0.0
        %4515 = vmatpush1.msra.mxu0 %v4482
        %4516 = vmatprep.subr.mxu0 0.0
        %4517 = vmatpush1.msra.mxu0 %v4483
        %4518 = vmatprep.subr.mxu0 0.0
        %4519 = vmatpush1.msra.mxu0 %v4484
        %4520 = vmatprep.subr.mxu0 0.0
        %4521 = vmatpush1.msra.mxu0 %v4485
        %4522 = vmatprep.subr.mxu0 0.0
        %4523 = vmatpush1.msra.mxu0 %v4486
        %4524 = vmatprep.subr.mxu0 0.0
        %4525 = vmatpush1.msra.mxu0 %v4487
        %4526 = vmatprep.subr.mxu0 0.0
        %4527 = vmatpush1.msra.mxu0 %v4488
        %4528 = vmatprep.subr.mxu0 0.0
        %4529 = vmatpush1.msra.mxu0 %v4489
        %4530 = vmatprep.subr.mxu0 0.0
        %4531 = vmatpush1.msra.mxu0 %v4490
        %4532 = vmatprep.subr.mxu0 0.0
        %4533 = vmatpush1.msra.mxu0 0.0
        %4534 = vmatprep.subr.mxu0 0.0
        %4535 = vmatpush1.msra.mxu0 0.0
        %4536 = vmatprep.subr.mxu0 0.0
        %4537 = vmatpush1.msra.mxu0 0.0
        %4538 = vmatprep.subr.mxu0 0.0
        %4539 = vmatpush1.msra.mxu0 0.0
        %4540 = vmatprep.subr.mxu0 0.0
        %4541 = vmatpush1.msra.mxu0 0.0
        %4542 = vmatprep.subr.mxu0 0.0
        %4543 = vmatpush1.msra.mxu0 0.0
        %4544 = vmatprep.subr.mxu0 0.0
        %4545 = vmatpush1.msra.mxu0 0.0
        %4546 = vmatprep.subr.mxu0 0.0
        %4547 = vmatpush1.msra.mxu0 0.0
        %4548 = vmatprep.subr.mxu0 0.0
        %4549 = vmatpush1.msra.mxu0 0.0
        %4550 = vmatprep.subr.mxu0 0.0
        %4551 = vmatpush1.msra.mxu0 0.0
        %4552 = vmatprep.subr.mxu0 0.0
        %4553 = vmatpush1.msra.mxu0 0.0
        %4554 = vmatprep.subr.mxu0 0.0
        %4555 = vmatpush1.msra.mxu0 0.0
        %4556 = vmatprep.subr.mxu0 0.0
        %4557 = vmatpush1.msra.mxu0 0.0
        %4558 = vmatprep.subr.mxu0 0.0
        %4559 = vmatpush1.msra.mxu0 0.0
        %4560 = vmatprep.mubr.f32.mxu0 %v4494
        %4561 = vmatmul.mubr.f32.gmra.mrb[0].mxu0 %v4491
        %v4562 = vpop.f32.mrb[0].mxu0
        %v4563 = vadd.f32 0.0, %v4562
        %v4564 = vpop.f32.mrb[0].mxu0
        %4565 = vdwg.mxu0
        %v4566 = vadd.f32 %v4471, %v4563
        %s4567 = scalar_lea.vmem %s8, 576
        %v4568 = vld [vmem:[%s4567] sm:$0xff]
        %v4569 = vld [vmem:[%s4567 + $0x8] sm:$0xff]
        %v4570 = vld [vmem:[%s4567 + $0x10] sm:$0xff]
        %v4571 = vld [vmem:[%s4567 + $0x18] sm:$0xff]
        %v4572 = vld [vmem:[%s4567 + $0x20] sm:$0xff]
        %v4573 = vld [vmem:[%s4567 + $0x28] sm:$0xff]
        %v4574 = vld [vmem:[%s4567 + $0x30] sm:$0xff]
        %v4575 = vld [vmem:[%s4567 + $0x38] sm:$0xff]
        %v4576 = vld [vmem:[%s4567 + $0x40] sm:$0xff]
        %v4577 = vld [vmem:[%s4567 + $0x48] sm:$0xff]
        %v4578 = vld [vmem:[%s4567 + $0x50] sm:$0xff]
        %v4579 = vld [vmem:[%s4567 + $0x58] sm:$0xff]
        %v4580 = vld [vmem:[%s4567 + $0x60] sm:$0xff]
        %v4581 = vld [vmem:[%s4567 + $0x68] sm:$0xff]
        %v4582 = vld [vmem:[%s4567 + $0x70] sm:$0xff]
        %v4583 = vld [vmem:[%s4567 + $0x78] sm:$0xff]
        %v4584 = vld [vmem:[%s4567 + $0x80] sm:$0xff]
        %v4585 = vld [vmem:[%s4567 + $0x88] sm:$0xff]
        %v4586 = vrot.slane %v4186, 4
        %v4587 = vrot.slane %v4188, 4
        %v4589 = vsel %vm4232, %v4587, 0
        %4591 = vmatprep.subr.mxu0 0.0
        %4592 = vmatpush1.msra.mxu0 %v4568
        %4593 = vmatprep.subr.mxu0 0.0
        %4594 = vmatpush1.msra.mxu0 %v4569
        %4595 = vmatprep.subr.mxu0 0.0
        %4596 = vmatpush1.msra.mxu0 %v4570
        %4597 = vmatprep.subr.mxu0 0.0
        %4598 = vmatpush1.msra.mxu0 %v4571
        %4599 = vmatprep.subr.mxu0 0.0
        %4600 = vmatpush1.msra.mxu0 %v4572
        %4601 = vmatprep.subr.mxu0 0.0
        %4602 = vmatpush1.msra.mxu0 %v4573
        %4603 = vmatprep.subr.mxu0 0.0
        %4604 = vmatpush1.msra.mxu0 %v4574
        %4605 = vmatprep.subr.mxu0 0.0
        %4606 = vmatpush1.msra.mxu0 %v4575
        %4607 = vmatprep.subr.mxu0 0.0
        %4608 = vmatpush1.msra.mxu0 %v4576
        %4609 = vmatprep.subr.mxu0 0.0
        %4610 = vmatpush1.msra.mxu0 %v4577
        %4611 = vmatprep.subr.mxu0 0.0
        %4612 = vmatpush1.msra.mxu0 %v4578
        %4613 = vmatprep.subr.mxu0 0.0
        %4614 = vmatpush1.msra.mxu0 %v4579
        %4615 = vmatprep.subr.mxu0 0.0
        %4616 = vmatpush1.msra.mxu0 %v4580
        %4617 = vmatprep.subr.mxu0 0.0
        %4618 = vmatpush1.msra.mxu0 %v4581
        %4619 = vmatprep.subr.mxu0 0.0
        %4620 = vmatpush1.msra.mxu0 %v4582
        %4621 = vmatprep.subr.mxu0 0.0
        %4622 = vmatpush1.msra.mxu0 %v4583
        %4623 = vmatprep.subr.mxu0 0.0
        %4624 = vmatpush1.msra.mxu0 %v4584
        %4625 = vmatprep.subr.mxu0 0.0
        %4626 = vmatpush1.msra.mxu0 %v4585
        %4627 = vmatprep.subr.mxu0 0.0
        %4628 = vmatpush1.msra.mxu0 0.0
        %4629 = vmatprep.subr.mxu0 0.0
        %4630 = vmatpush1.msra.mxu0 0.0
        %4631 = vmatprep.subr.mxu0 0.0
        %4632 = vmatpush1.msra.mxu0 0.0
        %4633 = vmatprep.subr.mxu0 0.0
        %4634 = vmatpush1.msra.mxu0 0.0
        %4635 = vmatprep.subr.mxu0 0.0
        %4636 = vmatpush1.msra.mxu0 0.0
        %4637 = vmatprep.subr.mxu0 0.0
        %4638 = vmatpush1.msra.mxu0 0.0
        %4639 = vmatprep.subr.mxu0 0.0
        %4640 = vmatpush1.msra.mxu0 0.0
        %4641 = vmatprep.subr.mxu0 0.0
        %4642 = vmatpush1.msra.mxu0 0.0
        %4643 = vmatprep.subr.mxu0 0.0
        %4644 = vmatpush1.msra.mxu0 0.0
        %4645 = vmatprep.subr.mxu0 0.0
        %4646 = vmatpush1.msra.mxu0 0.0
        %4647 = vmatprep.subr.mxu0 0.0
        %4648 = vmatpush1.msra.mxu0 0.0
        %4649 = vmatprep.subr.mxu0 0.0
        %4650 = vmatpush1.msra.mxu0 0.0
        %4651 = vmatprep.subr.mxu0 0.0
        %4652 = vmatpush1.msra.mxu0 0.0
        %4653 = vmatprep.subr.mxu0 0.0
        %4654 = vmatpush1.msra.mxu0 0.0
        %4655 = vmatprep.mubr.f32.mxu0 %v4589
        %4656 = vmatmul.mubr.f32.gmra.mrb[0].mxu0 %v4586
        %v4657 = vpop.f32.mrb[0].mxu0
        %v4658 = vadd.f32 0.0, %v4657
        %v4659 = vpop.f32.mrb[0].mxu0
        %4660 = vdwg.mxu0
        %v4661 = vadd.f32 %v4566, %v4658
        %v4662 = vld [vmem:[%s9] sm:$0x1]
        %v4663 = vadd.f32 %v4661, %v4662
        %v4664 = vmax.f32 %v4663, 0.0
        %v4665 = vld [vmem:[%s10] sm:$0xff]
        %v4666 = vld [vmem:[%s10 + $0x8] sm:$0xff]
        %v4667 = vld [vmem:[%s10 + $0x10] sm:$0xff]
        %v4668 = vld [vmem:[%s10 + $0x18] sm:$0xff]
        %v4669 = vld [vmem:[%s10 + $0x20] sm:$0xff]
        %v4670 = vld [vmem:[%s10 + $0x28] sm:$0xff]
        %v4671 = vld [vmem:[%s10 + $0x30] sm:$0xff]
        %v4672 = vld [vmem:[%s10 + $0x38] sm:$0xff]
        %v4673 = vld [vmem:[%s10 + $0x40] sm:$0xff]
        %v4674 = vld [vmem:[%s10 + $0x48] sm:$0xff]
        %v4675 = vld [vmem:[%s10 + $0x50] sm:$0xff]
        %v4676 = vld [vmem:[%s10 + $0x58] sm:$0xff]
        %v4677 = vld [vmem:[%s10 + $0x60] sm:$0xff]
        %v4678 = vld [vmem:[%s10 + $0x68] sm:$0xff]
        %v4679 = vld [vmem:[%s10 + $0x70] sm:$0xff]
        %v4680 = vld [vmem:[%s11] sm:$0x1]
        %vm4681 = vcmask 982016
        %v4683 = vsel %vm4681, %v4664, 0
        %4685 = vmatprep.subr.mxu0 0.0
        %4686 = vmatpush1.msra.mxu0 %v4665
        %4687 = vmatprep.subr.mxu0 0.0
        %4688 = vmatpush1.msra.mxu0 %v4666
        %4689 = vmatprep.subr.mxu0 0.0
        %4690 = vmatpush1.msra.mxu0 %v4667
        %4691 = vmatprep.subr.mxu0 0.0
        %4692 = vmatpush1.msra.mxu0 %v4668
        %4693 = vmatprep.subr.mxu0 0.0
        %4694 = vmatpush1.msra.mxu0 %v4669
        %4695 = vmatprep.subr.mxu0 0.0
        %4696 = vmatpush1.msra.mxu0 %v4670
        %4697 = vmatprep.subr.mxu0 0.0
        %4698 = vmatpush1.msra.mxu0 %v4671
        %4699 = vmatprep.subr.mxu0 0.0
        %4700 = vmatpush1.msra.mxu0 %v4672
        %4701 = vmatprep.subr.mxu0 0.0
        %4702 = vmatpush1.msra.mxu0 %v4673
        %4703 = vmatprep.subr.mxu0 0.0
        %4704 = vmatpush1.msra.mxu0 %v4674
        %4705 = vmatprep.subr.mxu0 0.0
        %4706 = vmatpush1.msra.mxu0 %v4675
        %4707 = vmatprep.subr.mxu0 0.0
        %4708 = vmatpush1.msra.mxu0 %v4676
        %4709 = vmatprep.subr.mxu0 0.0
        %4710 = vmatpush1.msra.mxu0 %v4677
        %4711 = vmatprep.subr.mxu0 0.0
        %4712 = vmatpush1.msra.mxu0 %v4678
        %4713 = vmatprep.subr.mxu0 0.0
        %4714 = vmatpush1.msra.mxu0 %v4679
        %4715 = vmatprep.subr.mxu0 0.0
        %4716 = vmatpush1.msra.mxu0 0.0
        %4717 = vmatprep.subr.mxu0 0.0
        %4718 = vmatpush1.msra.mxu0 0.0
        %4719 = vmatprep.subr.mxu0 0.0
        %4720 = vmatpush1.msra.mxu0 0.0
        %4721 = vmatprep.subr.mxu0 0.0
        %4722 = vmatpush1.msra.mxu0 0.0
        %4723 = vmatprep.subr.mxu0 0.0
        %4724 = vmatpush1.msra.mxu0 0.0
        %4725 = vmatprep.subr.mxu0 0.0
        %4726 = vmatpush1.msra.mxu0 0.0
        %4727 = vmatprep.subr.mxu0 0.0
        %4728 = vmatpush1.msra.mxu0 0.0
        %4729 = vmatprep.subr.mxu0 0.0
        %4730 = vmatpush1.msra.mxu0 0.0
        %4731 = vmatprep.subr.mxu0 0.0
        %4732 = vmatpush1.msra.mxu0 0.0
        %4733 = vmatprep.subr.mxu0 0.0
        %4734 = vmatpush1.msra.mxu0 0.0
        %4735 = vmatprep.subr.mxu0 0.0
        %4736 = vmatpush1.msra.mxu0 0.0
        %4737 = vmatprep.subr.mxu0 0.0
        %4738 = vmatpush1.msra.mxu0 0.0
        %4739 = vmatprep.subr.mxu0 0.0
        %4740 = vmatpush1.msra.mxu0 0.0
        %4741 = vmatprep.subr.mxu0 0.0
        %4742 = vmatpush1.msra.mxu0 0.0
        %4743 = vmatprep.subr.mxu0 0.0
        %4744 = vmatpush1.msra.mxu0 0.0
        %4745 = vmatprep.subr.mxu0 0.0
        %4746 = vmatpush1.msra.mxu0 0.0
        %4747 = vmatprep.subr.mxu0 0.0
        %4748 = vmatpush1.msra.mxu0 0.0
        %4749 = vmatprep.mubr.f32.mxu0 0.0
        %4750 = vmatmul.mubr.f32.gmra.mrb[0].mxu0 %v4683
        %v4751 = vpop.f32.mrb[0].mxu0
        %v4752 = vadd.f32 %v4680, %v4751
        %v4753 = vpop.f32.mrb[0].mxu0
        %4754 = vdwg.mxu0
        %v4755 = vmax.f32 %v4752, 0.0
        %v4756 = vld [vmem:[%s12] sm:$0xff]
        %v4757 = vld [vmem:[%s12 + $0x8] sm:$0xff]
        %v4758 = vld [vmem:[%s12 + $0x10] sm:$0xff]
        %v4759 = vld [vmem:[%s12 + $0x18] sm:$0xff]
        %v4760 = vld [vmem:[%s12 + $0x20] sm:$0xff]
        %v4761 = vld [vmem:[%s12 + $0x28] sm:$0xff]
        %v4762 = vld [vmem:[%s12 + $0x30] sm:$0xff]
        %v4763 = vld [vmem:[%s12 + $0x38] sm:$0xff]
        %v4764 = vld [vmem:[%s12 + $0x40] sm:$0xff]
        %v4765 = vld [vmem:[%s12 + $0x48] sm:$0xff]
        %v4766 = vld [vmem:[%s12 + $0x50] sm:$0xf]
        %v4767 = vld [vmem:[%s13] sm:$0x1]
        %vm4768 = vcmask 687104
        %v4770 = vsel %vm4768, %v4755, 0
        %v4773 = vsel %vm2674, %v4766, 0
        %4775 = vmatprep.subr.mxu0 0.0
        %4776 = vmatpush1.msra.mxu0 %v4756
        %4777 = vmatprep.subr.mxu0 0.0
        %4778 = vmatpush1.msra.mxu0 %v4757
        %4779 = vmatprep.subr.mxu0 0.0
        %4780 = vmatpush1.msra.mxu0 %v4758
        %4781 = vmatprep.subr.mxu0 0.0
        %4782 = vmatpush1.msra.mxu0 %v4759
        %4783 = vmatprep.subr.mxu0 0.0
        %4784 = vmatpush1.msra.mxu0 %v4760
        %4785 = vmatprep.subr.mxu0 0.0
        %4786 = vmatpush1.msra.mxu0 %v4761
        %4787 = vmatprep.subr.mxu0 0.0
        %4788 = vmatpush1.msra.mxu0 %v4762
        %4789 = vmatprep.subr.mxu0 0.0
        %4790 = vmatpush1.msra.mxu0 %v4763
        %4791 = vmatprep.subr.mxu0 0.0
        %4792 = vmatpush1.msra.mxu0 %v4764
        %4793 = vmatprep.subr.mxu0 0.0
        %4794 = vmatpush1.msra.mxu0 %v4765
        %4795 = vmatprep.subr.mxu0 0.0
        %4796 = vmatpush1.msra.mxu0 %v4773
        %4797 = vmatprep.subr.mxu0 0.0
        %4798 = vmatpush1.msra.mxu0 0.0
        %4799 = vmatprep.subr.mxu0 0.0
        %4800 = vmatpush1.msra.mxu0 0.0
        %4801 = vmatprep.subr.mxu0 0.0
        %4802 = vmatpush1.msra.mxu0 0.0
        %4803 = vmatprep.subr.mxu0 0.0
        %4804 = vmatpush1.msra.mxu0 0.0
        %4805 = vmatprep.subr.mxu0 0.0
        %4806 = vmatpush1.msra.mxu0 0.0
        %4807 = vmatprep.subr.mxu0 0.0
        %4808 = vmatpush1.msra.mxu0 0.0
        %4809 = vmatprep.subr.mxu0 0.0
        %4810 = vmatpush1.msra.mxu0 0.0
        %4811 = vmatprep.subr.mxu0 0.0
        %4812 = vmatpush1.msra.mxu0 0.0
        %4813 = vmatprep.subr.mxu0 0.0
        %4814 = vmatpush1.msra.mxu0 0.0
        %4815 = vmatprep.subr.mxu0 0.0
        %4816 = vmatpush1.msra.mxu0 0.0
        %4817 = vmatprep.subr.mxu0 0.0
        %4818 = vmatpush1.msra.mxu0 0.0
        %4819 = vmatprep.subr.mxu0 0.0
        %4820 = vmatpush1.msra.mxu0 0.0
        %4821 = vmatprep.subr.mxu0 0.0
        %4822 = vmatpush1.msra.mxu0 0.0
        %4823 = vmatprep.subr.mxu0 0.0
        %4824 = vmatpush1.msra.mxu0 0.0
        %4825 = vmatprep.subr.mxu0 0.0
        %4826 = vmatpush1.msra.mxu0 0.0
        %4827 = vmatprep.subr.mxu0 0.0
        %4828 = vmatpush1.msra.mxu0 0.0
        %4829 = vmatprep.subr.mxu0 0.0
        %4830 = vmatpush1.msra.mxu0 0.0
        %4831 = vmatprep.subr.mxu0 0.0
        %4832 = vmatpush1.msra.mxu0 0.0
        %4833 = vmatprep.subr.mxu0 0.0
        %4834 = vmatpush1.msra.mxu0 0.0
        %4835 = vmatprep.subr.mxu0 0.0
        %4836 = vmatpush1.msra.mxu0 0.0
        %4837 = vmatprep.subr.mxu0 0.0
        %4838 = vmatpush1.msra.mxu0 0.0
        %4839 = vmatprep.mubr.f32.mxu0 0.0
        %4840 = vmatmul.mubr.f32.gmra.mrb[0].mxu0 %v4770
        %v4841 = vpop.f32.mrb[0].mxu0
        %v4842 = vadd.f32 %v4767, %v4841
        %v4843 = vpop.f32.mrb[0].mxu0
        %4844 = vdwg.mxu0
        %v4845 = vlaneseq
        %v4846 = vand.u32 %v4845, 127
        %vm4847 = vcmp.lt.s32.totalorder %v4846, 2
        %v4848 = vsel %vm4847, %v4842, -inf
        %v4849 = vsel %vm4112, %v4848, -inf
        %4850 = vmax.xlane.f32.xlu0 %v4849
        %v4851 = vpop.xlane.xlu0 %4850
        %v4852 = vsub.f32 %v4848, %v4851
        %v4853 = vmul.f32 %v4852, 1.442695
        %v4854 = vpow.pop %v4853
        %v4855 = vsel %vm4847, %v4854, 0.0
        %v4856 = vsel %vm4112, %v4855, 0.0
        %4857 = vadd.xlane.f32.xlu0 %v4856
        %v4858 = vpop.xlane.xlu0 %4857
        %v4859 = vrcp.pop %v4858
        %v4860 = vmul.f32 %v4855, %v4859
        %4861 = vst [vmem:[%s459] sm:$0x1] %v4860
        %s4862 = sand.u32 %s335, 1
        %s4863 = scalar_lea.sflag [#allocation5], %s4862
        %s4864 = sand.u32 %s335, 1
        %s4865 = scalar_lea.vmem [#allocation4], %s4864
        // Predicated region
        $region77: #{_net_forward_fn.1} parent=75 // pred_check
          %p4866 = pneg %p345
        $region78: #{_net_forward_fn.1} parent=75 // pred_check_branch
          %4868 = sbr.rel (%p4866) target = $region80
        $region79: #{_net_forward_fn.1} parent=75 // pred_region
          %s4870 = ssub.s32 16, 16
          %4871 = vsyncadd %s4863, %s4870
          %s4872 = smul.addr %s28, 16
          %s4873 = scalar_lea.hbm %s14, %s4872
          %s4875 = sshll.u32 %s4865, 4
          %s4876 = int_to_ptr.vmem [resolvable:$true] %s4875
          %4878 = dma.vmem_to_hbm [thread:$0]  %s4876, 16, %s4873, %s4863
        $region80: #{_net_forward_fn.1} parent=75 // pred_fallthru
          _
      $region76: #{_net_forward_fn.1} parent=5 // pred_fallthru
        _
      %p4879 = scmp.le.s32.totalorder 2, %s23
      // Predicated region
      $region81: #{_net_forward_fn.1} parent=5 // pred_check
        %p4880 = pneg %p4879
      $region82: #{_net_forward_fn.1} parent=5 // pred_check_branch
        %4882 = sbr.rel (%p4880) target = $region84
      $region83: #{_net_forward_fn.1} parent=5 // pred_region
        %s4883 = ssub.s32 %s23, 2
        // Predicated region
        $region85: #{_net_forward_fn.1} parent=83 // pred_check
          %p4884 = pneg %p351
        $region86: #{_net_forward_fn.1} parent=83 // pred_check_branch
          %4886 = sbr.rel (%p4884) target = $region88
        $region87: #{_net_forward_fn.1} parent=83 // pred_region
          %s4887 = sand.u32 %s336, 1
          %s4888 = scalar_lea.sflag [#allocation5], %s4887
          %s4889 = sand.u32 %s336, 1
          %s4890 = scalar_lea.vmem [#allocation4], %s4889
          %4891 = dma.done %s4888, 16
        $region88: #{_net_forward_fn.1} parent=83 // pred_fallthru
          _
      $region84: #{_net_forward_fn.1} parent=5 // pred_fallthru
        _
    $region6: #{_net_forward_fn.1} parent=1 // loop_footer
      %s27 = sadd.s32 1, %s23
    $region7: #{_net_forward_fn.1} parent=1 // loop_footer_branch
      %22 = sbr.rel target = $region3
    $region8: #{_net_forward_fn.1} parent=1 // loop_exit
      _
    %4892 = vsyncpa [#allocation5], 1
    %s4893 = scalar_lea.sflag [#allocation5], 1
    %4894 = vsyncpa %s4893, 1

</llo_original>
